<compile_context>
chip_gen: v5e
topology: v5e:2x2
jax: 0.10.0
libtpu: 0.0.40
codegen_flags: <defaults>
</compile_context>

<pallas_src>
import functools

import jax
import jax.numpy as jnp
import numpy as np
from jax.experimental import pallas as pl
from jax.experimental.pallas import tpu as pltpu

EPS = 1e-5          # BatchNorm1d eps
NEG_SLOPE = 0.1     # LeakyReLU negative slope


# ----------------------- packed parameter table layout ----------------------

def _param_layout(C):
    """Offsets of every parameter inside the flat SMEM scalar table."""
    layout = {}
    off = 0

    def add(name, size):
        nonlocal off
        layout[name] = off
        off += size

    for key in ('down1', 'down2', 'down3', 'conv2', 'conv3'):
        add(key + '.w', 3 * C * C)       # (K=3, Ci=C, Co=C) row-major
        add(key + '.gamma', C)
        add(key + '.beta', C)
    add('up1.w', 4 * C * C)              # (K=4, Ci=C,  Co=C)
    add('up1.b', C)
    add('up2.w', 4 * 2 * C * C)          # (K=4, Ci=2C, Co=C)
    add('up2.b', C)
    add('up3.w', 4 * 2 * C * C)
    add('up3.b', C)
    add('out.w', 3 * 2 * C * C)          # (K=3, Ci=2C, Co=C)
    add('out.b', C)
    return layout, off


def prep_params(params, C):
    """Pack all weights / BN params / biases into one flat f32 table (once)."""
    layout, total = _param_layout(C)
    flat = np.zeros((total,), np.float32)

    def put(name, arr):
        a = np.asarray(arr, np.float32).reshape(-1)
        flat[layout[name]:layout[name] + a.size] = a

    # Conv1d weights (Co, Ci, K) -> (K, Ci, Co)
    for key in ('down1', 'down2', 'down3', 'conv2', 'conv3'):
        put(key + '.w', np.transpose(np.asarray(params[key]['w']), (2, 1, 0)))
        put(key + '.gamma', params[key]['gamma'])
        put(key + '.beta', params[key]['beta'])
    # ConvTranspose1d weights (Ci, Co, K) -> (K, Ci, Co)
    for key in ('up1', 'up2', 'up3'):
        put(key + '.w', np.transpose(np.asarray(params[key]['w']), (2, 0, 1)))
        put(key + '.b', params[key]['b'])
    put('out.w', np.transpose(np.asarray(params['out']['w']), (2, 1, 0)))
    put('out.b', params['out']['b'])
    return jnp.asarray(flat)


# ------------------------------ fused kernel --------------------------------

def _unet1d_kernel(x_ref, p_ref, o_ref):
    N, C, L = x_ref.shape
    layout, _ = _param_layout(C)
    f32 = jnp.float32

    # ---- scalar parameter accessors (cheap SMEM loads, static indices) ----
    def weight_fn(name, Ci, Co):
        off = layout[name]

        def w(k, ci, co):
            return p_ref[off + (k * Ci + ci) * Co + co]
        return w

    def pvec(name, i):
        return p_ref[layout[name] + i]

    # ---- lane-axis shifts with zero padding (VPU/XLU, no MXU) ----
    def shift_m1(a):                      # out[:, l] = a[:, l-1], 0 at l=0
        z = jnp.zeros((a.shape[0], 1), f32)
        return jnp.concatenate([z, a[:, :-1]], axis=1)

    def shift_p1(a):                      # out[:, l] = a[:, l+1], 0 at l=L-1
        z = jnp.zeros((a.shape[0], 1), f32)
        return jnp.concatenate([a[:, 1:], z], axis=1)

    def lrelu(a):
        return jnp.where(a >= 0, a, NEG_SLOPE * a)

    # ---- 0/1 resampling matrices, built ONCE per level (hoisted) ----
    def down_mat(n):                      # (n, n//2): pick even positions
        r = jax.lax.broadcasted_iota(jnp.int32, (n, n // 2), 0)
        c = jax.lax.broadcasted_iota(jnp.int32, (n, n // 2), 1)
        return jnp.where(r == 2 * c, 1.0, 0.0).astype(f32)

    def interleave_mats(m):               # (m, 2m): scatter to even / odd lanes
        r = jax.lax.broadcasted_iota(jnp.int32, (m, 2 * m), 0)
        c = jax.lax.broadcasted_iota(jnp.int32, (m, 2 * m), 1)
        ev = jnp.where(c == 2 * r, 1.0, 0.0).astype(f32)
        od = jnp.where(c == 2 * r + 1, 1.0, 0.0).astype(f32)
        return ev, od

    # ---- Conv1d(K=3, stride=1, pad=1): lane shifts + scalar FMAs ----
    def conv3(xs, wname, Co):
        Ci = len(xs)
        w = weight_fn(wname, Ci, Co)
        # tap k=0,1,2 reads x[l-1], x[l], x[l+1]; shifts hoisted per channel.
        taps = [(shift_m1(a), a, shift_p1(a)) for a in xs]
        outs = []
        for co in range(Co):
            acc = None
            for ci in range(Ci):
                for k in range(3):
                    t = w(k, ci, co) * taps[ci][k]
                    acc = t if acc is None else acc + t
            outs.append(acc)
        return outs

    # ---- BatchNorm1d (training-mode batch stats over (N, L)) + LeakyReLU ----
    def bn_lrelu(ys, name):
        cnt = float(ys[0].shape[0] * ys[0].shape[1])
        outs = []
        for c, y in enumerate(ys):
            mean = jnp.sum(jnp.sum(y, axis=1, keepdims=True),
                           axis=0, keepdims=True) / cnt
            d = y - mean
            var = jnp.sum(jnp.sum(d * d, axis=1, keepdims=True),
                          axis=0, keepdims=True) / cnt
            scale = pvec(name + '.gamma', c) * jax.lax.rsqrt(var + EPS)
            outs.append(lrelu(d * scale + pvec(name + '.beta', c)))
        return outs

    # ---- DownSample: Conv1d(K=3, s=2, p=1, no bias) + BN + LeakyReLU ----
    # Stride-1 conv at all positions (cheap FMAs), then one even-lane subsample
    # matmul per output channel.
    def down_block(xs, name, dmat):
        full = conv3(xs, name + '.w', C)
        half = [jnp.dot(y, dmat, preferred_element_type=f32) for y in full]
        return bn_lrelu(half, name)

    # ---- Conv_Block: Conv1d(K=3, s=1, p=1, no bias) + BN + LReLU + Dropout(0) ----
    def conv_block(xs, name):
        return bn_lrelu(conv3(xs, name + '.w', C), name)

    # ---- UpSample: ConvTranspose1d(K=4, s=2, p=1, bias) + LeakyReLU ----
    # Polyphase:  out[2u]   = sum_ci w[1]*x[u]   + w[3]*x[u-1]
    #             out[2u+1] = sum_ci w[0]*x[u+1] + w[2]*x[u]
    # Both phases sum over ALL input channels (upsampled + skip) before the
    # single interleave (merged split-skip paths).
    def up_block(xs, name, imats):
        Ci = len(xs)
        w = weight_fn(name + '.w', Ci, C)
        ev_mat, od_mat = imats
        xm1 = [shift_m1(a) for a in xs]
        xp1 = [shift_p1(a) for a in xs]
        outs = []
        for co in range(C):
            ev = od = None
            for ci in range(Ci):
                e = w(1, ci, co) * xs[ci] + w(3, ci, co) * xm1[ci]
                o = w(0, ci, co) * xp1[ci] + w(2, ci, co) * xs[ci]
                ev = e if ev is None else ev + e
                od = o if od is None else od + o
            y = (jnp.dot(ev, ev_mat, preferred_element_type=f32)
                 + jnp.dot(od, od_mat, preferred_element_type=f32)
                 + pvec(name + '.b', co))
            outs.append(lrelu(y))
        return outs

    # ---- resampling constants (once per level) ----
    d_l0, d_l1, d_l2 = down_mat(L), down_mat(L // 2), down_mat(L // 4)
    i_l3, i_l2, i_l1 = (interleave_mats(L // 8), interleave_mats(L // 4),
                        interleave_mats(L // 2))

    # ---- forward pass (everything stays resident on-chip) ----
    xs = [x_ref[:, c, :] for c in range(C)]                  # per-channel (N, L)

    r1 = down_block(xs, 'down1', d_l0)                       # (N, L/2) x C
    r2 = conv_block(down_block(r1, 'down2', d_l1), 'conv2')  # (N, L/4) x C
    r3 = conv_block(down_block(r2, 'down3', d_l2), 'conv3')  # (N, L/8) x C

    y1 = up_block(r3, 'up1', i_l3)                           # (N, L/4) x C
    y2 = up_block(y1 + r2, 'up2', i_l2)                      # (N, L/2) x C  (skip = list concat)
    y3 = up_block(y2 + r1, 'up3', i_l1)                      # (N, L)   x C

    yo = conv3(y3 + xs, 'out.w', C)                          # final Conv1d(2C -> C) + bias
    for co in range(C):
        o_ref[:, co, :] = yo[co] + pvec('out.b', co)


# --------------------------------- forward ----------------------------------

@jax.jit
def unet1d_forward(x, flat_params):
    N, C, L = x.shape
    return pl.pallas_call(
        _unet1d_kernel,
        out_shape=jax.ShapeDtypeStruct((N, C, L), jnp.float32),
        in_specs=[pl.BlockSpec(memory_space=pltpu.MemorySpace.VMEM),
                  pl.BlockSpec(memory_space=pltpu.MemorySpace.SMEM)],
        out_specs=pl.BlockSpec(memory_space=pltpu.MemorySpace.VMEM),
        # Explicit VMEM budget (safe on v5e/v6e/v7x); resident set here is tiny.
        compiler_params=pltpu.CompilerParams(vmem_limit_bytes=32 * 1024 * 1024),
    )(x.astype(jnp.float32), flat_params)


# --------------------------- parameter init ---------------------------------

def init_params(key, C):
    keys = jax.random.split(key, 13)

    def conv_w(k, cout, cin, K):
        bound = 1.0 / np.sqrt(cin * K)
        return jax.random.uniform(k, (cout, cin, K), jnp.float32, -bound, bound)

    def convT_w(k, cin, cout, K):
        bound = 1.0 / np.sqrt(cin * K)
        return jax.random.uniform(k, (cin, cout, K), jnp.float32, -bound, bound)

    def bias(k, cout, fan_in):
        bound = 1.0 / np.sqrt(fan_in)
        return jax.random.uniform(k, (cout,), jnp.float32, -bound, bound)

    bn = lambda: {'gamma': jnp.ones((C,), jnp.float32),
                  'beta': jnp.zeros((C,), jnp.float32)}
    return {
        'down1': {'w': conv_w(keys[0], C, C, 3), **bn()},
        'down2': {'w': conv_w(keys[1], C, C, 3), **bn()},
        'down3': {'w': conv_w(keys[2], C, C, 3), **bn()},
        'conv2': {'w': conv_w(keys[3], C, C, 3), **bn()},
        'conv3': {'w': conv_w(keys[4], C, C, 3), **bn()},
        'up1': {'w': convT_w(keys[5], C, C, 4), 'b': bias(keys[6], C, C * 4)},
        'up2': {'w': convT_w(keys[7], 2 * C, C, 4), 'b': bias(keys[8], C, 2 * C * 4)},
        'up3': {'w': convT_w(keys[9], 2 * C, C, 4), 'b': bias(keys[10], C, 2 * C * 4)},
        'out': {'w': conv_w(keys[11], C, 2 * C, 3), 'b': bias(keys[12], C, 2 * C * 3)},
    }


# ------------------------- pure-JAX reference -------------------------------

def _ref_bn(y, gamma, beta):
    m = jnp.mean(y, axis=(0, 2), keepdims=True)
    v = jnp.mean((y - m) ** 2, axis=(0, 2), keepdims=True)
    return gamma[None, :, None] * (y - m) * jax.lax.rsqrt(v + EPS) + beta[None, :, None]


def _ref_lrelu(y):
    return jnp.where(y >= 0, y, NEG_SLOPE * y)


def _ref_conv1d(x, w, stride, padding):
    return jax.lax.conv_general_dilated(
        x, w, (stride,), [(padding, padding)],
        dimension_numbers=('NCH', 'OIH', 'NCH'),
        precision=jax.lax.Precision.HIGHEST)


def _ref_convT1d(x, w, stride, padding):
    K = w.shape[-1]
    w_flip = jnp.flip(w, axis=-1).transpose(1, 0, 2)
    return jax.lax.conv_general_dilated(
        x, w_flip, (1,), [(K - 1 - padding, K - 1 - padding)],
        lhs_dilation=(stride,), dimension_numbers=('NCH', 'OIH', 'NCH'),
        precision=jax.lax.Precision.HIGHEST)


def ref_forward(x, params):
    def down(x, p):
        return _ref_lrelu(_ref_bn(_ref_conv1d(x, p['w'], 2, 1), p['gamma'], p['beta']))

    def cblock(x, p):
        return _ref_lrelu(_ref_bn(_ref_conv1d(x, p['w'], 1, 1), p['gamma'], p['beta']))

    def up(x, feat, p):
        y = _ref_convT1d(x, p['w'], 2, 1) + p['b'][None, :, None]
        return jnp.concatenate([_ref_lrelu(y), feat], axis=1)

    R1 = down(x, params['down1'])
    R2 = cblock(down(R1, params['down2']), params['conv2'])
    R3 = cblock(down(R2, params['down3']), params['conv3'])
    O2 = up(R3, R2, params['up1'])
    O1 = up(O2, R1, params['up2'])
    O0 = up(O1, x, params['up3'])
    return _ref_conv1d(O0, params['out']['w'], 1, 1) + params['out']['b'][None, :, None]


# --------------------------------- main -------------------------------------

if __name__ == "__main__":
    key = jax.random.PRNGKey(0)
    k_x, k_p = jax.random.split(key)

    N, C, L = 2, 2, 64          # batch, in_channels (spec: in_channel = 2), length
    x = jax.random.normal(k_x, (N, C, L), jnp.float32)
    params = init_params(k_p, C)
    flat_params = prep_params(params, C)   # one-time packing, outside the forward

    y = unet1d_forward(x, flat_params)
    jax.block_until_ready(y)

    y_ref = ref_forward(x, params)
    np.testing.assert_allclose(np.asarray(y), np.asarray(y_ref),
                               rtol=2e-3, atol=2e-3)
    print("KERNEL_OK")
</pallas_src>

<mosaic_0001>
module attributes {stable_mosaic.version = 11 : i64} {
  func.func @_unet1d_kernel(%arg0: memref<2x2x64xf32, #tpu.memory_space<vmem>>, %arg1: memref<192xf32, #tpu.memory_space<smem>>, %arg2: memref<2x2x64xf32, #tpu.memory_space<vmem>>) attributes {dimension_semantics = [], scalar_prefetch = 0 : i64, scratch_operands = 0 : i64, tpu.core_type = #tpu.core_type<tc>} {
    %0 = tpu.iota {dimensions = array<i32: 0>} : vector<64x32xi32>
    %1 = tpu.iota {dimensions = array<i32: 1>} : vector<64x32xi32>
    %c2_i32 = arith.constant 2 : i32
    %2 = vector.broadcast %c2_i32 : i32 to vector<64x32xi32>
    %3 = arith.muli %2, %1 : vector<64x32xi32>
    %4 = arith.cmpi eq, %0, %3 : vector<64x32xi32>
    %cst = arith.constant 1.000000e+00 : f32
    %cst_0 = arith.constant 0.000000e+00 : f32
    %5 = vector.broadcast %cst : f32 to vector<64x32xf32>
    %6 = vector.broadcast %cst_0 : f32 to vector<64x32xf32>
    %7 = arith.select %4, %5, %6 : vector<64x32xi1>, vector<64x32xf32>
    %8 = tpu.iota {dimensions = array<i32: 0>} : vector<32x16xi32>
    %9 = tpu.iota {dimensions = array<i32: 1>} : vector<32x16xi32>
    %c2_i32_1 = arith.constant 2 : i32
    %10 = vector.broadcast %c2_i32_1 : i32 to vector<32x16xi32>
    %11 = arith.muli %10, %9 : vector<32x16xi32>
    %12 = arith.cmpi eq, %8, %11 : vector<32x16xi32>
    %cst_2 = arith.constant 1.000000e+00 : f32
    %cst_3 = arith.constant 0.000000e+00 : f32
    %13 = vector.broadcast %cst_2 : f32 to vector<32x16xf32>
    %14 = vector.broadcast %cst_3 : f32 to vector<32x16xf32>
    %15 = arith.select %12, %13, %14 : vector<32x16xi1>, vector<32x16xf32>
    %16 = tpu.iota {dimensions = array<i32: 0>} : vector<16x8xi32>
    %17 = tpu.iota {dimensions = array<i32: 1>} : vector<16x8xi32>
    %c2_i32_4 = arith.constant 2 : i32
    %18 = vector.broadcast %c2_i32_4 : i32 to vector<16x8xi32>
    %19 = arith.muli %18, %17 : vector<16x8xi32>
    %20 = arith.cmpi eq, %16, %19 : vector<16x8xi32>
    %cst_5 = arith.constant 1.000000e+00 : f32
    %cst_6 = arith.constant 0.000000e+00 : f32
    %21 = vector.broadcast %cst_5 : f32 to vector<16x8xf32>
    %22 = vector.broadcast %cst_6 : f32 to vector<16x8xf32>
    %23 = arith.select %20, %21, %22 : vector<16x8xi1>, vector<16x8xf32>
    %24 = tpu.iota {dimensions = array<i32: 0>} : vector<8x16xi32>
    %25 = tpu.iota {dimensions = array<i32: 1>} : vector<8x16xi32>
    %c2_i32_7 = arith.constant 2 : i32
    %26 = vector.broadcast %c2_i32_7 : i32 to vector<8x16xi32>
    %27 = arith.muli %26, %24 : vector<8x16xi32>
    %28 = arith.cmpi eq, %25, %27 : vector<8x16xi32>
    %cst_8 = arith.constant 1.000000e+00 : f32
    %cst_9 = arith.constant 0.000000e+00 : f32
    %29 = vector.broadcast %cst_8 : f32 to vector<8x16xf32>
    %30 = vector.broadcast %cst_9 : f32 to vector<8x16xf32>
    %31 = arith.select %28, %29, %30 : vector<8x16xi1>, vector<8x16xf32>
    %c2_i32_10 = arith.constant 2 : i32
    %32 = vector.broadcast %c2_i32_10 : i32 to vector<8x16xi32>
    %33 = arith.muli %32, %24 : vector<8x16xi32>
    %c1_i32 = arith.constant 1 : i32
    %34 = vector.broadcast %c1_i32 : i32 to vector<8x16xi32>
    %35 = arith.addi %33, %34 : vector<8x16xi32>
    %36 = arith.cmpi eq, %25, %35 : vector<8x16xi32>
    %cst_11 = arith.constant 1.000000e+00 : f32
    %cst_12 = arith.constant 0.000000e+00 : f32
    %37 = vector.broadcast %cst_11 : f32 to vector<8x16xf32>
    %38 = vector.broadcast %cst_12 : f32 to vector<8x16xf32>
    %39 = arith.select %36, %37, %38 : vector<8x16xi1>, vector<8x16xf32>
    %40 = tpu.iota {dimensions = array<i32: 0>} : vector<16x32xi32>
    %41 = tpu.iota {dimensions = array<i32: 1>} : vector<16x32xi32>
    %c2_i32_13 = arith.constant 2 : i32
    %42 = vector.broadcast %c2_i32_13 : i32 to vector<16x32xi32>
    %43 = arith.muli %42, %40 : vector<16x32xi32>
    %44 = arith.cmpi eq, %41, %43 : vector<16x32xi32>
    %cst_14 = arith.constant 1.000000e+00 : f32
    %cst_15 = arith.constant 0.000000e+00 : f32
    %45 = vector.broadcast %cst_14 : f32 to vector<16x32xf32>
    %46 = vector.broadcast %cst_15 : f32 to vector<16x32xf32>
    %47 = arith.select %44, %45, %46 : vector<16x32xi1>, vector<16x32xf32>
    %c2_i32_16 = arith.constant 2 : i32
    %48 = vector.broadcast %c2_i32_16 : i32 to vector<16x32xi32>
    %49 = arith.muli %48, %40 : vector<16x32xi32>
    %c1_i32_17 = arith.constant 1 : i32
    %50 = vector.broadcast %c1_i32_17 : i32 to vector<16x32xi32>
    %51 = arith.addi %49, %50 : vector<16x32xi32>
    %52 = arith.cmpi eq, %41, %51 : vector<16x32xi32>
    %cst_18 = arith.constant 1.000000e+00 : f32
    %cst_19 = arith.constant 0.000000e+00 : f32
    %53 = vector.broadcast %cst_18 : f32 to vector<16x32xf32>
    %54 = vector.broadcast %cst_19 : f32 to vector<16x32xf32>
    %55 = arith.select %52, %53, %54 : vector<16x32xi1>, vector<16x32xf32>
    %56 = tpu.iota {dimensions = array<i32: 0>} : vector<32x64xi32>
    %57 = tpu.iota {dimensions = array<i32: 1>} : vector<32x64xi32>
    %c2_i32_20 = arith.constant 2 : i32
    %58 = vector.broadcast %c2_i32_20 : i32 to vector<32x64xi32>
    %59 = arith.muli %58, %56 : vector<32x64xi32>
    %60 = arith.cmpi eq, %57, %59 : vector<32x64xi32>
    %cst_21 = arith.constant 1.000000e+00 : f32
    %cst_22 = arith.constant 0.000000e+00 : f32
    %61 = vector.broadcast %cst_21 : f32 to vector<32x64xf32>
    %62 = vector.broadcast %cst_22 : f32 to vector<32x64xf32>
    %63 = arith.select %60, %61, %62 : vector<32x64xi1>, vector<32x64xf32>
    %c2_i32_23 = arith.constant 2 : i32
    %64 = vector.broadcast %c2_i32_23 : i32 to vector<32x64xi32>
    %65 = arith.muli %64, %56 : vector<32x64xi32>
    %c1_i32_24 = arith.constant 1 : i32
    %66 = vector.broadcast %c1_i32_24 : i32 to vector<32x64xi32>
    %67 = arith.addi %65, %66 : vector<32x64xi32>
    %68 = arith.cmpi eq, %57, %67 : vector<32x64xi32>
    %cst_25 = arith.constant 1.000000e+00 : f32
    %cst_26 = arith.constant 0.000000e+00 : f32
    %69 = vector.broadcast %cst_25 : f32 to vector<32x64xf32>
    %70 = vector.broadcast %cst_26 : f32 to vector<32x64xf32>
    %71 = arith.select %68, %69, %70 : vector<32x64xi1>, vector<32x64xf32>
    %c0 = arith.constant 0 : index
    %c0_27 = arith.constant 0 : index
    %c0_28 = arith.constant 0 : index
    %72 = vector.load %arg0[%c0, %c0_27, %c0_28] : memref<2x2x64xf32, #tpu.memory_space<vmem>>, vector<2x1x64xf32>
    %73 = vector.shape_cast %72 : vector<2x1x64xf32> to vector<2x64xf32>
    %c0_29 = arith.constant 0 : index
    %c1 = arith.constant 1 : index
    %c0_30 = arith.constant 0 : index
    %74 = vector.load %arg0[%c0_29, %c1, %c0_30] : memref<2x2x64xf32, #tpu.memory_space<vmem>>, vector<2x1x64xf32>
    %75 = vector.shape_cast %74 : vector<2x1x64xf32> to vector<2x64xf32>
    %cst_31 = arith.constant 0.000000e+00 : f32
    %76 = vector.broadcast %cst_31 : f32 to vector<2x1xf32>
    %77 = vector.extract_strided_slice %73 {offsets = [0, 0], sizes = [2, 63], strides = [1, 1]} : vector<2x64xf32> to vector<2x63xf32>
    %78 = tpu.concatenate %76, %77 in 1 : vector<2x1xf32>, vector<2x63xf32> -> vector<2x64xf32>
    %cst_32 = arith.constant 0.000000e+00 : f32
    %79 = vector.broadcast %cst_32 : f32 to vector<2x1xf32>
    %80 = vector.extract_strided_slice %73 {offsets = [0, 1], sizes = [2, 63], strides = [1, 1]} : vector<2x64xf32> to vector<2x63xf32>
    %81 = tpu.concatenate %80, %79 in 1 : vector<2x63xf32>, vector<2x1xf32> -> vector<2x64xf32>
    %cst_33 = arith.constant 0.000000e+00 : f32
    %82 = vector.broadcast %cst_33 : f32 to vector<2x1xf32>
    %83 = vector.extract_strided_slice %75 {offsets = [0, 0], sizes = [2, 63], strides = [1, 1]} : vector<2x64xf32> to vector<2x63xf32>
    %84 = tpu.concatenate %82, %83 in 1 : vector<2x1xf32>, vector<2x63xf32> -> vector<2x64xf32>
    %cst_34 = arith.constant 0.000000e+00 : f32
    %85 = vector.broadcast %cst_34 : f32 to vector<2x1xf32>
    %86 = vector.extract_strided_slice %75 {offsets = [0, 1], sizes = [2, 63], strides = [1, 1]} : vector<2x64xf32> to vector<2x63xf32>
    %87 = tpu.concatenate %86, %85 in 1 : vector<2x63xf32>, vector<2x1xf32> -> vector<2x64xf32>
    %c0_35 = arith.constant 0 : index
    %88 = memref.load %arg1[%c0_35] : memref<192xf32, #tpu.memory_space<smem>>
    %89 = vector.broadcast %88 : f32 to vector<2x64xf32>
    %90 = arith.mulf %89, %78 : vector<2x64xf32>
    %c4 = arith.constant 4 : index
    %91 = memref.load %arg1[%c4] : memref<192xf32, #tpu.memory_space<smem>>
    %92 = vector.broadcast %91 : f32 to vector<2x64xf32>
    %93 = arith.mulf %92, %73 : vector<2x64xf32>
    %94 = arith.addf %90, %93 : vector<2x64xf32>
    %c8 = arith.constant 8 : index
    %95 = memref.load %arg1[%c8] : memref<192xf32, #tpu.memory_space<smem>>
    %96 = vector.broadcast %95 : f32 to vector<2x64xf32>
    %97 = arith.mulf %96, %81 : vector<2x64xf32>
    %98 = arith.addf %94, %97 : vector<2x64xf32>
    %c2 = arith.constant 2 : index
    %99 = memref.load %arg1[%c2] : memref<192xf32, #tpu.memory_space<smem>>
    %100 = vector.broadcast %99 : f32 to vector<2x64xf32>
    %101 = arith.mulf %100, %84 : vector<2x64xf32>
    %102 = arith.addf %98, %101 : vector<2x64xf32>
    %c6 = arith.constant 6 : index
    %103 = memref.load %arg1[%c6] : memref<192xf32, #tpu.memory_space<smem>>
    %104 = vector.broadcast %103 : f32 to vector<2x64xf32>
    %105 = arith.mulf %104, %75 : vector<2x64xf32>
    %106 = arith.addf %102, %105 : vector<2x64xf32>
    %c10 = arith.constant 10 : index
    %107 = memref.load %arg1[%c10] : memref<192xf32, #tpu.memory_space<smem>>
    %108 = vector.broadcast %107 : f32 to vector<2x64xf32>
    %109 = arith.mulf %108, %87 : vector<2x64xf32>
    %110 = arith.addf %106, %109 : vector<2x64xf32>
    %c1_36 = arith.constant 1 : index
    %111 = memref.load %arg1[%c1_36] : memref<192xf32, #tpu.memory_space<smem>>
    %112 = vector.broadcast %111 : f32 to vector<2x64xf32>
    %113 = arith.mulf %112, %78 : vector<2x64xf32>
    %c5 = arith.constant 5 : index
    %114 = memref.load %arg1[%c5] : memref<192xf32, #tpu.memory_space<smem>>
    %115 = vector.broadcast %114 : f32 to vector<2x64xf32>
    %116 = arith.mulf %115, %73 : vector<2x64xf32>
    %117 = arith.addf %113, %116 : vector<2x64xf32>
    %c9 = arith.constant 9 : index
    %118 = memref.load %arg1[%c9] : memref<192xf32, #tpu.memory_space<smem>>
    %119 = vector.broadcast %118 : f32 to vector<2x64xf32>
    %120 = arith.mulf %119, %81 : vector<2x64xf32>
    %121 = arith.addf %117, %120 : vector<2x64xf32>
    %c3 = arith.constant 3 : index
    %122 = memref.load %arg1[%c3] : memref<192xf32, #tpu.memory_space<smem>>
    %123 = vector.broadcast %122 : f32 to vector<2x64xf32>
    %124 = arith.mulf %123, %84 : vector<2x64xf32>
    %125 = arith.addf %121, %124 : vector<2x64xf32>
    %c7 = arith.constant 7 : index
    %126 = memref.load %arg1[%c7] : memref<192xf32, #tpu.memory_space<smem>>
    %127 = vector.broadcast %126 : f32 to vector<2x64xf32>
    %128 = arith.mulf %127, %75 : vector<2x64xf32>
    %129 = arith.addf %125, %128 : vector<2x64xf32>
    %c11 = arith.constant 11 : index
    %130 = memref.load %arg1[%c11] : memref<192xf32, #tpu.memory_space<smem>>
    %131 = vector.broadcast %130 : f32 to vector<2x64xf32>
    %132 = arith.mulf %131, %87 : vector<2x64xf32>
    %133 = arith.addf %129, %132 : vector<2x64xf32>
    %cst_37 = arith.constant dense<0.000000e+00> : vector<2x32xf32>
    %134 = tpu.matmul %110, %7, %cst_37 {dimension_numbers = #tpu.dot_dimension_numbers<[1], [0], [0], [1], [0, 0, 1, 1], [], []>} : vector<2x64xf32>, vector<64x32xf32>, vector<2x32xf32> -> vector<2x32xf32>
    %cst_38 = arith.constant dense<0.000000e+00> : vector<2x32xf32>
    %135 = tpu.matmul %133, %7, %cst_38 {dimension_numbers = #tpu.dot_dimension_numbers<[1], [0], [0], [1], [0, 0, 1, 1], [], []>} : vector<2x64xf32>, vector<64x32xf32>, vector<2x32xf32> -> vector<2x32xf32>
    %cst_39 = arith.constant dense<0.000000e+00> : vector<2xf32>
    %136 = vector.multi_reduction <add>, %134, %cst_39 [1] : vector<2x32xf32> to vector<2xf32>
    %137 = vector.shape_cast %136 : vector<2xf32> to vector<2x1xf32>
    %cst_40 = arith.constant dense<0.000000e+00> : vector<1xf32>
    %138 = vector.multi_reduction <add>, %137, %cst_40 [0] : vector<2x1xf32> to vector<1xf32>
    %139 = vector.shape_cast %138 : vector<1xf32> to vector<1x1xf32>
    %cst_41 = arith.constant 6.400000e+01 : f32
    %140 = vector.broadcast %cst_41 : f32 to vector<1x1xf32>
    %141 = arith.divf %139, %140 : vector<1x1xf32>
    %142 = vector.broadcast %141 : vector<1x1xf32> to vector<2x32xf32>
    %143 = arith.subf %134, %142 : vector<2x32xf32>
    %144 = arith.mulf %143, %143 : vector<2x32xf32>
    %cst_42 = arith.constant dense<0.000000e+00> : vector<2xf32>
    %145 = vector.multi_reduction <add>, %144, %cst_42 [1] : vector<2x32xf32> to vector<2xf32>
    %146 = vector.shape_cast %145 : vector<2xf32> to vector<2x1xf32>
    %cst_43 = arith.constant dense<0.000000e+00> : vector<1xf32>
    %147 = vector.multi_reduction <add>, %146, %cst_43 [0] : vector<2x1xf32> to vector<1xf32>
    %148 = vector.shape_cast %147 : vector<1xf32> to vector<1x1xf32>
    %cst_44 = arith.constant 6.400000e+01 : f32
    %149 = vector.broadcast %cst_44 : f32 to vector<1x1xf32>
    %150 = arith.divf %148, %149 : vector<1x1xf32>
    %c12 = arith.constant 12 : index
    %151 = memref.load %arg1[%c12] : memref<192xf32, #tpu.memory_space<smem>>
    %cst_45 = arith.constant 9.99999974E-6 : f32
    %152 = vector.broadcast %cst_45 : f32 to vector<1x1xf32>
    %153 = arith.addf %150, %152 : vector<1x1xf32>
    %154 = math.rsqrt %153 : vector<1x1xf32>
    %155 = vector.broadcast %151 : f32 to vector<1x1xf32>
    %156 = arith.mulf %155, %154 : vector<1x1xf32>
    %157 = vector.broadcast %156 : vector<1x1xf32> to vector<2x32xf32>
    %158 = arith.mulf %143, %157 : vector<2x32xf32>
    %c14 = arith.constant 14 : index
    %159 = memref.load %arg1[%c14] : memref<192xf32, #tpu.memory_space<smem>>
    %160 = vector.broadcast %159 : f32 to vector<2x32xf32>
    %161 = arith.addf %158, %160 : vector<2x32xf32>
    %cst_46 = arith.constant 0.000000e+00 : f32
    %162 = vector.broadcast %cst_46 : f32 to vector<2x32xf32>
    %163 = arith.cmpf oge, %161, %162 : vector<2x32xf32>
    %cst_47 = arith.constant 1.000000e-01 : f32
    %164 = vector.broadcast %cst_47 : f32 to vector<2x32xf32>
    %165 = arith.mulf %164, %161 : vector<2x32xf32>
    %166 = arith.select %163, %161, %165 : vector<2x32xi1>, vector<2x32xf32>
    %cst_48 = arith.constant dense<0.000000e+00> : vector<2xf32>
    %167 = vector.multi_reduction <add>, %135, %cst_48 [1] : vector<2x32xf32> to vector<2xf32>
    %168 = vector.shape_cast %167 : vector<2xf32> to vector<2x1xf32>
    %cst_49 = arith.constant dense<0.000000e+00> : vector<1xf32>
    %169 = vector.multi_reduction <add>, %168, %cst_49 [0] : vector<2x1xf32> to vector<1xf32>
    %170 = vector.shape_cast %169 : vector<1xf32> to vector<1x1xf32>
    %cst_50 = arith.constant 6.400000e+01 : f32
    %171 = vector.broadcast %cst_50 : f32 to vector<1x1xf32>
    %172 = arith.divf %170, %171 : vector<1x1xf32>
    %173 = vector.broadcast %172 : vector<1x1xf32> to vector<2x32xf32>
    %174 = arith.subf %135, %173 : vector<2x32xf32>
    %175 = arith.mulf %174, %174 : vector<2x32xf32>
    %cst_51 = arith.constant dense<0.000000e+00> : vector<2xf32>
    %176 = vector.multi_reduction <add>, %175, %cst_51 [1] : vector<2x32xf32> to vector<2xf32>
    %177 = vector.shape_cast %176 : vector<2xf32> to vector<2x1xf32>
    %cst_52 = arith.constant dense<0.000000e+00> : vector<1xf32>
    %178 = vector.multi_reduction <add>, %177, %cst_52 [0] : vector<2x1xf32> to vector<1xf32>
    %179 = vector.shape_cast %178 : vector<1xf32> to vector<1x1xf32>
    %cst_53 = arith.constant 6.400000e+01 : f32
    %180 = vector.broadcast %cst_53 : f32 to vector<1x1xf32>
    %181 = arith.divf %179, %180 : vector<1x1xf32>
    %c13 = arith.constant 13 : index
    %182 = memref.load %arg1[%c13] : memref<192xf32, #tpu.memory_space<smem>>
    %cst_54 = arith.constant 9.99999974E-6 : f32
    %183 = vector.broadcast %cst_54 : f32 to vector<1x1xf32>
    %184 = arith.addf %181, %183 : vector<1x1xf32>
    %185 = math.rsqrt %184 : vector<1x1xf32>
    %186 = vector.broadcast %182 : f32 to vector<1x1xf32>
    %187 = arith.mulf %186, %185 : vector<1x1xf32>
    %188 = vector.broadcast %187 : vector<1x1xf32> to vector<2x32xf32>
    %189 = arith.mulf %174, %188 : vector<2x32xf32>
    %c15 = arith.constant 15 : index
    %190 = memref.load %arg1[%c15] : memref<192xf32, #tpu.memory_space<smem>>
    %191 = vector.broadcast %190 : f32 to vector<2x32xf32>
    %192 = arith.addf %189, %191 : vector<2x32xf32>
    %cst_55 = arith.constant 0.000000e+00 : f32
    %193 = vector.broadcast %cst_55 : f32 to vector<2x32xf32>
    %194 = arith.cmpf oge, %192, %193 : vector<2x32xf32>
    %cst_56 = arith.constant 1.000000e-01 : f32
    %195 = vector.broadcast %cst_56 : f32 to vector<2x32xf32>
    %196 = arith.mulf %195, %192 : vector<2x32xf32>
    %197 = arith.select %194, %192, %196 : vector<2x32xi1>, vector<2x32xf32>
    %cst_57 = arith.constant 0.000000e+00 : f32
    %198 = vector.broadcast %cst_57 : f32 to vector<2x1xf32>
    %199 = vector.extract_strided_slice %166 {offsets = [0, 0], sizes = [2, 31], strides = [1, 1]} : vector<2x32xf32> to vector<2x31xf32>
    %200 = tpu.concatenate %198, %199 in 1 : vector<2x1xf32>, vector<2x31xf32> -> vector<2x32xf32>
    %cst_58 = arith.constant 0.000000e+00 : f32
    %201 = vector.broadcast %cst_58 : f32 to vector<2x1xf32>
    %202 = vector.extract_strided_slice %166 {offsets = [0, 1], sizes = [2, 31], strides = [1, 1]} : vector<2x32xf32> to vector<2x31xf32>
    %203 = tpu.concatenate %202, %201 in 1 : vector<2x31xf32>, vector<2x1xf32> -> vector<2x32xf32>
    %cst_59 = arith.constant 0.000000e+00 : f32
    %204 = vector.broadcast %cst_59 : f32 to vector<2x1xf32>
    %205 = vector.extract_strided_slice %197 {offsets = [0, 0], sizes = [2, 31], strides = [1, 1]} : vector<2x32xf32> to vector<2x31xf32>
    %206 = tpu.concatenate %204, %205 in 1 : vector<2x1xf32>, vector<2x31xf32> -> vector<2x32xf32>
    %cst_60 = arith.constant 0.000000e+00 : f32
    %207 = vector.broadcast %cst_60 : f32 to vector<2x1xf32>
    %208 = vector.extract_strided_slice %197 {offsets = [0, 1], sizes = [2, 31], strides = [1, 1]} : vector<2x32xf32> to vector<2x31xf32>
    %209 = tpu.concatenate %208, %207 in 1 : vector<2x31xf32>, vector<2x1xf32> -> vector<2x32xf32>
    %c16 = arith.constant 16 : index
    %210 = memref.load %arg1[%c16] : memref<192xf32, #tpu.memory_space<smem>>
    %211 = vector.broadcast %210 : f32 to vector<2x32xf32>
    %212 = arith.mulf %211, %200 : vector<2x32xf32>
    %c20 = arith.constant 20 : index
    %213 = memref.load %arg1[%c20] : memref<192xf32, #tpu.memory_space<smem>>
    %214 = vector.broadcast %213 : f32 to vector<2x32xf32>
    %215 = arith.mulf %214, %166 : vector<2x32xf32>
    %216 = arith.addf %212, %215 : vector<2x32xf32>
    %c24 = arith.constant 24 : index
    %217 = memref.load %arg1[%c24] : memref<192xf32, #tpu.memory_space<smem>>
    %218 = vector.broadcast %217 : f32 to vector<2x32xf32>
    %219 = arith.mulf %218, %203 : vector<2x32xf32>
    %220 = arith.addf %216, %219 : vector<2x32xf32>
    %c18 = arith.constant 18 : index
    %221 = memref.load %arg1[%c18] : memref<192xf32, #tpu.memory_space<smem>>
    %222 = vector.broadcast %221 : f32 to vector<2x32xf32>
    %223 = arith.mulf %222, %206 : vector<2x32xf32>
    %224 = arith.addf %220, %223 : vector<2x32xf32>
    %c22 = arith.constant 22 : index
    %225 = memref.load %arg1[%c22] : memref<192xf32, #tpu.memory_space<smem>>
    %226 = vector.broadcast %225 : f32 to vector<2x32xf32>
    %227 = arith.mulf %226, %197 : vector<2x32xf32>
    %228 = arith.addf %224, %227 : vector<2x32xf32>
    %c26 = arith.constant 26 : index
    %229 = memref.load %arg1[%c26] : memref<192xf32, #tpu.memory_space<smem>>
    %230 = vector.broadcast %229 : f32 to vector<2x32xf32>
    %231 = arith.mulf %230, %209 : vector<2x32xf32>
    %232 = arith.addf %228, %231 : vector<2x32xf32>
    %c17 = arith.constant 17 : index
    %233 = memref.load %arg1[%c17] : memref<192xf32, #tpu.memory_space<smem>>
    %234 = vector.broadcast %233 : f32 to vector<2x32xf32>
    %235 = arith.mulf %234, %200 : vector<2x32xf32>
    %c21 = arith.constant 21 : index
    %236 = memref.load %arg1[%c21] : memref<192xf32, #tpu.memory_space<smem>>
    %237 = vector.broadcast %236 : f32 to vector<2x32xf32>
    %238 = arith.mulf %237, %166 : vector<2x32xf32>
    %239 = arith.addf %235, %238 : vector<2x32xf32>
    %c25 = arith.constant 25 : index
    %240 = memref.load %arg1[%c25] : memref<192xf32, #tpu.memory_space<smem>>
    %241 = vector.broadcast %240 : f32 to vector<2x32xf32>
    %242 = arith.mulf %241, %203 : vector<2x32xf32>
    %243 = arith.addf %239, %242 : vector<2x32xf32>
    %c19 = arith.constant 19 : index
    %244 = memref.load %arg1[%c19] : memref<192xf32, #tpu.memory_space<smem>>
    %245 = vector.broadcast %244 : f32 to vector<2x32xf32>
    %246 = arith.mulf %245, %206 : vector<2x32xf32>
    %247 = arith.addf %243, %246 : vector<2x32xf32>
    %c23 = arith.constant 23 : index
    %248 = memref.load %arg1[%c23] : memref<192xf32, #tpu.memory_space<smem>>
    %249 = vector.broadcast %248 : f32 to vector<2x32xf32>
    %250 = arith.mulf %249, %197 : vector<2x32xf32>
    %251 = arith.addf %247, %250 : vector<2x32xf32>
    %c27 = arith.constant 27 : index
    %252 = memref.load %arg1[%c27] : memref<192xf32, #tpu.memory_space<smem>>
    %253 = vector.broadcast %252 : f32 to vector<2x32xf32>
    %254 = arith.mulf %253, %209 : vector<2x32xf32>
    %255 = arith.addf %251, %254 : vector<2x32xf32>
    %cst_61 = arith.constant dense<0.000000e+00> : vector<2x16xf32>
    %256 = tpu.matmul %232, %15, %cst_61 {dimension_numbers = #tpu.dot_dimension_numbers<[1], [0], [0], [1], [0, 0, 1, 1], [], []>} : vector<2x32xf32>, vector<32x16xf32>, vector<2x16xf32> -> vector<2x16xf32>
    %cst_62 = arith.constant dense<0.000000e+00> : vector<2x16xf32>
    %257 = tpu.matmul %255, %15, %cst_62 {dimension_numbers = #tpu.dot_dimension_numbers<[1], [0], [0], [1], [0, 0, 1, 1], [], []>} : vector<2x32xf32>, vector<32x16xf32>, vector<2x16xf32> -> vector<2x16xf32>
    %cst_63 = arith.constant dense<0.000000e+00> : vector<2xf32>
    %258 = vector.multi_reduction <add>, %256, %cst_63 [1] : vector<2x16xf32> to vector<2xf32>
    %259 = vector.shape_cast %258 : vector<2xf32> to vector<2x1xf32>
    %cst_64 = arith.constant dense<0.000000e+00> : vector<1xf32>
    %260 = vector.multi_reduction <add>, %259, %cst_64 [0] : vector<2x1xf32> to vector<1xf32>
    %261 = vector.shape_cast %260 : vector<1xf32> to vector<1x1xf32>
    %cst_65 = arith.constant 3.200000e+01 : f32
    %262 = vector.broadcast %cst_65 : f32 to vector<1x1xf32>
    %263 = arith.divf %261, %262 : vector<1x1xf32>
    %264 = vector.broadcast %263 : vector<1x1xf32> to vector<2x16xf32>
    %265 = arith.subf %256, %264 : vector<2x16xf32>
    %266 = arith.mulf %265, %265 : vector<2x16xf32>
    %cst_66 = arith.constant dense<0.000000e+00> : vector<2xf32>
    %267 = vector.multi_reduction <add>, %266, %cst_66 [1] : vector<2x16xf32> to vector<2xf32>
    %268 = vector.shape_cast %267 : vector<2xf32> to vector<2x1xf32>
    %cst_67 = arith.constant dense<0.000000e+00> : vector<1xf32>
    %269 = vector.multi_reduction <add>, %268, %cst_67 [0] : vector<2x1xf32> to vector<1xf32>
    %270 = vector.shape_cast %269 : vector<1xf32> to vector<1x1xf32>
    %cst_68 = arith.constant 3.200000e+01 : f32
    %271 = vector.broadcast %cst_68 : f32 to vector<1x1xf32>
    %272 = arith.divf %270, %271 : vector<1x1xf32>
    %c28 = arith.constant 28 : index
    %273 = memref.load %arg1[%c28] : memref<192xf32, #tpu.memory_space<smem>>
    %cst_69 = arith.constant 9.99999974E-6 : f32
    %274 = vector.broadcast %cst_69 : f32 to vector<1x1xf32>
    %275 = arith.addf %272, %274 : vector<1x1xf32>
    %276 = math.rsqrt %275 : vector<1x1xf32>
    %277 = vector.broadcast %273 : f32 to vector<1x1xf32>
    %278 = arith.mulf %277, %276 : vector<1x1xf32>
    %279 = vector.broadcast %278 : vector<1x1xf32> to vector<2x16xf32>
    %280 = arith.mulf %265, %279 : vector<2x16xf32>
    %c30 = arith.constant 30 : index
    %281 = memref.load %arg1[%c30] : memref<192xf32, #tpu.memory_space<smem>>
    %282 = vector.broadcast %281 : f32 to vector<2x16xf32>
    %283 = arith.addf %280, %282 : vector<2x16xf32>
    %cst_70 = arith.constant 0.000000e+00 : f32
    %284 = vector.broadcast %cst_70 : f32 to vector<2x16xf32>
    %285 = arith.cmpf oge, %283, %284 : vector<2x16xf32>
    %cst_71 = arith.constant 1.000000e-01 : f32
    %286 = vector.broadcast %cst_71 : f32 to vector<2x16xf32>
    %287 = arith.mulf %286, %283 : vector<2x16xf32>
    %288 = arith.select %285, %283, %287 : vector<2x16xi1>, vector<2x16xf32>
    %cst_72 = arith.constant dense<0.000000e+00> : vector<2xf32>
    %289 = vector.multi_reduction <add>, %257, %cst_72 [1] : vector<2x16xf32> to vector<2xf32>
    %290 = vector.shape_cast %289 : vector<2xf32> to vector<2x1xf32>
    %cst_73 = arith.constant dense<0.000000e+00> : vector<1xf32>
    %291 = vector.multi_reduction <add>, %290, %cst_73 [0] : vector<2x1xf32> to vector<1xf32>
    %292 = vector.shape_cast %291 : vector<1xf32> to vector<1x1xf32>
    %cst_74 = arith.constant 3.200000e+01 : f32
    %293 = vector.broadcast %cst_74 : f32 to vector<1x1xf32>
    %294 = arith.divf %292, %293 : vector<1x1xf32>
    %295 = vector.broadcast %294 : vector<1x1xf32> to vector<2x16xf32>
    %296 = arith.subf %257, %295 : vector<2x16xf32>
    %297 = arith.mulf %296, %296 : vector<2x16xf32>
    %cst_75 = arith.constant dense<0.000000e+00> : vector<2xf32>
    %298 = vector.multi_reduction <add>, %297, %cst_75 [1] : vector<2x16xf32> to vector<2xf32>
    %299 = vector.shape_cast %298 : vector<2xf32> to vector<2x1xf32>
    %cst_76 = arith.constant dense<0.000000e+00> : vector<1xf32>
    %300 = vector.multi_reduction <add>, %299, %cst_76 [0] : vector<2x1xf32> to vector<1xf32>
    %301 = vector.shape_cast %300 : vector<1xf32> to vector<1x1xf32>
    %cst_77 = arith.constant 3.200000e+01 : f32
    %302 = vector.broadcast %cst_77 : f32 to vector<1x1xf32>
    %303 = arith.divf %301, %302 : vector<1x1xf32>
    %c29 = arith.constant 29 : index
    %304 = memref.load %arg1[%c29] : memref<192xf32, #tpu.memory_space<smem>>
    %cst_78 = arith.constant 9.99999974E-6 : f32
    %305 = vector.broadcast %cst_78 : f32 to vector<1x1xf32>
    %306 = arith.addf %303, %305 : vector<1x1xf32>
    %307 = math.rsqrt %306 : vector<1x1xf32>
    %308 = vector.broadcast %304 : f32 to vector<1x1xf32>
    %309 = arith.mulf %308, %307 : vector<1x1xf32>
    %310 = vector.broadcast %309 : vector<1x1xf32> to vector<2x16xf32>
    %311 = arith.mulf %296, %310 : vector<2x16xf32>
    %c31 = arith.constant 31 : index
    %312 = memref.load %arg1[%c31] : memref<192xf32, #tpu.memory_space<smem>>
    %313 = vector.broadcast %312 : f32 to vector<2x16xf32>
    %314 = arith.addf %311, %313 : vector<2x16xf32>
    %cst_79 = arith.constant 0.000000e+00 : f32
    %315 = vector.broadcast %cst_79 : f32 to vector<2x16xf32>
    %316 = arith.cmpf oge, %314, %315 : vector<2x16xf32>
    %cst_80 = arith.constant 1.000000e-01 : f32
    %317 = vector.broadcast %cst_80 : f32 to vector<2x16xf32>
    %318 = arith.mulf %317, %314 : vector<2x16xf32>
    %319 = arith.select %316, %314, %318 : vector<2x16xi1>, vector<2x16xf32>
    %cst_81 = arith.constant 0.000000e+00 : f32
    %320 = vector.broadcast %cst_81 : f32 to vector<2x1xf32>
    %321 = vector.extract_strided_slice %288 {offsets = [0, 0], sizes = [2, 15], strides = [1, 1]} : vector<2x16xf32> to vector<2x15xf32>
    %322 = tpu.concatenate %320, %321 in 1 : vector<2x1xf32>, vector<2x15xf32> -> vector<2x16xf32>
    %cst_82 = arith.constant 0.000000e+00 : f32
    %323 = vector.broadcast %cst_82 : f32 to vector<2x1xf32>
    %324 = vector.extract_strided_slice %288 {offsets = [0, 1], sizes = [2, 15], strides = [1, 1]} : vector<2x16xf32> to vector<2x15xf32>
    %325 = tpu.concatenate %324, %323 in 1 : vector<2x15xf32>, vector<2x1xf32> -> vector<2x16xf32>
    %cst_83 = arith.constant 0.000000e+00 : f32
    %326 = vector.broadcast %cst_83 : f32 to vector<2x1xf32>
    %327 = vector.extract_strided_slice %319 {offsets = [0, 0], sizes = [2, 15], strides = [1, 1]} : vector<2x16xf32> to vector<2x15xf32>
    %328 = tpu.concatenate %326, %327 in 1 : vector<2x1xf32>, vector<2x15xf32> -> vector<2x16xf32>
    %cst_84 = arith.constant 0.000000e+00 : f32
    %329 = vector.broadcast %cst_84 : f32 to vector<2x1xf32>
    %330 = vector.extract_strided_slice %319 {offsets = [0, 1], sizes = [2, 15], strides = [1, 1]} : vector<2x16xf32> to vector<2x15xf32>
    %331 = tpu.concatenate %330, %329 in 1 : vector<2x15xf32>, vector<2x1xf32> -> vector<2x16xf32>
    %c48 = arith.constant 48 : index
    %332 = memref.load %arg1[%c48] : memref<192xf32, #tpu.memory_space<smem>>
    %333 = vector.broadcast %332 : f32 to vector<2x16xf32>
    %334 = arith.mulf %333, %322 : vector<2x16xf32>
    %c52 = arith.constant 52 : index
    %335 = memref.load %arg1[%c52] : memref<192xf32, #tpu.memory_space<smem>>
    %336 = vector.broadcast %335 : f32 to vector<2x16xf32>
    %337 = arith.mulf %336, %288 : vector<2x16xf32>
    %338 = arith.addf %334, %337 : vector<2x16xf32>
    %c56 = arith.constant 56 : index
    %339 = memref.load %arg1[%c56] : memref<192xf32, #tpu.memory_space<smem>>
    %340 = vector.broadcast %339 : f32 to vector<2x16xf32>
    %341 = arith.mulf %340, %325 : vector<2x16xf32>
    %342 = arith.addf %338, %341 : vector<2x16xf32>
    %c50 = arith.constant 50 : index
    %343 = memref.load %arg1[%c50] : memref<192xf32, #tpu.memory_space<smem>>
    %344 = vector.broadcast %343 : f32 to vector<2x16xf32>
    %345 = arith.mulf %344, %328 : vector<2x16xf32>
    %346 = arith.addf %342, %345 : vector<2x16xf32>
    %c54 = arith.constant 54 : index
    %347 = memref.load %arg1[%c54] : memref<192xf32, #tpu.memory_space<smem>>
    %348 = vector.broadcast %347 : f32 to vector<2x16xf32>
    %349 = arith.mulf %348, %319 : vector<2x16xf32>
    %350 = arith.addf %346, %349 : vector<2x16xf32>
    %c58 = arith.constant 58 : index
    %351 = memref.load %arg1[%c58] : memref<192xf32, #tpu.memory_space<smem>>
    %352 = vector.broadcast %351 : f32 to vector<2x16xf32>
    %353 = arith.mulf %352, %331 : vector<2x16xf32>
    %354 = arith.addf %350, %353 : vector<2x16xf32>
    %c49 = arith.constant 49 : index
    %355 = memref.load %arg1[%c49] : memref<192xf32, #tpu.memory_space<smem>>
    %356 = vector.broadcast %355 : f32 to vector<2x16xf32>
    %357 = arith.mulf %356, %322 : vector<2x16xf32>
    %c53 = arith.constant 53 : index
    %358 = memref.load %arg1[%c53] : memref<192xf32, #tpu.memory_space<smem>>
    %359 = vector.broadcast %358 : f32 to vector<2x16xf32>
    %360 = arith.mulf %359, %288 : vector<2x16xf32>
    %361 = arith.addf %357, %360 : vector<2x16xf32>
    %c57 = arith.constant 57 : index
    %362 = memref.load %arg1[%c57] : memref<192xf32, #tpu.memory_space<smem>>
    %363 = vector.broadcast %362 : f32 to vector<2x16xf32>
    %364 = arith.mulf %363, %325 : vector<2x16xf32>
    %365 = arith.addf %361, %364 : vector<2x16xf32>
    %c51 = arith.constant 51 : index
    %366 = memref.load %arg1[%c51] : memref<192xf32, #tpu.memory_space<smem>>
    %367 = vector.broadcast %366 : f32 to vector<2x16xf32>
    %368 = arith.mulf %367, %328 : vector<2x16xf32>
    %369 = arith.addf %365, %368 : vector<2x16xf32>
    %c55 = arith.constant 55 : index
    %370 = memref.load %arg1[%c55] : memref<192xf32, #tpu.memory_space<smem>>
    %371 = vector.broadcast %370 : f32 to vector<2x16xf32>
    %372 = arith.mulf %371, %319 : vector<2x16xf32>
    %373 = arith.addf %369, %372 : vector<2x16xf32>
    %c59 = arith.constant 59 : index
    %374 = memref.load %arg1[%c59] : memref<192xf32, #tpu.memory_space<smem>>
    %375 = vector.broadcast %374 : f32 to vector<2x16xf32>
    %376 = arith.mulf %375, %331 : vector<2x16xf32>
    %377 = arith.addf %373, %376 : vector<2x16xf32>
    %cst_85 = arith.constant dense<0.000000e+00> : vector<2xf32>
    %378 = vector.multi_reduction <add>, %354, %cst_85 [1] : vector<2x16xf32> to vector<2xf32>
    %379 = vector.shape_cast %378 : vector<2xf32> to vector<2x1xf32>
    %cst_86 = arith.constant dense<0.000000e+00> : vector<1xf32>
    %380 = vector.multi_reduction <add>, %379, %cst_86 [0] : vector<2x1xf32> to vector<1xf32>
    %381 = vector.shape_cast %380 : vector<1xf32> to vector<1x1xf32>
    %cst_87 = arith.constant 3.200000e+01 : f32
    %382 = vector.broadcast %cst_87 : f32 to vector<1x1xf32>
    %383 = arith.divf %381, %382 : vector<1x1xf32>
    %384 = vector.broadcast %383 : vector<1x1xf32> to vector<2x16xf32>
    %385 = arith.subf %354, %384 : vector<2x16xf32>
    %386 = arith.mulf %385, %385 : vector<2x16xf32>
    %cst_88 = arith.constant dense<0.000000e+00> : vector<2xf32>
    %387 = vector.multi_reduction <add>, %386, %cst_88 [1] : vector<2x16xf32> to vector<2xf32>
    %388 = vector.shape_cast %387 : vector<2xf32> to vector<2x1xf32>
    %cst_89 = arith.constant dense<0.000000e+00> : vector<1xf32>
    %389 = vector.multi_reduction <add>, %388, %cst_89 [0] : vector<2x1xf32> to vector<1xf32>
    %390 = vector.shape_cast %389 : vector<1xf32> to vector<1x1xf32>
    %cst_90 = arith.constant 3.200000e+01 : f32
    %391 = vector.broadcast %cst_90 : f32 to vector<1x1xf32>
    %392 = arith.divf %390, %391 : vector<1x1xf32>
    %c60 = arith.constant 60 : index
    %393 = memref.load %arg1[%c60] : memref<192xf32, #tpu.memory_space<smem>>
    %cst_91 = arith.constant 9.99999974E-6 : f32
    %394 = vector.broadcast %cst_91 : f32 to vector<1x1xf32>
    %395 = arith.addf %392, %394 : vector<1x1xf32>
    %396 = math.rsqrt %395 : vector<1x1xf32>
    %397 = vector.broadcast %393 : f32 to vector<1x1xf32>
    %398 = arith.mulf %397, %396 : vector<1x1xf32>
    %399 = vector.broadcast %398 : vector<1x1xf32> to vector<2x16xf32>
    %400 = arith.mulf %385, %399 : vector<2x16xf32>
    %c62 = arith.constant 62 : index
    %401 = memref.load %arg1[%c62] : memref<192xf32, #tpu.memory_space<smem>>
    %402 = vector.broadcast %401 : f32 to vector<2x16xf32>
    %403 = arith.addf %400, %402 : vector<2x16xf32>
    %cst_92 = arith.constant 0.000000e+00 : f32
    %404 = vector.broadcast %cst_92 : f32 to vector<2x16xf32>
    %405 = arith.cmpf oge, %403, %404 : vector<2x16xf32>
    %cst_93 = arith.constant 1.000000e-01 : f32
    %406 = vector.broadcast %cst_93 : f32 to vector<2x16xf32>
    %407 = arith.mulf %406, %403 : vector<2x16xf32>
    %408 = arith.select %405, %403, %407 : vector<2x16xi1>, vector<2x16xf32>
    %cst_94 = arith.constant dense<0.000000e+00> : vector<2xf32>
    %409 = vector.multi_reduction <add>, %377, %cst_94 [1] : vector<2x16xf32> to vector<2xf32>
    %410 = vector.shape_cast %409 : vector<2xf32> to vector<2x1xf32>
    %cst_95 = arith.constant dense<0.000000e+00> : vector<1xf32>
    %411 = vector.multi_reduction <add>, %410, %cst_95 [0] : vector<2x1xf32> to vector<1xf32>
    %412 = vector.shape_cast %411 : vector<1xf32> to vector<1x1xf32>
    %cst_96 = arith.constant 3.200000e+01 : f32
    %413 = vector.broadcast %cst_96 : f32 to vector<1x1xf32>
    %414 = arith.divf %412, %413 : vector<1x1xf32>
    %415 = vector.broadcast %414 : vector<1x1xf32> to vector<2x16xf32>
    %416 = arith.subf %377, %415 : vector<2x16xf32>
    %417 = arith.mulf %416, %416 : vector<2x16xf32>
    %cst_97 = arith.constant dense<0.000000e+00> : vector<2xf32>
    %418 = vector.multi_reduction <add>, %417, %cst_97 [1] : vector<2x16xf32> to vector<2xf32>
    %419 = vector.shape_cast %418 : vector<2xf32> to vector<2x1xf32>
    %cst_98 = arith.constant dense<0.000000e+00> : vector<1xf32>
    %420 = vector.multi_reduction <add>, %419, %cst_98 [0] : vector<2x1xf32> to vector<1xf32>
    %421 = vector.shape_cast %420 : vector<1xf32> to vector<1x1xf32>
    %cst_99 = arith.constant 3.200000e+01 : f32
    %422 = vector.broadcast %cst_99 : f32 to vector<1x1xf32>
    %423 = arith.divf %421, %422 : vector<1x1xf32>
    %c61 = arith.constant 61 : index
    %424 = memref.load %arg1[%c61] : memref<192xf32, #tpu.memory_space<smem>>
    %cst_100 = arith.constant 9.99999974E-6 : f32
    %425 = vector.broadcast %cst_100 : f32 to vector<1x1xf32>
    %426 = arith.addf %423, %425 : vector<1x1xf32>
    %427 = math.rsqrt %426 : vector<1x1xf32>
    %428 = vector.broadcast %424 : f32 to vector<1x1xf32>
    %429 = arith.mulf %428, %427 : vector<1x1xf32>
    %430 = vector.broadcast %429 : vector<1x1xf32> to vector<2x16xf32>
    %431 = arith.mulf %416, %430 : vector<2x16xf32>
    %c63 = arith.constant 63 : index
    %432 = memref.load %arg1[%c63] : memref<192xf32, #tpu.memory_space<smem>>
    %433 = vector.broadcast %432 : f32 to vector<2x16xf32>
    %434 = arith.addf %431, %433 : vector<2x16xf32>
    %cst_101 = arith.constant 0.000000e+00 : f32
    %435 = vector.broadcast %cst_101 : f32 to vector<2x16xf32>
    %436 = arith.cmpf oge, %434, %435 : vector<2x16xf32>
    %cst_102 = arith.constant 1.000000e-01 : f32
    %437 = vector.broadcast %cst_102 : f32 to vector<2x16xf32>
    %438 = arith.mulf %437, %434 : vector<2x16xf32>
    %439 = arith.select %436, %434, %438 : vector<2x16xi1>, vector<2x16xf32>
    %cst_103 = arith.constant 0.000000e+00 : f32
    %440 = vector.broadcast %cst_103 : f32 to vector<2x1xf32>
    %441 = vector.extract_strided_slice %408 {offsets = [0, 0], sizes = [2, 15], strides = [1, 1]} : vector<2x16xf32> to vector<2x15xf32>
    %442 = tpu.concatenate %440, %441 in 1 : vector<2x1xf32>, vector<2x15xf32> -> vector<2x16xf32>
    %cst_104 = arith.constant 0.000000e+00 : f32
    %443 = vector.broadcast %cst_104 : f32 to vector<2x1xf32>
    %444 = vector.extract_strided_slice %408 {offsets = [0, 1], sizes = [2, 15], strides = [1, 1]} : vector<2x16xf32> to vector<2x15xf32>
    %445 = tpu.concatenate %444, %443 in 1 : vector<2x15xf32>, vector<2x1xf32> -> vector<2x16xf32>
    %cst_105 = arith.constant 0.000000e+00 : f32
    %446 = vector.broadcast %cst_105 : f32 to vector<2x1xf32>
    %447 = vector.extract_strided_slice %439 {offsets = [0, 0], sizes = [2, 15], strides = [1, 1]} : vector<2x16xf32> to vector<2x15xf32>
    %448 = tpu.concatenate %446, %447 in 1 : vector<2x1xf32>, vector<2x15xf32> -> vector<2x16xf32>
    %cst_106 = arith.constant 0.000000e+00 : f32
    %449 = vector.broadcast %cst_106 : f32 to vector<2x1xf32>
    %450 = vector.extract_strided_slice %439 {offsets = [0, 1], sizes = [2, 15], strides = [1, 1]} : vector<2x16xf32> to vector<2x15xf32>
    %451 = tpu.concatenate %450, %449 in 1 : vector<2x15xf32>, vector<2x1xf32> -> vector<2x16xf32>
    %c32 = arith.constant 32 : index
    %452 = memref.load %arg1[%c32] : memref<192xf32, #tpu.memory_space<smem>>
    %453 = vector.broadcast %452 : f32 to vector<2x16xf32>
    %454 = arith.mulf %453, %442 : vector<2x16xf32>
    %c36 = arith.constant 36 : index
    %455 = memref.load %arg1[%c36] : memref<192xf32, #tpu.memory_space<smem>>
    %456 = vector.broadcast %455 : f32 to vector<2x16xf32>
    %457 = arith.mulf %456, %408 : vector<2x16xf32>
    %458 = arith.addf %454, %457 : vector<2x16xf32>
    %c40 = arith.constant 40 : index
    %459 = memref.load %arg1[%c40] : memref<192xf32, #tpu.memory_space<smem>>
    %460 = vector.broadcast %459 : f32 to vector<2x16xf32>
    %461 = arith.mulf %460, %445 : vector<2x16xf32>
    %462 = arith.addf %458, %461 : vector<2x16xf32>
    %c34 = arith.constant 34 : index
    %463 = memref.load %arg1[%c34] : memref<192xf32, #tpu.memory_space<smem>>
    %464 = vector.broadcast %463 : f32 to vector<2x16xf32>
    %465 = arith.mulf %464, %448 : vector<2x16xf32>
    %466 = arith.addf %462, %465 : vector<2x16xf32>
    %c38 = arith.constant 38 : index
    %467 = memref.load %arg1[%c38] : memref<192xf32, #tpu.memory_space<smem>>
    %468 = vector.broadcast %467 : f32 to vector<2x16xf32>
    %469 = arith.mulf %468, %439 : vector<2x16xf32>
    %470 = arith.addf %466, %469 : vector<2x16xf32>
    %c42 = arith.constant 42 : index
    %471 = memref.load %arg1[%c42] : memref<192xf32, #tpu.memory_space<smem>>
    %472 = vector.broadcast %471 : f32 to vector<2x16xf32>
    %473 = arith.mulf %472, %451 : vector<2x16xf32>
    %474 = arith.addf %470, %473 : vector<2x16xf32>
    %c33 = arith.constant 33 : index
    %475 = memref.load %arg1[%c33] : memref<192xf32, #tpu.memory_space<smem>>
    %476 = vector.broadcast %475 : f32 to vector<2x16xf32>
    %477 = arith.mulf %476, %442 : vector<2x16xf32>
    %c37 = arith.constant 37 : index
    %478 = memref.load %arg1[%c37] : memref<192xf32, #tpu.memory_space<smem>>
    %479 = vector.broadcast %478 : f32 to vector<2x16xf32>
    %480 = arith.mulf %479, %408 : vector<2x16xf32>
    %481 = arith.addf %477, %480 : vector<2x16xf32>
    %c41 = arith.constant 41 : index
    %482 = memref.load %arg1[%c41] : memref<192xf32, #tpu.memory_space<smem>>
    %483 = vector.broadcast %482 : f32 to vector<2x16xf32>
    %484 = arith.mulf %483, %445 : vector<2x16xf32>
    %485 = arith.addf %481, %484 : vector<2x16xf32>
    %c35 = arith.constant 35 : index
    %486 = memref.load %arg1[%c35] : memref<192xf32, #tpu.memory_space<smem>>
    %487 = vector.broadcast %486 : f32 to vector<2x16xf32>
    %488 = arith.mulf %487, %448 : vector<2x16xf32>
    %489 = arith.addf %485, %488 : vector<2x16xf32>
    %c39 = arith.constant 39 : index
    %490 = memref.load %arg1[%c39] : memref<192xf32, #tpu.memory_space<smem>>
    %491 = vector.broadcast %490 : f32 to vector<2x16xf32>
    %492 = arith.mulf %491, %439 : vector<2x16xf32>
    %493 = arith.addf %489, %492 : vector<2x16xf32>
    %c43 = arith.constant 43 : index
    %494 = memref.load %arg1[%c43] : memref<192xf32, #tpu.memory_space<smem>>
    %495 = vector.broadcast %494 : f32 to vector<2x16xf32>
    %496 = arith.mulf %495, %451 : vector<2x16xf32>
    %497 = arith.addf %493, %496 : vector<2x16xf32>
    %cst_107 = arith.constant dense<0.000000e+00> : vector<2x8xf32>
    %498 = tpu.matmul %474, %23, %cst_107 {dimension_numbers = #tpu.dot_dimension_numbers<[1], [0], [0], [1], [0, 0, 1, 1], [], []>} : vector<2x16xf32>, vector<16x8xf32>, vector<2x8xf32> -> vector<2x8xf32>
    %cst_108 = arith.constant dense<0.000000e+00> : vector<2x8xf32>
    %499 = tpu.matmul %497, %23, %cst_108 {dimension_numbers = #tpu.dot_dimension_numbers<[1], [0], [0], [1], [0, 0, 1, 1], [], []>} : vector<2x16xf32>, vector<16x8xf32>, vector<2x8xf32> -> vector<2x8xf32>
    %cst_109 = arith.constant dense<0.000000e+00> : vector<2xf32>
    %500 = vector.multi_reduction <add>, %498, %cst_109 [1] : vector<2x8xf32> to vector<2xf32>
    %501 = vector.shape_cast %500 : vector<2xf32> to vector<2x1xf32>
    %cst_110 = arith.constant dense<0.000000e+00> : vector<1xf32>
    %502 = vector.multi_reduction <add>, %501, %cst_110 [0] : vector<2x1xf32> to vector<1xf32>
    %503 = vector.shape_cast %502 : vector<1xf32> to vector<1x1xf32>
    %cst_111 = arith.constant 1.600000e+01 : f32
    %504 = vector.broadcast %cst_111 : f32 to vector<1x1xf32>
    %505 = arith.divf %503, %504 : vector<1x1xf32>
    %506 = vector.broadcast %505 : vector<1x1xf32> to vector<2x8xf32>
    %507 = arith.subf %498, %506 : vector<2x8xf32>
    %508 = arith.mulf %507, %507 : vector<2x8xf32>
    %cst_112 = arith.constant dense<0.000000e+00> : vector<2xf32>
    %509 = vector.multi_reduction <add>, %508, %cst_112 [1] : vector<2x8xf32> to vector<2xf32>
    %510 = vector.shape_cast %509 : vector<2xf32> to vector<2x1xf32>
    %cst_113 = arith.constant dense<0.000000e+00> : vector<1xf32>
    %511 = vector.multi_reduction <add>, %510, %cst_113 [0] : vector<2x1xf32> to vector<1xf32>
    %512 = vector.shape_cast %511 : vector<1xf32> to vector<1x1xf32>
    %cst_114 = arith.constant 1.600000e+01 : f32
    %513 = vector.broadcast %cst_114 : f32 to vector<1x1xf32>
    %514 = arith.divf %512, %513 : vector<1x1xf32>
    %c44 = arith.constant 44 : index
    %515 = memref.load %arg1[%c44] : memref<192xf32, #tpu.memory_space<smem>>
    %cst_115 = arith.constant 9.99999974E-6 : f32
    %516 = vector.broadcast %cst_115 : f32 to vector<1x1xf32>
    %517 = arith.addf %514, %516 : vector<1x1xf32>
    %518 = math.rsqrt %517 : vector<1x1xf32>
    %519 = vector.broadcast %515 : f32 to vector<1x1xf32>
    %520 = arith.mulf %519, %518 : vector<1x1xf32>
    %521 = vector.broadcast %520 : vector<1x1xf32> to vector<2x8xf32>
    %522 = arith.mulf %507, %521 : vector<2x8xf32>
    %c46 = arith.constant 46 : index
    %523 = memref.load %arg1[%c46] : memref<192xf32, #tpu.memory_space<smem>>
    %524 = vector.broadcast %523 : f32 to vector<2x8xf32>
    %525 = arith.addf %522, %524 : vector<2x8xf32>
    %cst_116 = arith.constant 0.000000e+00 : f32
    %526 = vector.broadcast %cst_116 : f32 to vector<2x8xf32>
    %527 = arith.cmpf oge, %525, %526 : vector<2x8xf32>
    %cst_117 = arith.constant 1.000000e-01 : f32
    %528 = vector.broadcast %cst_117 : f32 to vector<2x8xf32>
    %529 = arith.mulf %528, %525 : vector<2x8xf32>
    %530 = arith.select %527, %525, %529 : vector<2x8xi1>, vector<2x8xf32>
    %cst_118 = arith.constant dense<0.000000e+00> : vector<2xf32>
    %531 = vector.multi_reduction <add>, %499, %cst_118 [1] : vector<2x8xf32> to vector<2xf32>
    %532 = vector.shape_cast %531 : vector<2xf32> to vector<2x1xf32>
    %cst_119 = arith.constant dense<0.000000e+00> : vector<1xf32>
    %533 = vector.multi_reduction <add>, %532, %cst_119 [0] : vector<2x1xf32> to vector<1xf32>
    %534 = vector.shape_cast %533 : vector<1xf32> to vector<1x1xf32>
    %cst_120 = arith.constant 1.600000e+01 : f32
    %535 = vector.broadcast %cst_120 : f32 to vector<1x1xf32>
    %536 = arith.divf %534, %535 : vector<1x1xf32>
    %537 = vector.broadcast %536 : vector<1x1xf32> to vector<2x8xf32>
    %538 = arith.subf %499, %537 : vector<2x8xf32>
    %539 = arith.mulf %538, %538 : vector<2x8xf32>
    %cst_121 = arith.constant dense<0.000000e+00> : vector<2xf32>
    %540 = vector.multi_reduction <add>, %539, %cst_121 [1] : vector<2x8xf32> to vector<2xf32>
    %541 = vector.shape_cast %540 : vector<2xf32> to vector<2x1xf32>
    %cst_122 = arith.constant dense<0.000000e+00> : vector<1xf32>
    %542 = vector.multi_reduction <add>, %541, %cst_122 [0] : vector<2x1xf32> to vector<1xf32>
    %543 = vector.shape_cast %542 : vector<1xf32> to vector<1x1xf32>
    %cst_123 = arith.constant 1.600000e+01 : f32
    %544 = vector.broadcast %cst_123 : f32 to vector<1x1xf32>
    %545 = arith.divf %543, %544 : vector<1x1xf32>
    %c45 = arith.constant 45 : index
    %546 = memref.load %arg1[%c45] : memref<192xf32, #tpu.memory_space<smem>>
    %cst_124 = arith.constant 9.99999974E-6 : f32
    %547 = vector.broadcast %cst_124 : f32 to vector<1x1xf32>
    %548 = arith.addf %545, %547 : vector<1x1xf32>
    %549 = math.rsqrt %548 : vector<1x1xf32>
    %550 = vector.broadcast %546 : f32 to vector<1x1xf32>
    %551 = arith.mulf %550, %549 : vector<1x1xf32>
    %552 = vector.broadcast %551 : vector<1x1xf32> to vector<2x8xf32>
    %553 = arith.mulf %538, %552 : vector<2x8xf32>
    %c47 = arith.constant 47 : index
    %554 = memref.load %arg1[%c47] : memref<192xf32, #tpu.memory_space<smem>>
    %555 = vector.broadcast %554 : f32 to vector<2x8xf32>
    %556 = arith.addf %553, %555 : vector<2x8xf32>
    %cst_125 = arith.constant 0.000000e+00 : f32
    %557 = vector.broadcast %cst_125 : f32 to vector<2x8xf32>
    %558 = arith.cmpf oge, %556, %557 : vector<2x8xf32>
    %cst_126 = arith.constant 1.000000e-01 : f32
    %559 = vector.broadcast %cst_126 : f32 to vector<2x8xf32>
    %560 = arith.mulf %559, %556 : vector<2x8xf32>
    %561 = arith.select %558, %556, %560 : vector<2x8xi1>, vector<2x8xf32>
    %cst_127 = arith.constant 0.000000e+00 : f32
    %562 = vector.broadcast %cst_127 : f32 to vector<2x1xf32>
    %563 = vector.extract_strided_slice %530 {offsets = [0, 0], sizes = [2, 7], strides = [1, 1]} : vector<2x8xf32> to vector<2x7xf32>
    %564 = tpu.concatenate %562, %563 in 1 : vector<2x1xf32>, vector<2x7xf32> -> vector<2x8xf32>
    %cst_128 = arith.constant 0.000000e+00 : f32
    %565 = vector.broadcast %cst_128 : f32 to vector<2x1xf32>
    %566 = vector.extract_strided_slice %530 {offsets = [0, 1], sizes = [2, 7], strides = [1, 1]} : vector<2x8xf32> to vector<2x7xf32>
    %567 = tpu.concatenate %566, %565 in 1 : vector<2x7xf32>, vector<2x1xf32> -> vector<2x8xf32>
    %cst_129 = arith.constant 0.000000e+00 : f32
    %568 = vector.broadcast %cst_129 : f32 to vector<2x1xf32>
    %569 = vector.extract_strided_slice %561 {offsets = [0, 0], sizes = [2, 7], strides = [1, 1]} : vector<2x8xf32> to vector<2x7xf32>
    %570 = tpu.concatenate %568, %569 in 1 : vector<2x1xf32>, vector<2x7xf32> -> vector<2x8xf32>
    %cst_130 = arith.constant 0.000000e+00 : f32
    %571 = vector.broadcast %cst_130 : f32 to vector<2x1xf32>
    %572 = vector.extract_strided_slice %561 {offsets = [0, 1], sizes = [2, 7], strides = [1, 1]} : vector<2x8xf32> to vector<2x7xf32>
    %573 = tpu.concatenate %572, %571 in 1 : vector<2x7xf32>, vector<2x1xf32> -> vector<2x8xf32>
    %c64 = arith.constant 64 : index
    %574 = memref.load %arg1[%c64] : memref<192xf32, #tpu.memory_space<smem>>
    %575 = vector.broadcast %574 : f32 to vector<2x8xf32>
    %576 = arith.mulf %575, %564 : vector<2x8xf32>
    %c68 = arith.constant 68 : index
    %577 = memref.load %arg1[%c68] : memref<192xf32, #tpu.memory_space<smem>>
    %578 = vector.broadcast %577 : f32 to vector<2x8xf32>
    %579 = arith.mulf %578, %530 : vector<2x8xf32>
    %580 = arith.addf %576, %579 : vector<2x8xf32>
    %c72 = arith.constant 72 : index
    %581 = memref.load %arg1[%c72] : memref<192xf32, #tpu.memory_space<smem>>
    %582 = vector.broadcast %581 : f32 to vector<2x8xf32>
    %583 = arith.mulf %582, %567 : vector<2x8xf32>
    %584 = arith.addf %580, %583 : vector<2x8xf32>
    %c66 = arith.constant 66 : index
    %585 = memref.load %arg1[%c66] : memref<192xf32, #tpu.memory_space<smem>>
    %586 = vector.broadcast %585 : f32 to vector<2x8xf32>
    %587 = arith.mulf %586, %570 : vector<2x8xf32>
    %588 = arith.addf %584, %587 : vector<2x8xf32>
    %c70 = arith.constant 70 : index
    %589 = memref.load %arg1[%c70] : memref<192xf32, #tpu.memory_space<smem>>
    %590 = vector.broadcast %589 : f32 to vector<2x8xf32>
    %591 = arith.mulf %590, %561 : vector<2x8xf32>
    %592 = arith.addf %588, %591 : vector<2x8xf32>
    %c74 = arith.constant 74 : index
    %593 = memref.load %arg1[%c74] : memref<192xf32, #tpu.memory_space<smem>>
    %594 = vector.broadcast %593 : f32 to vector<2x8xf32>
    %595 = arith.mulf %594, %573 : vector<2x8xf32>
    %596 = arith.addf %592, %595 : vector<2x8xf32>
    %c65 = arith.constant 65 : index
    %597 = memref.load %arg1[%c65] : memref<192xf32, #tpu.memory_space<smem>>
    %598 = vector.broadcast %597 : f32 to vector<2x8xf32>
    %599 = arith.mulf %598, %564 : vector<2x8xf32>
    %c69 = arith.constant 69 : index
    %600 = memref.load %arg1[%c69] : memref<192xf32, #tpu.memory_space<smem>>
    %601 = vector.broadcast %600 : f32 to vector<2x8xf32>
    %602 = arith.mulf %601, %530 : vector<2x8xf32>
    %603 = arith.addf %599, %602 : vector<2x8xf32>
    %c73 = arith.constant 73 : index
    %604 = memref.load %arg1[%c73] : memref<192xf32, #tpu.memory_space<smem>>
    %605 = vector.broadcast %604 : f32 to vector<2x8xf32>
    %606 = arith.mulf %605, %567 : vector<2x8xf32>
    %607 = arith.addf %603, %606 : vector<2x8xf32>
    %c67 = arith.constant 67 : index
    %608 = memref.load %arg1[%c67] : memref<192xf32, #tpu.memory_space<smem>>
    %609 = vector.broadcast %608 : f32 to vector<2x8xf32>
    %610 = arith.mulf %609, %570 : vector<2x8xf32>
    %611 = arith.addf %607, %610 : vector<2x8xf32>
    %c71 = arith.constant 71 : index
    %612 = memref.load %arg1[%c71] : memref<192xf32, #tpu.memory_space<smem>>
    %613 = vector.broadcast %612 : f32 to vector<2x8xf32>
    %614 = arith.mulf %613, %561 : vector<2x8xf32>
    %615 = arith.addf %611, %614 : vector<2x8xf32>
    %c75 = arith.constant 75 : index
    %616 = memref.load %arg1[%c75] : memref<192xf32, #tpu.memory_space<smem>>
    %617 = vector.broadcast %616 : f32 to vector<2x8xf32>
    %618 = arith.mulf %617, %573 : vector<2x8xf32>
    %619 = arith.addf %615, %618 : vector<2x8xf32>
    %cst_131 = arith.constant dense<0.000000e+00> : vector<2xf32>
    %620 = vector.multi_reduction <add>, %596, %cst_131 [1] : vector<2x8xf32> to vector<2xf32>
    %621 = vector.shape_cast %620 : vector<2xf32> to vector<2x1xf32>
    %cst_132 = arith.constant dense<0.000000e+00> : vector<1xf32>
    %622 = vector.multi_reduction <add>, %621, %cst_132 [0] : vector<2x1xf32> to vector<1xf32>
    %623 = vector.shape_cast %622 : vector<1xf32> to vector<1x1xf32>
    %cst_133 = arith.constant 1.600000e+01 : f32
    %624 = vector.broadcast %cst_133 : f32 to vector<1x1xf32>
    %625 = arith.divf %623, %624 : vector<1x1xf32>
    %626 = vector.broadcast %625 : vector<1x1xf32> to vector<2x8xf32>
    %627 = arith.subf %596, %626 : vector<2x8xf32>
    %628 = arith.mulf %627, %627 : vector<2x8xf32>
    %cst_134 = arith.constant dense<0.000000e+00> : vector<2xf32>
    %629 = vector.multi_reduction <add>, %628, %cst_134 [1] : vector<2x8xf32> to vector<2xf32>
    %630 = vector.shape_cast %629 : vector<2xf32> to vector<2x1xf32>
    %cst_135 = arith.constant dense<0.000000e+00> : vector<1xf32>
    %631 = vector.multi_reduction <add>, %630, %cst_135 [0] : vector<2x1xf32> to vector<1xf32>
    %632 = vector.shape_cast %631 : vector<1xf32> to vector<1x1xf32>
    %cst_136 = arith.constant 1.600000e+01 : f32
    %633 = vector.broadcast %cst_136 : f32 to vector<1x1xf32>
    %634 = arith.divf %632, %633 : vector<1x1xf32>
    %c76 = arith.constant 76 : index
    %635 = memref.load %arg1[%c76] : memref<192xf32, #tpu.memory_space<smem>>
    %cst_137 = arith.constant 9.99999974E-6 : f32
    %636 = vector.broadcast %cst_137 : f32 to vector<1x1xf32>
    %637 = arith.addf %634, %636 : vector<1x1xf32>
    %638 = math.rsqrt %637 : vector<1x1xf32>
    %639 = vector.broadcast %635 : f32 to vector<1x1xf32>
    %640 = arith.mulf %639, %638 : vector<1x1xf32>
    %641 = vector.broadcast %640 : vector<1x1xf32> to vector<2x8xf32>
    %642 = arith.mulf %627, %641 : vector<2x8xf32>
    %c78 = arith.constant 78 : index
    %643 = memref.load %arg1[%c78] : memref<192xf32, #tpu.memory_space<smem>>
    %644 = vector.broadcast %643 : f32 to vector<2x8xf32>
    %645 = arith.addf %642, %644 : vector<2x8xf32>
    %cst_138 = arith.constant 0.000000e+00 : f32
    %646 = vector.broadcast %cst_138 : f32 to vector<2x8xf32>
    %647 = arith.cmpf oge, %645, %646 : vector<2x8xf32>
    %cst_139 = arith.constant 1.000000e-01 : f32
    %648 = vector.broadcast %cst_139 : f32 to vector<2x8xf32>
    %649 = arith.mulf %648, %645 : vector<2x8xf32>
    %650 = arith.select %647, %645, %649 : vector<2x8xi1>, vector<2x8xf32>
    %cst_140 = arith.constant dense<0.000000e+00> : vector<2xf32>
    %651 = vector.multi_reduction <add>, %619, %cst_140 [1] : vector<2x8xf32> to vector<2xf32>
    %652 = vector.shape_cast %651 : vector<2xf32> to vector<2x1xf32>
    %cst_141 = arith.constant dense<0.000000e+00> : vector<1xf32>
    %653 = vector.multi_reduction <add>, %652, %cst_141 [0] : vector<2x1xf32> to vector<1xf32>
    %654 = vector.shape_cast %653 : vector<1xf32> to vector<1x1xf32>
    %cst_142 = arith.constant 1.600000e+01 : f32
    %655 = vector.broadcast %cst_142 : f32 to vector<1x1xf32>
    %656 = arith.divf %654, %655 : vector<1x1xf32>
    %657 = vector.broadcast %656 : vector<1x1xf32> to vector<2x8xf32>
    %658 = arith.subf %619, %657 : vector<2x8xf32>
    %659 = arith.mulf %658, %658 : vector<2x8xf32>
    %cst_143 = arith.constant dense<0.000000e+00> : vector<2xf32>
    %660 = vector.multi_reduction <add>, %659, %cst_143 [1] : vector<2x8xf32> to vector<2xf32>
    %661 = vector.shape_cast %660 : vector<2xf32> to vector<2x1xf32>
    %cst_144 = arith.constant dense<0.000000e+00> : vector<1xf32>
    %662 = vector.multi_reduction <add>, %661, %cst_144 [0] : vector<2x1xf32> to vector<1xf32>
    %663 = vector.shape_cast %662 : vector<1xf32> to vector<1x1xf32>
    %cst_145 = arith.constant 1.600000e+01 : f32
    %664 = vector.broadcast %cst_145 : f32 to vector<1x1xf32>
    %665 = arith.divf %663, %664 : vector<1x1xf32>
    %c77 = arith.constant 77 : index
    %666 = memref.load %arg1[%c77] : memref<192xf32, #tpu.memory_space<smem>>
    %cst_146 = arith.constant 9.99999974E-6 : f32
    %667 = vector.broadcast %cst_146 : f32 to vector<1x1xf32>
    %668 = arith.addf %665, %667 : vector<1x1xf32>
    %669 = math.rsqrt %668 : vector<1x1xf32>
    %670 = vector.broadcast %666 : f32 to vector<1x1xf32>
    %671 = arith.mulf %670, %669 : vector<1x1xf32>
    %672 = vector.broadcast %671 : vector<1x1xf32> to vector<2x8xf32>
    %673 = arith.mulf %658, %672 : vector<2x8xf32>
    %c79 = arith.constant 79 : index
    %674 = memref.load %arg1[%c79] : memref<192xf32, #tpu.memory_space<smem>>
    %675 = vector.broadcast %674 : f32 to vector<2x8xf32>
    %676 = arith.addf %673, %675 : vector<2x8xf32>
    %cst_147 = arith.constant 0.000000e+00 : f32
    %677 = vector.broadcast %cst_147 : f32 to vector<2x8xf32>
    %678 = arith.cmpf oge, %676, %677 : vector<2x8xf32>
    %cst_148 = arith.constant 1.000000e-01 : f32
    %679 = vector.broadcast %cst_148 : f32 to vector<2x8xf32>
    %680 = arith.mulf %679, %676 : vector<2x8xf32>
    %681 = arith.select %678, %676, %680 : vector<2x8xi1>, vector<2x8xf32>
    %cst_149 = arith.constant 0.000000e+00 : f32
    %682 = vector.broadcast %cst_149 : f32 to vector<2x1xf32>
    %683 = vector.extract_strided_slice %650 {offsets = [0, 0], sizes = [2, 7], strides = [1, 1]} : vector<2x8xf32> to vector<2x7xf32>
    %684 = tpu.concatenate %682, %683 in 1 : vector<2x1xf32>, vector<2x7xf32> -> vector<2x8xf32>
    %cst_150 = arith.constant 0.000000e+00 : f32
    %685 = vector.broadcast %cst_150 : f32 to vector<2x1xf32>
    %686 = vector.extract_strided_slice %681 {offsets = [0, 0], sizes = [2, 7], strides = [1, 1]} : vector<2x8xf32> to vector<2x7xf32>
    %687 = tpu.concatenate %685, %686 in 1 : vector<2x1xf32>, vector<2x7xf32> -> vector<2x8xf32>
    %cst_151 = arith.constant 0.000000e+00 : f32
    %688 = vector.broadcast %cst_151 : f32 to vector<2x1xf32>
    %689 = vector.extract_strided_slice %650 {offsets = [0, 1], sizes = [2, 7], strides = [1, 1]} : vector<2x8xf32> to vector<2x7xf32>
    %690 = tpu.concatenate %689, %688 in 1 : vector<2x7xf32>, vector<2x1xf32> -> vector<2x8xf32>
    %cst_152 = arith.constant 0.000000e+00 : f32
    %691 = vector.broadcast %cst_152 : f32 to vector<2x1xf32>
    %692 = vector.extract_strided_slice %681 {offsets = [0, 1], sizes = [2, 7], strides = [1, 1]} : vector<2x8xf32> to vector<2x7xf32>
    %693 = tpu.concatenate %692, %691 in 1 : vector<2x7xf32>, vector<2x1xf32> -> vector<2x8xf32>
    %c84 = arith.constant 84 : index
    %694 = memref.load %arg1[%c84] : memref<192xf32, #tpu.memory_space<smem>>
    %695 = vector.broadcast %694 : f32 to vector<2x8xf32>
    %696 = arith.mulf %695, %650 : vector<2x8xf32>
    %c92 = arith.constant 92 : index
    %697 = memref.load %arg1[%c92] : memref<192xf32, #tpu.memory_space<smem>>
    %698 = vector.broadcast %697 : f32 to vector<2x8xf32>
    %699 = arith.mulf %698, %684 : vector<2x8xf32>
    %700 = arith.addf %696, %699 : vector<2x8xf32>
    %c80 = arith.constant 80 : index
    %701 = memref.load %arg1[%c80] : memref<192xf32, #tpu.memory_space<smem>>
    %702 = vector.broadcast %701 : f32 to vector<2x8xf32>
    %703 = arith.mulf %702, %690 : vector<2x8xf32>
    %c88 = arith.constant 88 : index
    %704 = memref.load %arg1[%c88] : memref<192xf32, #tpu.memory_space<smem>>
    %705 = vector.broadcast %704 : f32 to vector<2x8xf32>
    %706 = arith.mulf %705, %650 : vector<2x8xf32>
    %707 = arith.addf %703, %706 : vector<2x8xf32>
    %c86 = arith.constant 86 : index
    %708 = memref.load %arg1[%c86] : memref<192xf32, #tpu.memory_space<smem>>
    %709 = vector.broadcast %708 : f32 to vector<2x8xf32>
    %710 = arith.mulf %709, %681 : vector<2x8xf32>
    %c94 = arith.constant 94 : index
    %711 = memref.load %arg1[%c94] : memref<192xf32, #tpu.memory_space<smem>>
    %712 = vector.broadcast %711 : f32 to vector<2x8xf32>
    %713 = arith.mulf %712, %687 : vector<2x8xf32>
    %714 = arith.addf %710, %713 : vector<2x8xf32>
    %c82 = arith.constant 82 : index
    %715 = memref.load %arg1[%c82] : memref<192xf32, #tpu.memory_space<smem>>
    %716 = vector.broadcast %715 : f32 to vector<2x8xf32>
    %717 = arith.mulf %716, %693 : vector<2x8xf32>
    %c90 = arith.constant 90 : index
    %718 = memref.load %arg1[%c90] : memref<192xf32, #tpu.memory_space<smem>>
    %719 = vector.broadcast %718 : f32 to vector<2x8xf32>
    %720 = arith.mulf %719, %681 : vector<2x8xf32>
    %721 = arith.addf %717, %720 : vector<2x8xf32>
    %722 = arith.addf %700, %714 : vector<2x8xf32>
    %723 = arith.addf %707, %721 : vector<2x8xf32>
    %cst_153 = arith.constant dense<0.000000e+00> : vector<2x16xf32>
    %724 = tpu.matmul %722, %31, %cst_153 {dimension_numbers = #tpu.dot_dimension_numbers<[1], [0], [0], [1], [0, 0, 1, 1], [], []>} : vector<2x8xf32>, vector<8x16xf32>, vector<2x16xf32> -> vector<2x16xf32>
    %cst_154 = arith.constant dense<0.000000e+00> : vector<2x16xf32>
    %725 = tpu.matmul %723, %39, %cst_154 {dimension_numbers = #tpu.dot_dimension_numbers<[1], [0], [0], [1], [0, 0, 1, 1], [], []>} : vector<2x8xf32>, vector<8x16xf32>, vector<2x16xf32> -> vector<2x16xf32>
    %726 = arith.addf %724, %725 : vector<2x16xf32>
    %c96 = arith.constant 96 : index
    %727 = memref.load %arg1[%c96] : memref<192xf32, #tpu.memory_space<smem>>
    %728 = vector.broadcast %727 : f32 to vector<2x16xf32>
    %729 = arith.addf %726, %728 : vector<2x16xf32>
    %cst_155 = arith.constant 0.000000e+00 : f32
    %730 = vector.broadcast %cst_155 : f32 to vector<2x16xf32>
    %731 = arith.cmpf oge, %729, %730 : vector<2x16xf32>
    %cst_156 = arith.constant 1.000000e-01 : f32
    %732 = vector.broadcast %cst_156 : f32 to vector<2x16xf32>
    %733 = arith.mulf %732, %729 : vector<2x16xf32>
    %734 = arith.select %731, %729, %733 : vector<2x16xi1>, vector<2x16xf32>
    %c85 = arith.constant 85 : index
    %735 = memref.load %arg1[%c85] : memref<192xf32, #tpu.memory_space<smem>>
    %736 = vector.broadcast %735 : f32 to vector<2x8xf32>
    %737 = arith.mulf %736, %650 : vector<2x8xf32>
    %c93 = arith.constant 93 : index
    %738 = memref.load %arg1[%c93] : memref<192xf32, #tpu.memory_space<smem>>
    %739 = vector.broadcast %738 : f32 to vector<2x8xf32>
    %740 = arith.mulf %739, %684 : vector<2x8xf32>
    %741 = arith.addf %737, %740 : vector<2x8xf32>
    %c81 = arith.constant 81 : index
    %742 = memref.load %arg1[%c81] : memref<192xf32, #tpu.memory_space<smem>>
    %743 = vector.broadcast %742 : f32 to vector<2x8xf32>
    %744 = arith.mulf %743, %690 : vector<2x8xf32>
    %c89 = arith.constant 89 : index
    %745 = memref.load %arg1[%c89] : memref<192xf32, #tpu.memory_space<smem>>
    %746 = vector.broadcast %745 : f32 to vector<2x8xf32>
    %747 = arith.mulf %746, %650 : vector<2x8xf32>
    %748 = arith.addf %744, %747 : vector<2x8xf32>
    %c87 = arith.constant 87 : index
    %749 = memref.load %arg1[%c87] : memref<192xf32, #tpu.memory_space<smem>>
    %750 = vector.broadcast %749 : f32 to vector<2x8xf32>
    %751 = arith.mulf %750, %681 : vector<2x8xf32>
    %c95 = arith.constant 95 : index
    %752 = memref.load %arg1[%c95] : memref<192xf32, #tpu.memory_space<smem>>
    %753 = vector.broadcast %752 : f32 to vector<2x8xf32>
    %754 = arith.mulf %753, %687 : vector<2x8xf32>
    %755 = arith.addf %751, %754 : vector<2x8xf32>
    %c83 = arith.constant 83 : index
    %756 = memref.load %arg1[%c83] : memref<192xf32, #tpu.memory_space<smem>>
    %757 = vector.broadcast %756 : f32 to vector<2x8xf32>
    %758 = arith.mulf %757, %693 : vector<2x8xf32>
    %c91 = arith.constant 91 : index
    %759 = memref.load %arg1[%c91] : memref<192xf32, #tpu.memory_space<smem>>
    %760 = vector.broadcast %759 : f32 to vector<2x8xf32>
    %761 = arith.mulf %760, %681 : vector<2x8xf32>
    %762 = arith.addf %758, %761 : vector<2x8xf32>
    %763 = arith.addf %741, %755 : vector<2x8xf32>
    %764 = arith.addf %748, %762 : vector<2x8xf32>
    %cst_157 = arith.constant dense<0.000000e+00> : vector<2x16xf32>
    %765 = tpu.matmul %763, %31, %cst_157 {dimension_numbers = #tpu.dot_dimension_numbers<[1], [0], [0], [1], [0, 0, 1, 1], [], []>} : vector<2x8xf32>, vector<8x16xf32>, vector<2x16xf32> -> vector<2x16xf32>
    %cst_158 = arith.constant dense<0.000000e+00> : vector<2x16xf32>
    %766 = tpu.matmul %764, %39, %cst_158 {dimension_numbers = #tpu.dot_dimension_numbers<[1], [0], [0], [1], [0, 0, 1, 1], [], []>} : vector<2x8xf32>, vector<8x16xf32>, vector<2x16xf32> -> vector<2x16xf32>
    %767 = arith.addf %765, %766 : vector<2x16xf32>
    %c97 = arith.constant 97 : index
    %768 = memref.load %arg1[%c97] : memref<192xf32, #tpu.memory_space<smem>>
    %769 = vector.broadcast %768 : f32 to vector<2x16xf32>
    %770 = arith.addf %767, %769 : vector<2x16xf32>
    %cst_159 = arith.constant 0.000000e+00 : f32
    %771 = vector.broadcast %cst_159 : f32 to vector<2x16xf32>
    %772 = arith.cmpf oge, %770, %771 : vector<2x16xf32>
    %cst_160 = arith.constant 1.000000e-01 : f32
    %773 = vector.broadcast %cst_160 : f32 to vector<2x16xf32>
    %774 = arith.mulf %773, %770 : vector<2x16xf32>
    %775 = arith.select %772, %770, %774 : vector<2x16xi1>, vector<2x16xf32>
    %cst_161 = arith.constant 0.000000e+00 : f32
    %776 = vector.broadcast %cst_161 : f32 to vector<2x1xf32>
    %777 = vector.extract_strided_slice %734 {offsets = [0, 0], sizes = [2, 15], strides = [1, 1]} : vector<2x16xf32> to vector<2x15xf32>
    %778 = tpu.concatenate %776, %777 in 1 : vector<2x1xf32>, vector<2x15xf32> -> vector<2x16xf32>
    %cst_162 = arith.constant 0.000000e+00 : f32
    %779 = vector.broadcast %cst_162 : f32 to vector<2x1xf32>
    %780 = vector.extract_strided_slice %775 {offsets = [0, 0], sizes = [2, 15], strides = [1, 1]} : vector<2x16xf32> to vector<2x15xf32>
    %781 = tpu.concatenate %779, %780 in 1 : vector<2x1xf32>, vector<2x15xf32> -> vector<2x16xf32>
    %cst_163 = arith.constant 0.000000e+00 : f32
    %782 = vector.broadcast %cst_163 : f32 to vector<2x1xf32>
    %783 = vector.extract_strided_slice %408 {offsets = [0, 0], sizes = [2, 15], strides = [1, 1]} : vector<2x16xf32> to vector<2x15xf32>
    %784 = tpu.concatenate %782, %783 in 1 : vector<2x1xf32>, vector<2x15xf32> -> vector<2x16xf32>
    %cst_164 = arith.constant 0.000000e+00 : f32
    %785 = vector.broadcast %cst_164 : f32 to vector<2x1xf32>
    %786 = vector.extract_strided_slice %439 {offsets = [0, 0], sizes = [2, 15], strides = [1, 1]} : vector<2x16xf32> to vector<2x15xf32>
    %787 = tpu.concatenate %785, %786 in 1 : vector<2x1xf32>, vector<2x15xf32> -> vector<2x16xf32>
    %cst_165 = arith.constant 0.000000e+00 : f32
    %788 = vector.broadcast %cst_165 : f32 to vector<2x1xf32>
    %789 = vector.extract_strided_slice %734 {offsets = [0, 1], sizes = [2, 15], strides = [1, 1]} : vector<2x16xf32> to vector<2x15xf32>
    %790 = tpu.concatenate %789, %788 in 1 : vector<2x15xf32>, vector<2x1xf32> -> vector<2x16xf32>
    %cst_166 = arith.constant 0.000000e+00 : f32
    %791 = vector.broadcast %cst_166 : f32 to vector<2x1xf32>
    %792 = vector.extract_strided_slice %775 {offsets = [0, 1], sizes = [2, 15], strides = [1, 1]} : vector<2x16xf32> to vector<2x15xf32>
    %793 = tpu.concatenate %792, %791 in 1 : vector<2x15xf32>, vector<2x1xf32> -> vector<2x16xf32>
    %cst_167 = arith.constant 0.000000e+00 : f32
    %794 = vector.broadcast %cst_167 : f32 to vector<2x1xf32>
    %795 = vector.extract_strided_slice %408 {offsets = [0, 1], sizes = [2, 15], strides = [1, 1]} : vector<2x16xf32> to vector<2x15xf32>
    %796 = tpu.concatenate %795, %794 in 1 : vector<2x15xf32>, vector<2x1xf32> -> vector<2x16xf32>
    %cst_168 = arith.constant 0.000000e+00 : f32
    %797 = vector.broadcast %cst_168 : f32 to vector<2x1xf32>
    %798 = vector.extract_strided_slice %439 {offsets = [0, 1], sizes = [2, 15], strides = [1, 1]} : vector<2x16xf32> to vector<2x15xf32>
    %799 = tpu.concatenate %798, %797 in 1 : vector<2x15xf32>, vector<2x1xf32> -> vector<2x16xf32>
    %c106 = arith.constant 106 : index
    %800 = memref.load %arg1[%c106] : memref<192xf32, #tpu.memory_space<smem>>
    %801 = vector.broadcast %800 : f32 to vector<2x16xf32>
    %802 = arith.mulf %801, %734 : vector<2x16xf32>
    %c122 = arith.constant 122 : index
    %803 = memref.load %arg1[%c122] : memref<192xf32, #tpu.memory_space<smem>>
    %804 = vector.broadcast %803 : f32 to vector<2x16xf32>
    %805 = arith.mulf %804, %778 : vector<2x16xf32>
    %806 = arith.addf %802, %805 : vector<2x16xf32>
    %c98 = arith.constant 98 : index
    %807 = memref.load %arg1[%c98] : memref<192xf32, #tpu.memory_space<smem>>
    %808 = vector.broadcast %807 : f32 to vector<2x16xf32>
    %809 = arith.mulf %808, %790 : vector<2x16xf32>
    %c114 = arith.constant 114 : index
    %810 = memref.load %arg1[%c114] : memref<192xf32, #tpu.memory_space<smem>>
    %811 = vector.broadcast %810 : f32 to vector<2x16xf32>
    %812 = arith.mulf %811, %734 : vector<2x16xf32>
    %813 = arith.addf %809, %812 : vector<2x16xf32>
    %c108 = arith.constant 108 : index
    %814 = memref.load %arg1[%c108] : memref<192xf32, #tpu.memory_space<smem>>
    %815 = vector.broadcast %814 : f32 to vector<2x16xf32>
    %816 = arith.mulf %815, %775 : vector<2x16xf32>
    %c124 = arith.constant 124 : index
    %817 = memref.load %arg1[%c124] : memref<192xf32, #tpu.memory_space<smem>>
    %818 = vector.broadcast %817 : f32 to vector<2x16xf32>
    %819 = arith.mulf %818, %781 : vector<2x16xf32>
    %820 = arith.addf %816, %819 : vector<2x16xf32>
    %c100 = arith.constant 100 : index
    %821 = memref.load %arg1[%c100] : memref<192xf32, #tpu.memory_space<smem>>
    %822 = vector.broadcast %821 : f32 to vector<2x16xf32>
    %823 = arith.mulf %822, %793 : vector<2x16xf32>
    %c116 = arith.constant 116 : index
    %824 = memref.load %arg1[%c116] : memref<192xf32, #tpu.memory_space<smem>>
    %825 = vector.broadcast %824 : f32 to vector<2x16xf32>
    %826 = arith.mulf %825, %775 : vector<2x16xf32>
    %827 = arith.addf %823, %826 : vector<2x16xf32>
    %828 = arith.addf %806, %820 : vector<2x16xf32>
    %829 = arith.addf %813, %827 : vector<2x16xf32>
    %c110 = arith.constant 110 : index
    %830 = memref.load %arg1[%c110] : memref<192xf32, #tpu.memory_space<smem>>
    %831 = vector.broadcast %830 : f32 to vector<2x16xf32>
    %832 = arith.mulf %831, %408 : vector<2x16xf32>
    %c126 = arith.constant 126 : index
    %833 = memref.load %arg1[%c126] : memref<192xf32, #tpu.memory_space<smem>>
    %834 = vector.broadcast %833 : f32 to vector<2x16xf32>
    %835 = arith.mulf %834, %784 : vector<2x16xf32>
    %836 = arith.addf %832, %835 : vector<2x16xf32>
    %c102 = arith.constant 102 : index
    %837 = memref.load %arg1[%c102] : memref<192xf32, #tpu.memory_space<smem>>
    %838 = vector.broadcast %837 : f32 to vector<2x16xf32>
    %839 = arith.mulf %838, %796 : vector<2x16xf32>
    %c118 = arith.constant 118 : index
    %840 = memref.load %arg1[%c118] : memref<192xf32, #tpu.memory_space<smem>>
    %841 = vector.broadcast %840 : f32 to vector<2x16xf32>
    %842 = arith.mulf %841, %408 : vector<2x16xf32>
    %843 = arith.addf %839, %842 : vector<2x16xf32>
    %844 = arith.addf %828, %836 : vector<2x16xf32>
    %845 = arith.addf %829, %843 : vector<2x16xf32>
    %c112 = arith.constant 112 : index
    %846 = memref.load %arg1[%c112] : memref<192xf32, #tpu.memory_space<smem>>
    %847 = vector.broadcast %846 : f32 to vector<2x16xf32>
    %848 = arith.mulf %847, %439 : vector<2x16xf32>
    %c128 = arith.constant 128 : index
    %849 = memref.load %arg1[%c128] : memref<192xf32, #tpu.memory_space<smem>>
    %850 = vector.broadcast %849 : f32 to vector<2x16xf32>
    %851 = arith.mulf %850, %787 : vector<2x16xf32>
    %852 = arith.addf %848, %851 : vector<2x16xf32>
    %c104 = arith.constant 104 : index
    %853 = memref.load %arg1[%c104] : memref<192xf32, #tpu.memory_space<smem>>
    %854 = vector.broadcast %853 : f32 to vector<2x16xf32>
    %855 = arith.mulf %854, %799 : vector<2x16xf32>
    %c120 = arith.constant 120 : index
    %856 = memref.load %arg1[%c120] : memref<192xf32, #tpu.memory_space<smem>>
    %857 = vector.broadcast %856 : f32 to vector<2x16xf32>
    %858 = arith.mulf %857, %439 : vector<2x16xf32>
    %859 = arith.addf %855, %858 : vector<2x16xf32>
    %860 = arith.addf %844, %852 : vector<2x16xf32>
    %861 = arith.addf %845, %859 : vector<2x16xf32>
    %cst_169 = arith.constant dense<0.000000e+00> : vector<2x32xf32>
    %862 = tpu.matmul %860, %47, %cst_169 {dimension_numbers = #tpu.dot_dimension_numbers<[1], [0], [0], [1], [0, 0, 1, 1], [], []>} : vector<2x16xf32>, vector<16x32xf32>, vector<2x32xf32> -> vector<2x32xf32>
    %cst_170 = arith.constant dense<0.000000e+00> : vector<2x32xf32>
    %863 = tpu.matmul %861, %55, %cst_170 {dimension_numbers = #tpu.dot_dimension_numbers<[1], [0], [0], [1], [0, 0, 1, 1], [], []>} : vector<2x16xf32>, vector<16x32xf32>, vector<2x32xf32> -> vector<2x32xf32>
    %864 = arith.addf %862, %863 : vector<2x32xf32>
    %c130 = arith.constant 130 : index
    %865 = memref.load %arg1[%c130] : memref<192xf32, #tpu.memory_space<smem>>
    %866 = vector.broadcast %865 : f32 to vector<2x32xf32>
    %867 = arith.addf %864, %866 : vector<2x32xf32>
    %cst_171 = arith.constant 0.000000e+00 : f32
    %868 = vector.broadcast %cst_171 : f32 to vector<2x32xf32>
    %869 = arith.cmpf oge, %867, %868 : vector<2x32xf32>
    %cst_172 = arith.constant 1.000000e-01 : f32
    %870 = vector.broadcast %cst_172 : f32 to vector<2x32xf32>
    %871 = arith.mulf %870, %867 : vector<2x32xf32>
    %872 = arith.select %869, %867, %871 : vector<2x32xi1>, vector<2x32xf32>
    %c107 = arith.constant 107 : index
    %873 = memref.load %arg1[%c107] : memref<192xf32, #tpu.memory_space<smem>>
    %874 = vector.broadcast %873 : f32 to vector<2x16xf32>
    %875 = arith.mulf %874, %734 : vector<2x16xf32>
    %c123 = arith.constant 123 : index
    %876 = memref.load %arg1[%c123] : memref<192xf32, #tpu.memory_space<smem>>
    %877 = vector.broadcast %876 : f32 to vector<2x16xf32>
    %878 = arith.mulf %877, %778 : vector<2x16xf32>
    %879 = arith.addf %875, %878 : vector<2x16xf32>
    %c99 = arith.constant 99 : index
    %880 = memref.load %arg1[%c99] : memref<192xf32, #tpu.memory_space<smem>>
    %881 = vector.broadcast %880 : f32 to vector<2x16xf32>
    %882 = arith.mulf %881, %790 : vector<2x16xf32>
    %c115 = arith.constant 115 : index
    %883 = memref.load %arg1[%c115] : memref<192xf32, #tpu.memory_space<smem>>
    %884 = vector.broadcast %883 : f32 to vector<2x16xf32>
    %885 = arith.mulf %884, %734 : vector<2x16xf32>
    %886 = arith.addf %882, %885 : vector<2x16xf32>
    %c109 = arith.constant 109 : index
    %887 = memref.load %arg1[%c109] : memref<192xf32, #tpu.memory_space<smem>>
    %888 = vector.broadcast %887 : f32 to vector<2x16xf32>
    %889 = arith.mulf %888, %775 : vector<2x16xf32>
    %c125 = arith.constant 125 : index
    %890 = memref.load %arg1[%c125] : memref<192xf32, #tpu.memory_space<smem>>
    %891 = vector.broadcast %890 : f32 to vector<2x16xf32>
    %892 = arith.mulf %891, %781 : vector<2x16xf32>
    %893 = arith.addf %889, %892 : vector<2x16xf32>
    %c101 = arith.constant 101 : index
    %894 = memref.load %arg1[%c101] : memref<192xf32, #tpu.memory_space<smem>>
    %895 = vector.broadcast %894 : f32 to vector<2x16xf32>
    %896 = arith.mulf %895, %793 : vector<2x16xf32>
    %c117 = arith.constant 117 : index
    %897 = memref.load %arg1[%c117] : memref<192xf32, #tpu.memory_space<smem>>
    %898 = vector.broadcast %897 : f32 to vector<2x16xf32>
    %899 = arith.mulf %898, %775 : vector<2x16xf32>
    %900 = arith.addf %896, %899 : vector<2x16xf32>
    %901 = arith.addf %879, %893 : vector<2x16xf32>
    %902 = arith.addf %886, %900 : vector<2x16xf32>
    %c111 = arith.constant 111 : index
    %903 = memref.load %arg1[%c111] : memref<192xf32, #tpu.memory_space<smem>>
    %904 = vector.broadcast %903 : f32 to vector<2x16xf32>
    %905 = arith.mulf %904, %408 : vector<2x16xf32>
    %c127 = arith.constant 127 : index
    %906 = memref.load %arg1[%c127] : memref<192xf32, #tpu.memory_space<smem>>
    %907 = vector.broadcast %906 : f32 to vector<2x16xf32>
    %908 = arith.mulf %907, %784 : vector<2x16xf32>
    %909 = arith.addf %905, %908 : vector<2x16xf32>
    %c103 = arith.constant 103 : index
    %910 = memref.load %arg1[%c103] : memref<192xf32, #tpu.memory_space<smem>>
    %911 = vector.broadcast %910 : f32 to vector<2x16xf32>
    %912 = arith.mulf %911, %796 : vector<2x16xf32>
    %c119 = arith.constant 119 : index
    %913 = memref.load %arg1[%c119] : memref<192xf32, #tpu.memory_space<smem>>
    %914 = vector.broadcast %913 : f32 to vector<2x16xf32>
    %915 = arith.mulf %914, %408 : vector<2x16xf32>
    %916 = arith.addf %912, %915 : vector<2x16xf32>
    %917 = arith.addf %901, %909 : vector<2x16xf32>
    %918 = arith.addf %902, %916 : vector<2x16xf32>
    %c113 = arith.constant 113 : index
    %919 = memref.load %arg1[%c113] : memref<192xf32, #tpu.memory_space<smem>>
    %920 = vector.broadcast %919 : f32 to vector<2x16xf32>
    %921 = arith.mulf %920, %439 : vector<2x16xf32>
    %c129 = arith.constant 129 : index
    %922 = memref.load %arg1[%c129] : memref<192xf32, #tpu.memory_space<smem>>
    %923 = vector.broadcast %922 : f32 to vector<2x16xf32>
    %924 = arith.mulf %923, %787 : vector<2x16xf32>
    %925 = arith.addf %921, %924 : vector<2x16xf32>
    %c105 = arith.constant 105 : index
    %926 = memref.load %arg1[%c105] : memref<192xf32, #tpu.memory_space<smem>>
    %927 = vector.broadcast %926 : f32 to vector<2x16xf32>
    %928 = arith.mulf %927, %799 : vector<2x16xf32>
    %c121 = arith.constant 121 : index
    %929 = memref.load %arg1[%c121] : memref<192xf32, #tpu.memory_space<smem>>
    %930 = vector.broadcast %929 : f32 to vector<2x16xf32>
    %931 = arith.mulf %930, %439 : vector<2x16xf32>
    %932 = arith.addf %928, %931 : vector<2x16xf32>
    %933 = arith.addf %917, %925 : vector<2x16xf32>
    %934 = arith.addf %918, %932 : vector<2x16xf32>
    %cst_173 = arith.constant dense<0.000000e+00> : vector<2x32xf32>
    %935 = tpu.matmul %933, %47, %cst_173 {dimension_numbers = #tpu.dot_dimension_numbers<[1], [0], [0], [1], [0, 0, 1, 1], [], []>} : vector<2x16xf32>, vector<16x32xf32>, vector<2x32xf32> -> vector<2x32xf32>
    %cst_174 = arith.constant dense<0.000000e+00> : vector<2x32xf32>
    %936 = tpu.matmul %934, %55, %cst_174 {dimension_numbers = #tpu.dot_dimension_numbers<[1], [0], [0], [1], [0, 0, 1, 1], [], []>} : vector<2x16xf32>, vector<16x32xf32>, vector<2x32xf32> -> vector<2x32xf32>
    %937 = arith.addf %935, %936 : vector<2x32xf32>
    %c131 = arith.constant 131 : index
    %938 = memref.load %arg1[%c131] : memref<192xf32, #tpu.memory_space<smem>>
    %939 = vector.broadcast %938 : f32 to vector<2x32xf32>
    %940 = arith.addf %937, %939 : vector<2x32xf32>
    %cst_175 = arith.constant 0.000000e+00 : f32
    %941 = vector.broadcast %cst_175 : f32 to vector<2x32xf32>
    %942 = arith.cmpf oge, %940, %941 : vector<2x32xf32>
    %cst_176 = arith.constant 1.000000e-01 : f32
    %943 = vector.broadcast %cst_176 : f32 to vector<2x32xf32>
    %944 = arith.mulf %943, %940 : vector<2x32xf32>
    %945 = arith.select %942, %940, %944 : vector<2x32xi1>, vector<2x32xf32>
    %cst_177 = arith.constant 0.000000e+00 : f32
    %946 = vector.broadcast %cst_177 : f32 to vector<2x1xf32>
    %947 = vector.extract_strided_slice %872 {offsets = [0, 0], sizes = [2, 31], strides = [1, 1]} : vector<2x32xf32> to vector<2x31xf32>
    %948 = tpu.concatenate %946, %947 in 1 : vector<2x1xf32>, vector<2x31xf32> -> vector<2x32xf32>
    %cst_178 = arith.constant 0.000000e+00 : f32
    %949 = vector.broadcast %cst_178 : f32 to vector<2x1xf32>
    %950 = vector.extract_strided_slice %945 {offsets = [0, 0], sizes = [2, 31], strides = [1, 1]} : vector<2x32xf32> to vector<2x31xf32>
    %951 = tpu.concatenate %949, %950 in 1 : vector<2x1xf32>, vector<2x31xf32> -> vector<2x32xf32>
    %cst_179 = arith.constant 0.000000e+00 : f32
    %952 = vector.broadcast %cst_179 : f32 to vector<2x1xf32>
    %953 = vector.extract_strided_slice %166 {offsets = [0, 0], sizes = [2, 31], strides = [1, 1]} : vector<2x32xf32> to vector<2x31xf32>
    %954 = tpu.concatenate %952, %953 in 1 : vector<2x1xf32>, vector<2x31xf32> -> vector<2x32xf32>
    %cst_180 = arith.constant 0.000000e+00 : f32
    %955 = vector.broadcast %cst_180 : f32 to vector<2x1xf32>
    %956 = vector.extract_strided_slice %197 {offsets = [0, 0], sizes = [2, 31], strides = [1, 1]} : vector<2x32xf32> to vector<2x31xf32>
    %957 = tpu.concatenate %955, %956 in 1 : vector<2x1xf32>, vector<2x31xf32> -> vector<2x32xf32>
    %cst_181 = arith.constant 0.000000e+00 : f32
    %958 = vector.broadcast %cst_181 : f32 to vector<2x1xf32>
    %959 = vector.extract_strided_slice %872 {offsets = [0, 1], sizes = [2, 31], strides = [1, 1]} : vector<2x32xf32> to vector<2x31xf32>
    %960 = tpu.concatenate %959, %958 in 1 : vector<2x31xf32>, vector<2x1xf32> -> vector<2x32xf32>
    %cst_182 = arith.constant 0.000000e+00 : f32
    %961 = vector.broadcast %cst_182 : f32 to vector<2x1xf32>
    %962 = vector.extract_strided_slice %945 {offsets = [0, 1], sizes = [2, 31], strides = [1, 1]} : vector<2x32xf32> to vector<2x31xf32>
    %963 = tpu.concatenate %962, %961 in 1 : vector<2x31xf32>, vector<2x1xf32> -> vector<2x32xf32>
    %cst_183 = arith.constant 0.000000e+00 : f32
    %964 = vector.broadcast %cst_183 : f32 to vector<2x1xf32>
    %965 = vector.extract_strided_slice %166 {offsets = [0, 1], sizes = [2, 31], strides = [1, 1]} : vector<2x32xf32> to vector<2x31xf32>
    %966 = tpu.concatenate %965, %964 in 1 : vector<2x31xf32>, vector<2x1xf32> -> vector<2x32xf32>
    %cst_184 = arith.constant 0.000000e+00 : f32
    %967 = vector.broadcast %cst_184 : f32 to vector<2x1xf32>
    %968 = vector.extract_strided_slice %197 {offsets = [0, 1], sizes = [2, 31], strides = [1, 1]} : vector<2x32xf32> to vector<2x31xf32>
    %969 = tpu.concatenate %968, %967 in 1 : vector<2x31xf32>, vector<2x1xf32> -> vector<2x32xf32>
    %c140 = arith.constant 140 : index
    %970 = memref.load %arg1[%c140] : memref<192xf32, #tpu.memory_space<smem>>
    %971 = vector.broadcast %970 : f32 to vector<2x32xf32>
    %972 = arith.mulf %971, %872 : vector<2x32xf32>
    %c156 = arith.constant 156 : index
    %973 = memref.load %arg1[%c156] : memref<192xf32, #tpu.memory_space<smem>>
    %974 = vector.broadcast %973 : f32 to vector<2x32xf32>
    %975 = arith.mulf %974, %948 : vector<2x32xf32>
    %976 = arith.addf %972, %975 : vector<2x32xf32>
    %c132 = arith.constant 132 : index
    %977 = memref.load %arg1[%c132] : memref<192xf32, #tpu.memory_space<smem>>
    %978 = vector.broadcast %977 : f32 to vector<2x32xf32>
    %979 = arith.mulf %978, %960 : vector<2x32xf32>
    %c148 = arith.constant 148 : index
    %980 = memref.load %arg1[%c148] : memref<192xf32, #tpu.memory_space<smem>>
    %981 = vector.broadcast %980 : f32 to vector<2x32xf32>
    %982 = arith.mulf %981, %872 : vector<2x32xf32>
    %983 = arith.addf %979, %982 : vector<2x32xf32>
    %c142 = arith.constant 142 : index
    %984 = memref.load %arg1[%c142] : memref<192xf32, #tpu.memory_space<smem>>
    %985 = vector.broadcast %984 : f32 to vector<2x32xf32>
    %986 = arith.mulf %985, %945 : vector<2x32xf32>
    %c158 = arith.constant 158 : index
    %987 = memref.load %arg1[%c158] : memref<192xf32, #tpu.memory_space<smem>>
    %988 = vector.broadcast %987 : f32 to vector<2x32xf32>
    %989 = arith.mulf %988, %951 : vector<2x32xf32>
    %990 = arith.addf %986, %989 : vector<2x32xf32>
    %c134 = arith.constant 134 : index
    %991 = memref.load %arg1[%c134] : memref<192xf32, #tpu.memory_space<smem>>
    %992 = vector.broadcast %991 : f32 to vector<2x32xf32>
    %993 = arith.mulf %992, %963 : vector<2x32xf32>
    %c150 = arith.constant 150 : index
    %994 = memref.load %arg1[%c150] : memref<192xf32, #tpu.memory_space<smem>>
    %995 = vector.broadcast %994 : f32 to vector<2x32xf32>
    %996 = arith.mulf %995, %945 : vector<2x32xf32>
    %997 = arith.addf %993, %996 : vector<2x32xf32>
    %998 = arith.addf %976, %990 : vector<2x32xf32>
    %999 = arith.addf %983, %997 : vector<2x32xf32>
    %c144 = arith.constant 144 : index
    %1000 = memref.load %arg1[%c144] : memref<192xf32, #tpu.memory_space<smem>>
    %1001 = vector.broadcast %1000 : f32 to vector<2x32xf32>
    %1002 = arith.mulf %1001, %166 : vector<2x32xf32>
    %c160 = arith.constant 160 : index
    %1003 = memref.load %arg1[%c160] : memref<192xf32, #tpu.memory_space<smem>>
    %1004 = vector.broadcast %1003 : f32 to vector<2x32xf32>
    %1005 = arith.mulf %1004, %954 : vector<2x32xf32>
    %1006 = arith.addf %1002, %1005 : vector<2x32xf32>
    %c136 = arith.constant 136 : index
    %1007 = memref.load %arg1[%c136] : memref<192xf32, #tpu.memory_space<smem>>
    %1008 = vector.broadcast %1007 : f32 to vector<2x32xf32>
    %1009 = arith.mulf %1008, %966 : vector<2x32xf32>
    %c152 = arith.constant 152 : index
    %1010 = memref.load %arg1[%c152] : memref<192xf32, #tpu.memory_space<smem>>
    %1011 = vector.broadcast %1010 : f32 to vector<2x32xf32>
    %1012 = arith.mulf %1011, %166 : vector<2x32xf32>
    %1013 = arith.addf %1009, %1012 : vector<2x32xf32>
    %1014 = arith.addf %998, %1006 : vector<2x32xf32>
    %1015 = arith.addf %999, %1013 : vector<2x32xf32>
    %c146 = arith.constant 146 : index
    %1016 = memref.load %arg1[%c146] : memref<192xf32, #tpu.memory_space<smem>>
    %1017 = vector.broadcast %1016 : f32 to vector<2x32xf32>
    %1018 = arith.mulf %1017, %197 : vector<2x32xf32>
    %c162 = arith.constant 162 : index
    %1019 = memref.load %arg1[%c162] : memref<192xf32, #tpu.memory_space<smem>>
    %1020 = vector.broadcast %1019 : f32 to vector<2x32xf32>
    %1021 = arith.mulf %1020, %957 : vector<2x32xf32>
    %1022 = arith.addf %1018, %1021 : vector<2x32xf32>
    %c138 = arith.constant 138 : index
    %1023 = memref.load %arg1[%c138] : memref<192xf32, #tpu.memory_space<smem>>
    %1024 = vector.broadcast %1023 : f32 to vector<2x32xf32>
    %1025 = arith.mulf %1024, %969 : vector<2x32xf32>
    %c154 = arith.constant 154 : index
    %1026 = memref.load %arg1[%c154] : memref<192xf32, #tpu.memory_space<smem>>
    %1027 = vector.broadcast %1026 : f32 to vector<2x32xf32>
    %1028 = arith.mulf %1027, %197 : vector<2x32xf32>
    %1029 = arith.addf %1025, %1028 : vector<2x32xf32>
    %1030 = arith.addf %1014, %1022 : vector<2x32xf32>
    %1031 = arith.addf %1015, %1029 : vector<2x32xf32>
    %cst_185 = arith.constant dense<0.000000e+00> : vector<2x64xf32>
    %1032 = tpu.matmul %1030, %63, %cst_185 {dimension_numbers = #tpu.dot_dimension_numbers<[1], [0], [0], [1], [0, 0, 1, 1], [], []>} : vector<2x32xf32>, vector<32x64xf32>, vector<2x64xf32> -> vector<2x64xf32>
    %cst_186 = arith.constant dense<0.000000e+00> : vector<2x64xf32>
    %1033 = tpu.matmul %1031, %71, %cst_186 {dimension_numbers = #tpu.dot_dimension_numbers<[1], [0], [0], [1], [0, 0, 1, 1], [], []>} : vector<2x32xf32>, vector<32x64xf32>, vector<2x64xf32> -> vector<2x64xf32>
    %1034 = arith.addf %1032, %1033 : vector<2x64xf32>
    %c164 = arith.constant 164 : index
    %1035 = memref.load %arg1[%c164] : memref<192xf32, #tpu.memory_space<smem>>
    %1036 = vector.broadcast %1035 : f32 to vector<2x64xf32>
    %1037 = arith.addf %1034, %1036 : vector<2x64xf32>
    %cst_187 = arith.constant 0.000000e+00 : f32
    %1038 = vector.broadcast %cst_187 : f32 to vector<2x64xf32>
    %1039 = arith.cmpf oge, %1037, %1038 : vector<2x64xf32>
    %cst_188 = arith.constant 1.000000e-01 : f32
    %1040 = vector.broadcast %cst_188 : f32 to vector<2x64xf32>
    %1041 = arith.mulf %1040, %1037 : vector<2x64xf32>
    %1042 = arith.select %1039, %1037, %1041 : vector<2x64xi1>, vector<2x64xf32>
    %c141 = arith.constant 141 : index
    %1043 = memref.load %arg1[%c141] : memref<192xf32, #tpu.memory_space<smem>>
    %1044 = vector.broadcast %1043 : f32 to vector<2x32xf32>
    %1045 = arith.mulf %1044, %872 : vector<2x32xf32>
    %c157 = arith.constant 157 : index
    %1046 = memref.load %arg1[%c157] : memref<192xf32, #tpu.memory_space<smem>>
    %1047 = vector.broadcast %1046 : f32 to vector<2x32xf32>
    %1048 = arith.mulf %1047, %948 : vector<2x32xf32>
    %1049 = arith.addf %1045, %1048 : vector<2x32xf32>
    %c133 = arith.constant 133 : index
    %1050 = memref.load %arg1[%c133] : memref<192xf32, #tpu.memory_space<smem>>
    %1051 = vector.broadcast %1050 : f32 to vector<2x32xf32>
    %1052 = arith.mulf %1051, %960 : vector<2x32xf32>
    %c149 = arith.constant 149 : index
    %1053 = memref.load %arg1[%c149] : memref<192xf32, #tpu.memory_space<smem>>
    %1054 = vector.broadcast %1053 : f32 to vector<2x32xf32>
    %1055 = arith.mulf %1054, %872 : vector<2x32xf32>
    %1056 = arith.addf %1052, %1055 : vector<2x32xf32>
    %c143 = arith.constant 143 : index
    %1057 = memref.load %arg1[%c143] : memref<192xf32, #tpu.memory_space<smem>>
    %1058 = vector.broadcast %1057 : f32 to vector<2x32xf32>
    %1059 = arith.mulf %1058, %945 : vector<2x32xf32>
    %c159 = arith.constant 159 : index
    %1060 = memref.load %arg1[%c159] : memref<192xf32, #tpu.memory_space<smem>>
    %1061 = vector.broadcast %1060 : f32 to vector<2x32xf32>
    %1062 = arith.mulf %1061, %951 : vector<2x32xf32>
    %1063 = arith.addf %1059, %1062 : vector<2x32xf32>
    %c135 = arith.constant 135 : index
    %1064 = memref.load %arg1[%c135] : memref<192xf32, #tpu.memory_space<smem>>
    %1065 = vector.broadcast %1064 : f32 to vector<2x32xf32>
    %1066 = arith.mulf %1065, %963 : vector<2x32xf32>
    %c151 = arith.constant 151 : index
    %1067 = memref.load %arg1[%c151] : memref<192xf32, #tpu.memory_space<smem>>
    %1068 = vector.broadcast %1067 : f32 to vector<2x32xf32>
    %1069 = arith.mulf %1068, %945 : vector<2x32xf32>
    %1070 = arith.addf %1066, %1069 : vector<2x32xf32>
    %1071 = arith.addf %1049, %1063 : vector<2x32xf32>
    %1072 = arith.addf %1056, %1070 : vector<2x32xf32>
    %c145 = arith.constant 145 : index
    %1073 = memref.load %arg1[%c145] : memref<192xf32, #tpu.memory_space<smem>>
    %1074 = vector.broadcast %1073 : f32 to vector<2x32xf32>
    %1075 = arith.mulf %1074, %166 : vector<2x32xf32>
    %c161 = arith.constant 161 : index
    %1076 = memref.load %arg1[%c161] : memref<192xf32, #tpu.memory_space<smem>>
    %1077 = vector.broadcast %1076 : f32 to vector<2x32xf32>
    %1078 = arith.mulf %1077, %954 : vector<2x32xf32>
    %1079 = arith.addf %1075, %1078 : vector<2x32xf32>
    %c137 = arith.constant 137 : index
    %1080 = memref.load %arg1[%c137] : memref<192xf32, #tpu.memory_space<smem>>
    %1081 = vector.broadcast %1080 : f32 to vector<2x32xf32>
    %1082 = arith.mulf %1081, %966 : vector<2x32xf32>
    %c153 = arith.constant 153 : index
    %1083 = memref.load %arg1[%c153] : memref<192xf32, #tpu.memory_space<smem>>
    %1084 = vector.broadcast %1083 : f32 to vector<2x32xf32>
    %1085 = arith.mulf %1084, %166 : vector<2x32xf32>
    %1086 = arith.addf %1082, %1085 : vector<2x32xf32>
    %1087 = arith.addf %1071, %1079 : vector<2x32xf32>
    %1088 = arith.addf %1072, %1086 : vector<2x32xf32>
    %c147 = arith.constant 147 : index
    %1089 = memref.load %arg1[%c147] : memref<192xf32, #tpu.memory_space<smem>>
    %1090 = vector.broadcast %1089 : f32 to vector<2x32xf32>
    %1091 = arith.mulf %1090, %197 : vector<2x32xf32>
    %c163 = arith.constant 163 : index
    %1092 = memref.load %arg1[%c163] : memref<192xf32, #tpu.memory_space<smem>>
    %1093 = vector.broadcast %1092 : f32 to vector<2x32xf32>
    %1094 = arith.mulf %1093, %957 : vector<2x32xf32>
    %1095 = arith.addf %1091, %1094 : vector<2x32xf32>
    %c139 = arith.constant 139 : index
    %1096 = memref.load %arg1[%c139] : memref<192xf32, #tpu.memory_space<smem>>
    %1097 = vector.broadcast %1096 : f32 to vector<2x32xf32>
    %1098 = arith.mulf %1097, %969 : vector<2x32xf32>
    %c155 = arith.constant 155 : index
    %1099 = memref.load %arg1[%c155] : memref<192xf32, #tpu.memory_space<smem>>
    %1100 = vector.broadcast %1099 : f32 to vector<2x32xf32>
    %1101 = arith.mulf %1100, %197 : vector<2x32xf32>
    %1102 = arith.addf %1098, %1101 : vector<2x32xf32>
    %1103 = arith.addf %1087, %1095 : vector<2x32xf32>
    %1104 = arith.addf %1088, %1102 : vector<2x32xf32>
    %cst_189 = arith.constant dense<0.000000e+00> : vector<2x64xf32>
    %1105 = tpu.matmul %1103, %63, %cst_189 {dimension_numbers = #tpu.dot_dimension_numbers<[1], [0], [0], [1], [0, 0, 1, 1], [], []>} : vector<2x32xf32>, vector<32x64xf32>, vector<2x64xf32> -> vector<2x64xf32>
    %cst_190 = arith.constant dense<0.000000e+00> : vector<2x64xf32>
    %1106 = tpu.matmul %1104, %71, %cst_190 {dimension_numbers = #tpu.dot_dimension_numbers<[1], [0], [0], [1], [0, 0, 1, 1], [], []>} : vector<2x32xf32>, vector<32x64xf32>, vector<2x64xf32> -> vector<2x64xf32>
    %1107 = arith.addf %1105, %1106 : vector<2x64xf32>
    %c165 = arith.constant 165 : index
    %1108 = memref.load %arg1[%c165] : memref<192xf32, #tpu.memory_space<smem>>
    %1109 = vector.broadcast %1108 : f32 to vector<2x64xf32>
    %1110 = arith.addf %1107, %1109 : vector<2x64xf32>
    %cst_191 = arith.constant 0.000000e+00 : f32
    %1111 = vector.broadcast %cst_191 : f32 to vector<2x64xf32>
    %1112 = arith.cmpf oge, %1110, %1111 : vector<2x64xf32>
    %cst_192 = arith.constant 1.000000e-01 : f32
    %1113 = vector.broadcast %cst_192 : f32 to vector<2x64xf32>
    %1114 = arith.mulf %1113, %1110 : vector<2x64xf32>
    %1115 = arith.select %1112, %1110, %1114 : vector<2x64xi1>, vector<2x64xf32>
    %cst_193 = arith.constant 0.000000e+00 : f32
    %1116 = vector.broadcast %cst_193 : f32 to vector<2x1xf32>
    %1117 = vector.extract_strided_slice %1042 {offsets = [0, 0], sizes = [2, 63], strides = [1, 1]} : vector<2x64xf32> to vector<2x63xf32>
    %1118 = tpu.concatenate %1116, %1117 in 1 : vector<2x1xf32>, vector<2x63xf32> -> vector<2x64xf32>
    %cst_194 = arith.constant 0.000000e+00 : f32
    %1119 = vector.broadcast %cst_194 : f32 to vector<2x1xf32>
    %1120 = vector.extract_strided_slice %1042 {offsets = [0, 1], sizes = [2, 63], strides = [1, 1]} : vector<2x64xf32> to vector<2x63xf32>
    %1121 = tpu.concatenate %1120, %1119 in 1 : vector<2x63xf32>, vector<2x1xf32> -> vector<2x64xf32>
    %cst_195 = arith.constant 0.000000e+00 : f32
    %1122 = vector.broadcast %cst_195 : f32 to vector<2x1xf32>
    %1123 = vector.extract_strided_slice %1115 {offsets = [0, 0], sizes = [2, 63], strides = [1, 1]} : vector<2x64xf32> to vector<2x63xf32>
    %1124 = tpu.concatenate %1122, %1123 in 1 : vector<2x1xf32>, vector<2x63xf32> -> vector<2x64xf32>
    %cst_196 = arith.constant 0.000000e+00 : f32
    %1125 = vector.broadcast %cst_196 : f32 to vector<2x1xf32>
    %1126 = vector.extract_strided_slice %1115 {offsets = [0, 1], sizes = [2, 63], strides = [1, 1]} : vector<2x64xf32> to vector<2x63xf32>
    %1127 = tpu.concatenate %1126, %1125 in 1 : vector<2x63xf32>, vector<2x1xf32> -> vector<2x64xf32>
    %cst_197 = arith.constant 0.000000e+00 : f32
    %1128 = vector.broadcast %cst_197 : f32 to vector<2x1xf32>
    %1129 = vector.extract_strided_slice %73 {offsets = [0, 0], sizes = [2, 63], strides = [1, 1]} : vector<2x64xf32> to vector<2x63xf32>
    %1130 = tpu.concatenate %1128, %1129 in 1 : vector<2x1xf32>, vector<2x63xf32> -> vector<2x64xf32>
    %cst_198 = arith.constant 0.000000e+00 : f32
    %1131 = vector.broadcast %cst_198 : f32 to vector<2x1xf32>
    %1132 = vector.extract_strided_slice %73 {offsets = [0, 1], sizes = [2, 63], strides = [1, 1]} : vector<2x64xf32> to vector<2x63xf32>
    %1133 = tpu.concatenate %1132, %1131 in 1 : vector<2x63xf32>, vector<2x1xf32> -> vector<2x64xf32>
    %cst_199 = arith.constant 0.000000e+00 : f32
    %1134 = vector.broadcast %cst_199 : f32 to vector<2x1xf32>
    %1135 = vector.extract_strided_slice %75 {offsets = [0, 0], sizes = [2, 63], strides = [1, 1]} : vector<2x64xf32> to vector<2x63xf32>
    %1136 = tpu.concatenate %1134, %1135 in 1 : vector<2x1xf32>, vector<2x63xf32> -> vector<2x64xf32>
    %cst_200 = arith.constant 0.000000e+00 : f32
    %1137 = vector.broadcast %cst_200 : f32 to vector<2x1xf32>
    %1138 = vector.extract_strided_slice %75 {offsets = [0, 1], sizes = [2, 63], strides = [1, 1]} : vector<2x64xf32> to vector<2x63xf32>
    %1139 = tpu.concatenate %1138, %1137 in 1 : vector<2x63xf32>, vector<2x1xf32> -> vector<2x64xf32>
    %c166 = arith.constant 166 : index
    %1140 = memref.load %arg1[%c166] : memref<192xf32, #tpu.memory_space<smem>>
    %1141 = vector.broadcast %1140 : f32 to vector<2x64xf32>
    %1142 = arith.mulf %1141, %1118 : vector<2x64xf32>
    %c174 = arith.constant 174 : index
    %1143 = memref.load %arg1[%c174] : memref<192xf32, #tpu.memory_space<smem>>
    %1144 = vector.broadcast %1143 : f32 to vector<2x64xf32>
    %1145 = arith.mulf %1144, %1042 : vector<2x64xf32>
    %1146 = arith.addf %1142, %1145 : vector<2x64xf32>
    %c182 = arith.constant 182 : index
    %1147 = memref.load %arg1[%c182] : memref<192xf32, #tpu.memory_space<smem>>
    %1148 = vector.broadcast %1147 : f32 to vector<2x64xf32>
    %1149 = arith.mulf %1148, %1121 : vector<2x64xf32>
    %1150 = arith.addf %1146, %1149 : vector<2x64xf32>
    %c168 = arith.constant 168 : index
    %1151 = memref.load %arg1[%c168] : memref<192xf32, #tpu.memory_space<smem>>
    %1152 = vector.broadcast %1151 : f32 to vector<2x64xf32>
    %1153 = arith.mulf %1152, %1124 : vector<2x64xf32>
    %1154 = arith.addf %1150, %1153 : vector<2x64xf32>
    %c176 = arith.constant 176 : index
    %1155 = memref.load %arg1[%c176] : memref<192xf32, #tpu.memory_space<smem>>
    %1156 = vector.broadcast %1155 : f32 to vector<2x64xf32>
    %1157 = arith.mulf %1156, %1115 : vector<2x64xf32>
    %1158 = arith.addf %1154, %1157 : vector<2x64xf32>
    %c184 = arith.constant 184 : index
    %1159 = memref.load %arg1[%c184] : memref<192xf32, #tpu.memory_space<smem>>
    %1160 = vector.broadcast %1159 : f32 to vector<2x64xf32>
    %1161 = arith.mulf %1160, %1127 : vector<2x64xf32>
    %1162 = arith.addf %1158, %1161 : vector<2x64xf32>
    %c170 = arith.constant 170 : index
    %1163 = memref.load %arg1[%c170] : memref<192xf32, #tpu.memory_space<smem>>
    %1164 = vector.broadcast %1163 : f32 to vector<2x64xf32>
    %1165 = arith.mulf %1164, %1130 : vector<2x64xf32>
    %1166 = arith.addf %1162, %1165 : vector<2x64xf32>
    %c178 = arith.constant 178 : index
    %1167 = memref.load %arg1[%c178] : memref<192xf32, #tpu.memory_space<smem>>
    %1168 = vector.broadcast %1167 : f32 to vector<2x64xf32>
    %1169 = arith.mulf %1168, %73 : vector<2x64xf32>
    %1170 = arith.addf %1166, %1169 : vector<2x64xf32>
    %c186 = arith.constant 186 : index
    %1171 = memref.load %arg1[%c186] : memref<192xf32, #tpu.memory_space<smem>>
    %1172 = vector.broadcast %1171 : f32 to vector<2x64xf32>
    %1173 = arith.mulf %1172, %1133 : vector<2x64xf32>
    %1174 = arith.addf %1170, %1173 : vector<2x64xf32>
    %c172 = arith.constant 172 : index
    %1175 = memref.load %arg1[%c172] : memref<192xf32, #tpu.memory_space<smem>>
    %1176 = vector.broadcast %1175 : f32 to vector<2x64xf32>
    %1177 = arith.mulf %1176, %1136 : vector<2x64xf32>
    %1178 = arith.addf %1174, %1177 : vector<2x64xf32>
    %c180 = arith.constant 180 : index
    %1179 = memref.load %arg1[%c180] : memref<192xf32, #tpu.memory_space<smem>>
    %1180 = vector.broadcast %1179 : f32 to vector<2x64xf32>
    %1181 = arith.mulf %1180, %75 : vector<2x64xf32>
    %1182 = arith.addf %1178, %1181 : vector<2x64xf32>
    %c188 = arith.constant 188 : index
    %1183 = memref.load %arg1[%c188] : memref<192xf32, #tpu.memory_space<smem>>
    %1184 = vector.broadcast %1183 : f32 to vector<2x64xf32>
    %1185 = arith.mulf %1184, %1139 : vector<2x64xf32>
    %1186 = arith.addf %1182, %1185 : vector<2x64xf32>
    %c167 = arith.constant 167 : index
    %1187 = memref.load %arg1[%c167] : memref<192xf32, #tpu.memory_space<smem>>
    %1188 = vector.broadcast %1187 : f32 to vector<2x64xf32>
    %1189 = arith.mulf %1188, %1118 : vector<2x64xf32>
    %c175 = arith.constant 175 : index
    %1190 = memref.load %arg1[%c175] : memref<192xf32, #tpu.memory_space<smem>>
    %1191 = vector.broadcast %1190 : f32 to vector<2x64xf32>
    %1192 = arith.mulf %1191, %1042 : vector<2x64xf32>
    %1193 = arith.addf %1189, %1192 : vector<2x64xf32>
    %c183 = arith.constant 183 : index
    %1194 = memref.load %arg1[%c183] : memref<192xf32, #tpu.memory_space<smem>>
    %1195 = vector.broadcast %1194 : f32 to vector<2x64xf32>
    %1196 = arith.mulf %1195, %1121 : vector<2x64xf32>
    %1197 = arith.addf %1193, %1196 : vector<2x64xf32>
    %c169 = arith.constant 169 : index
    %1198 = memref.load %arg1[%c169] : memref<192xf32, #tpu.memory_space<smem>>
    %1199 = vector.broadcast %1198 : f32 to vector<2x64xf32>
    %1200 = arith.mulf %1199, %1124 : vector<2x64xf32>
    %1201 = arith.addf %1197, %1200 : vector<2x64xf32>
    %c177 = arith.constant 177 : index
    %1202 = memref.load %arg1[%c177] : memref<192xf32, #tpu.memory_space<smem>>
    %1203 = vector.broadcast %1202 : f32 to vector<2x64xf32>
    %1204 = arith.mulf %1203, %1115 : vector<2x64xf32>
    %1205 = arith.addf %1201, %1204 : vector<2x64xf32>
    %c185 = arith.constant 185 : index
    %1206 = memref.load %arg1[%c185] : memref<192xf32, #tpu.memory_space<smem>>
    %1207 = vector.broadcast %1206 : f32 to vector<2x64xf32>
    %1208 = arith.mulf %1207, %1127 : vector<2x64xf32>
    %1209 = arith.addf %1205, %1208 : vector<2x64xf32>
    %c171 = arith.constant 171 : index
    %1210 = memref.load %arg1[%c171] : memref<192xf32, #tpu.memory_space<smem>>
    %1211 = vector.broadcast %1210 : f32 to vector<2x64xf32>
    %1212 = arith.mulf %1211, %1130 : vector<2x64xf32>
    %1213 = arith.addf %1209, %1212 : vector<2x64xf32>
    %c179 = arith.constant 179 : index
    %1214 = memref.load %arg1[%c179] : memref<192xf32, #tpu.memory_space<smem>>
    %1215 = vector.broadcast %1214 : f32 to vector<2x64xf32>
    %1216 = arith.mulf %1215, %73 : vector<2x64xf32>
    %1217 = arith.addf %1213, %1216 : vector<2x64xf32>
    %c187 = arith.constant 187 : index
    %1218 = memref.load %arg1[%c187] : memref<192xf32, #tpu.memory_space<smem>>
    %1219 = vector.broadcast %1218 : f32 to vector<2x64xf32>
    %1220 = arith.mulf %1219, %1133 : vector<2x64xf32>
    %1221 = arith.addf %1217, %1220 : vector<2x64xf32>
    %c173 = arith.constant 173 : index
    %1222 = memref.load %arg1[%c173] : memref<192xf32, #tpu.memory_space<smem>>
    %1223 = vector.broadcast %1222 : f32 to vector<2x64xf32>
    %1224 = arith.mulf %1223, %1136 : vector<2x64xf32>
    %1225 = arith.addf %1221, %1224 : vector<2x64xf32>
    %c181 = arith.constant 181 : index
    %1226 = memref.load %arg1[%c181] : memref<192xf32, #tpu.memory_space<smem>>
    %1227 = vector.broadcast %1226 : f32 to vector<2x64xf32>
    %1228 = arith.mulf %1227, %75 : vector<2x64xf32>
    %1229 = arith.addf %1225, %1228 : vector<2x64xf32>
    %c189 = arith.constant 189 : index
    %1230 = memref.load %arg1[%c189] : memref<192xf32, #tpu.memory_space<smem>>
    %1231 = vector.broadcast %1230 : f32 to vector<2x64xf32>
    %1232 = arith.mulf %1231, %1139 : vector<2x64xf32>
    %1233 = arith.addf %1229, %1232 : vector<2x64xf32>
    %c190 = arith.constant 190 : index
    %1234 = memref.load %arg1[%c190] : memref<192xf32, #tpu.memory_space<smem>>
    %1235 = vector.broadcast %1234 : f32 to vector<2x64xf32>
    %1236 = arith.addf %1186, %1235 : vector<2x64xf32>
    %c0_201 = arith.constant 0 : index
    %c0_202 = arith.constant 0 : index
    %c0_203 = arith.constant 0 : index
    %1237 = vector.load %arg2[%c0_201, %c0_202, %c0_203] : memref<2x2x64xf32, #tpu.memory_space<vmem>>, vector<2x1x64xf32>
    %1238 = vector.shape_cast %1237 : vector<2x1x64xf32> to vector<2x64xf32>
    %1239 = vector.shape_cast %1236 : vector<2x64xf32> to vector<2x1x64xf32>
    tpu.vector_store %arg2[%c0_201, %c0_202, %c0_203], %1239 {strides = array<i32>} : memref<2x2x64xf32, #tpu.memory_space<vmem>>, vector<2x1x64xf32>,
    %c191 = arith.constant 191 : index
    %1240 = memref.load %arg1[%c191] : memref<192xf32, #tpu.memory_space<smem>>
    %1241 = vector.broadcast %1240 : f32 to vector<2x64xf32>
    %1242 = arith.addf %1233, %1241 : vector<2x64xf32>
    %c0_204 = arith.constant 0 : index
    %c1_205 = arith.constant 1 : index
    %c0_206 = arith.constant 0 : index
    %1243 = vector.load %arg2[%c0_204, %c1_205, %c0_206] : memref<2x2x64xf32, #tpu.memory_space<vmem>>, vector<2x1x64xf32>
    %1244 = vector.shape_cast %1243 : vector<2x1x64xf32> to vector<2x64xf32>
    %1245 = vector.shape_cast %1242 : vector<2x64xf32> to vector<2x1x64xf32>
    tpu.vector_store %arg2[%c0_204, %c1_205, %c0_206], %1245 {strides = array<i32>} : memref<2x2x64xf32, #tpu.memory_space<vmem>>, vector<2x1x64xf32>,
    return
  }
}

</mosaic_0001>

<llo_original>
// kernel: unet1d_forward.1
$region0: #{unet1d_forward.1}
  #allocation0 [shape = 'u32[]', space=smem, size = 0x4, offset = 0x4, fixed_abs, tag = 'smem constant byte address 0x4 - core index']
  #allocation1 [shape = 'u32[72,128]{1,0:T(1,128)}', space=vmem, size = 0x9000, scoped, tag = 'internal scratch']
  %s0 = inlined_call_operand.hbm [shape: f32[2,2,64], index: 0, kind: input, shape index: {}]
  %s1 = inlined_call_operand.hbm [shape: f32[192], index: 1, kind: input, shape index: {}]
  %s2 = inlined_call_operand.hbm [shape: f32[2,2,64], index: 2, kind: output, shape index: {}]
  %s3 = sld [smem:[#allocation0]]
  $region26: #{unet1d_forward.1} parent=0
    _
  %s5 = ssub.s32 1, %s3
  %s6 = scalar_select 0, %s5, %s3
  $region1: #{unet1d_forward.1} parent=0
    #allocation2 [shape = 'u8[2048]{0}', space=vmem, size = 0x800, scoped, tag = 'input window, operand 0, single buffered']
    #allocation3 [shape = 's32[1]{0}', space=sflag, size = 0x4, scoped, tag = 'scoped memory for unet1d_forward.1']
    #allocation4 [shape = 's32[1]{0}', space=sflag, size = 0x4, scoped, tag = 'scoped memory for unet1d_forward.1']
    #allocation5 [shape = 's32[1]{0}', space=sflag, size = 0x4, scoped, tag = 'scoped memory for unet1d_forward.1']
    #allocation6 [shape = 'u8[1024]{0}', space=smem, size = 0x400, scoped, tag = 'input window, operand 1, single buffered']
    #allocation7 [shape = 'u8[2048]{0}', space=vmem, size = 0x800, scoped, tag = 'output window, operand 0, single buffered']
    %7 = vsyncpa [#allocation3], 0
    %8 = vsyncpa [#allocation5], 0
    %9 = vsyncpa [#allocation4], 0
    // Predicated region
    $region2: #{unet1d_forward.1} parent=1 // pred_check
      _
    $region3: #{unet1d_forward.1} parent=1 // pred_check_branch
      %11 = sbr.rel (0) target = $region5
    $region4: #{unet1d_forward.1} parent=1 // pred_region
      %13 = vsyncadd [#allocation3], 0
      %s14 = sshll.u32 %s0, 4
      %s15 = int_to_ptr.hbm [resolvable:$true] %s14
      %s16 = sshll.u32 [#allocation2], 4
      %s17 = int_to_ptr.vmem [resolvable:$true] %s16
      %22 = dma.hbm_to_vmem [thread:$0]  %s15, 64, %s17, [#allocation3], 32, 32, 2
    $region5: #{unet1d_forward.1} parent=1 // pred_fallthru
      _
    // Predicated region
    $region6: #{unet1d_forward.1} parent=1 // pred_check
      _
    $region7: #{unet1d_forward.1} parent=1 // pred_check_branch
      %24 = sbr.rel (0) target = $region9
    $region8: #{unet1d_forward.1} parent=1 // pred_region
      %26 = vsyncadd [#allocation5], 0
      %s28 = sshll.u32 %s1, 4
      %s29 = int_to_ptr.hbm [resolvable:$true] %s28
      %31 = dma.hbm_to_smem %s29, 32, [#allocation6], [#allocation5]
    $region9: #{unet1d_forward.1} parent=1 // pred_fallthru
      _
    // Predicated region
    $region10: #{unet1d_forward.1} parent=1 // pred_check
      _
    $region11: #{unet1d_forward.1} parent=1 // pred_check_branch
      %33 = sbr.rel (0) target = $region13
    $region12: #{unet1d_forward.1} parent=1 // pred_region
      %35 = dma.done [#allocation3], 64
    $region13: #{unet1d_forward.1} parent=1 // pred_fallthru
      _
    // Predicated region
    $region14: #{unet1d_forward.1} parent=1 // pred_check
      _
    $region15: #{unet1d_forward.1} parent=1 // pred_check_branch
      %37 = sbr.rel (0) target = $region17
    $region16: #{unet1d_forward.1} parent=1 // pred_region
      %39 = dma.done [#allocation5], 32
    $region17: #{unet1d_forward.1} parent=1 // pred_fallthru
      _
    %40 = sfence
    %v41 = vlaneseq
    %v42 = vshrl.u32 %v41, 7
    %v43 = vadd.s32 %v42, 8
    %v44 = vadd.s32 %v42, 16
    %v45 = vadd.s32 %v42, 24
    %v46 = vadd.s32 %v42, 32
    %v47 = vadd.s32 %v42, 40
    %v48 = vadd.s32 %v42, 48
    %v49 = vadd.s32 %v42, 56
    %v50 = vlaneseq
    %v51 = vand.u32 %v50, 127
    %v52 = vmul.u32 %v51, 2
    %vm53 = vcmp.eq.s32.totalorder %v42, %v52
    %vm54 = vcmp.eq.s32.totalorder %v43, %v52
    %vm55 = vcmp.eq.s32.totalorder %v44, %v52
    %vm56 = vcmp.eq.s32.totalorder %v45, %v52
    %vm57 = vcmp.eq.s32.totalorder %v46, %v52
    %vm58 = vcmp.eq.s32.totalorder %v47, %v52
    %vm59 = vcmp.eq.s32.totalorder %v48, %v52
    %vm60 = vcmp.eq.s32.totalorder %v49, %v52
    %v61 = vsel %vm53, 1.0, 0.0
    %v62 = vsel %vm54, 1.0, 0.0
    %v63 = vsel %vm55, 1.0, 0.0
    %v64 = vsel %vm56, 1.0, 0.0
    %v65 = vsel %vm57, 1.0, 0.0
    %v66 = vsel %vm58, 1.0, 0.0
    %v67 = vsel %vm59, 1.0, 0.0
    %v68 = vsel %vm60, 1.0, 0.0
    %v69 = vmul.u32 %v42, 2
    %vm70 = vcmp.eq.s32.totalorder %v51, %v69
    %v71 = vsel %vm70, 1.0, 0.0
    %v72 = vadd.s32 %v69, 1
    %vm73 = vcmp.eq.s32.totalorder %v51, %v72
    %v74 = vsel %vm73, 1.0, 0.0
    %v75 = vmul.u32 %v43, 2
    %vm76 = vcmp.eq.s32.totalorder %v51, %v75
    %v77 = vsel %vm76, 1.0, 0.0
    %v78 = vadd.s32 %v75, 1
    %vm79 = vcmp.eq.s32.totalorder %v51, %v78
    %v80 = vsel %vm79, 1.0, 0.0
    %v81 = vmul.u32 %v44, 2
    %v82 = vmul.u32 %v45, 2
    %vm83 = vcmp.eq.s32.totalorder %v51, %v81
    %vm84 = vcmp.eq.s32.totalorder %v51, %v82
    %v85 = vsel %vm83, 1.0, 0.0
    %v86 = vsel %vm84, 1.0, 0.0
    %v87 = vadd.s32 %v81, 1
    %v88 = vadd.s32 %v82, 1
    %vm89 = vcmp.eq.s32.totalorder %v51, %v87
    %vm90 = vcmp.eq.s32.totalorder %v51, %v88
    %v91 = vsel %vm89, 1.0, 0.0
    %v92 = vsel %vm90, 1.0, 0.0
    %v93 = vld [vmem:[#allocation2] sm:$0x1]
    %v94 = vld [vmem:[#allocation2 + $0x2] sm:$0x1]
    %v95 = vld [vmem:[#allocation2 + $0x1] sm:$0x1]
    %v96 = vld [vmem:[#allocation2 + $0x3] sm:$0x1]
    %v99 = vrot.slane %v94, 7
    %vm100 = vcmask 1041409
    %v101 = vsel %vm100, %v99, %v93
    %102 = vrot.lane.b32.xlu0 %v101, 1
    %v103 = vpop.permute.xlu0 %102
    %vm105 = vcmask 7168
    %v106 = vsel %vm105, 0.0, %v103
    %107 = vrot.lane.b32.xlu0 %v101, 127
    %v108 = vpop.permute.xlu0 %107
    %vm110 = vcmask 515072
    %v111 = vsel %vm110, %v108, 0.0
    %v114 = vrot.slane %v96, 7
    %v115 = vsel %vm100, %v114, %v95
    %116 = vrot.lane.b32.xlu0 %v115, 1
    %v117 = vpop.permute.xlu0 %116
    %v119 = vsel %vm105, 0.0, %v117
    %120 = vrot.lane.b32.xlu0 %v115, 127
    %v121 = vpop.permute.xlu0 %120
    %v123 = vsel %vm110, %v121, 0.0
    %s124 = sld [smem:[#allocation6]]
    %v125 = vstv %s124
    %v126 = vmul.f32 %v125, %v106
    %s127 = sld [smem:[#allocation6 + $0x4]]
    %v128 = vstv %s127
    %v129 = vmul.f32 %v128, %v93
    %v130 = vmul.f32 %v128, %v94
    %v133 = vrot.slane %v130, 7
    %v134 = vsel %vm100, %v133, %v129
    %v136 = vadd.f32 %v126, %v134
    %s137 = sld [smem:[#allocation6 + $0x8]]
    %v138 = vstv %s137
    %v139 = vmul.f32 %v138, %v111
    %v140 = vadd.f32 %v136, %v139
    %s141 = sld [smem:[#allocation6 + $0x2]]
    %v142 = vstv %s141
    %v143 = vmul.f32 %v142, %v119
    %v144 = vadd.f32 %v140, %v143
    %s145 = sld [smem:[#allocation6 + $0x6]]
    %v146 = vstv %s145
    %v147 = vmul.f32 %v146, %v95
    %v148 = vmul.f32 %v146, %v96
    %v151 = vrot.slane %v148, 7
    %v152 = vsel %vm100, %v151, %v147
    %v154 = vadd.f32 %v144, %v152
    %s155 = sld [smem:[#allocation6 + $0xa]]
    %v156 = vstv %s155
    %v157 = vmul.f32 %v156, %v123
    %v158 = vadd.f32 %v154, %v157
    %s159 = sld [smem:[#allocation6 + $0x1]]
    %v160 = vstv %s159
    %v161 = vmul.f32 %v160, %v106
    %s162 = sld [smem:[#allocation6 + $0x5]]
    %v163 = vstv %s162
    %v164 = vmul.f32 %v163, %v93
    %v165 = vmul.f32 %v163, %v94
    %v168 = vrot.slane %v165, 7
    %v169 = vsel %vm100, %v168, %v164
    %v171 = vadd.f32 %v161, %v169
    %s172 = sld [smem:[#allocation6 + $0x9]]
    %v173 = vstv %s172
    %v174 = vmul.f32 %v173, %v111
    %v175 = vadd.f32 %v171, %v174
    %s176 = sld [smem:[#allocation6 + $0x3]]
    %v177 = vstv %s176
    %v178 = vmul.f32 %v177, %v119
    %v179 = vadd.f32 %v175, %v178
    %s180 = sld [smem:[#allocation6 + $0x7]]
    %v181 = vstv %s180
    %v182 = vmul.f32 %v181, %v95
    %v183 = vmul.f32 %v181, %v96
    %v186 = vrot.slane %v183, 7
    %v187 = vsel %vm100, %v186, %v182
    %v189 = vadd.f32 %v179, %v187
    %s190 = sld [smem:[#allocation6 + $0xb]]
    %v191 = vstv %s190
    %v192 = vmul.f32 %v191, %v123
    %v193 = vadd.f32 %v189, %v192
    %vm194 = vcmask 523264
    %v196 = vsel %vm194, %v158, 0
    %198 = vmatpush.msra.mxu0 0.0
    %199 = vmatpush.msra.mxu0 0.0
    %200 = vmatpush.msra.mxu0 0.0
    %201 = vmatpush.msra.mxu0 0.0
    %202 = vmatpush.msra.mxu0 0.0
    %203 = vmatpush.msra.mxu0 0.0
    %204 = vmatpush.msra.mxu0 0.0
    %205 = vmatpush.msra.mxu0 0.0
    %206 = vmatpush.msra.mxu0 %v68
    %207 = vmatpush.msra.mxu0 %v67
    %208 = vmatpush.msra.mxu0 %v66
    %209 = vmatpush.msra.mxu0 %v65
    %210 = vmatpush.msra.mxu0 %v64
    %211 = vmatpush.msra.mxu0 %v63
    %212 = vmatpush.msra.mxu0 %v62
    %213 = vmatpush.msra.mxu0 %v61
    %214 = vmatmul.f32.gmra.mxu0 %v196
    %v215 = vpop.f32.mrf.mxu0
    %v216 = vadd.f32 0.0, %v215
    %217 = vdwg.mxu0
    %v219 = vsel %vm194, %v193, 0
    %221 = vmatpush.msra.mxu0 0.0
    %222 = vmatpush.msra.mxu0 0.0
    %223 = vmatpush.msra.mxu0 0.0
    %224 = vmatpush.msra.mxu0 0.0
    %225 = vmatpush.msra.mxu0 0.0
    %226 = vmatpush.msra.mxu0 0.0
    %227 = vmatpush.msra.mxu0 0.0
    %228 = vmatpush.msra.mxu0 0.0
    %229 = vmatpush.msra.mxu0 %v68
    %230 = vmatpush.msra.mxu0 %v67
    %231 = vmatpush.msra.mxu0 %v66
    %232 = vmatpush.msra.mxu0 %v65
    %233 = vmatpush.msra.mxu0 %v64
    %234 = vmatpush.msra.mxu0 %v63
    %235 = vmatpush.msra.mxu0 %v62
    %236 = vmatpush.msra.mxu0 %v61
    %237 = vmatmul.f32.gmra.mxu0 %v219
    %v238 = vpop.f32.mrf.mxu0
    %v239 = vadd.f32 0.0, %v238
    %240 = vdwg.mxu0
    %vm241 = vcmask 254976
    %v242 = vsel %vm241, %v216, 0.0
    %243 = vadd.xlane.f32.xlu0 %v242
    %v244 = vpop.xlane.xlu0 %243
    %vm245 = vcmask 1041408
    %v246 = vsel %vm245, %v244, 0.0
    %v247 = vrot.slane %v246, 4
    %v248 = vadd.f32 %v246, %v247
    %v249 = vrot.slane %v248, 2
    %v250 = vadd.f32 %v248, %v249
    %v251 = vrot.slane %v250, 1
    %v252 = vadd.f32 %v250, %v251
    %v253 = vrcp.pop 64.0
    %v254 = vmul.f32 64.0, %v253
    %v255 = vsub.f32 1.0, %v254
    %v256 = vmul.f32 %v253, %v255
    %v257 = vadd.f32 %v253, %v256
    %vm258 = vweird.f32 %v253
    %v259 = vsel %vm258, %v253, %v257
    %v260 = vmul.f32 %v252, %v259
    %v261 = vsub.f32 %v216, %v260
    %v262 = vmul.f32 %v261, %v261
    %v263 = vsel %vm241, %v262, 0.0
    %264 = vadd.xlane.f32.xlu0 %v263
    %v265 = vpop.xlane.xlu0 %264
    %v266 = vsel %vm245, %v265, 0.0
    %v267 = vrot.slane %v266, 4
    %v268 = vadd.f32 %v266, %v267
    %v269 = vrot.slane %v268, 2
    %v270 = vadd.f32 %v268, %v269
    %v271 = vrot.slane %v270, 1
    %v272 = vadd.f32 %v270, %v271
    %v273 = vmul.f32 %v272, %v259
    %s274 = sld [smem:[#allocation6 + $0xc]]
    %v275 = vadd.f32 %v273, 1e-05
    %v276 = vrsqrt.pop %v275
    %v277 = vmul.f32 %v276, %v275
    %v278 = vmul.f32 %v277, %v276
    %v279 = vmul.f32 0.5, %v278
    %v280 = vsub.f32 1.5, %v279
    %v281 = vmul.f32 %v276, %v280
    %vm282 = vweird.f32 %v275
    %vm283 = vweird.f32 %v276
    %vm284 = vmor %vm282, %vm283
    %v285 = vsel %vm284, %v276, %v281
    %v286 = vstv %s274
    %v287 = vmul.f32 %v286, %v285
    %v288 = vmul.f32 %v261, %v287
    %s289 = sld [smem:[#allocation6 + $0xe]]
    %v290 = vstv %s289
    %v291 = vadd.f32 %v288, %v290
    %vm292 = vcmp.ge.f32.partialorder %v291, 0.0
    %v293 = vmul.f32 %v291, 0.1
    %v294 = vsel %vm292, %v291, %v293
    %v295 = vsel %vm241, %v239, 0.0
    %296 = vadd.xlane.f32.xlu0 %v295
    %v297 = vpop.xlane.xlu0 %296
    %v298 = vsel %vm245, %v297, 0.0
    %v299 = vrot.slane %v298, 4
    %v300 = vadd.f32 %v298, %v299
    %v301 = vrot.slane %v300, 2
    %v302 = vadd.f32 %v300, %v301
    %v303 = vrot.slane %v302, 1
    %v304 = vadd.f32 %v302, %v303
    %v305 = vmul.f32 %v304, %v259
    %v306 = vsub.f32 %v239, %v305
    %v307 = vmul.f32 %v306, %v306
    %v308 = vsel %vm241, %v307, 0.0
    %309 = vadd.xlane.f32.xlu0 %v308
    %v310 = vpop.xlane.xlu0 %309
    %v311 = vsel %vm245, %v310, 0.0
    %v312 = vrot.slane %v311, 4
    %v313 = vadd.f32 %v311, %v312
    %v314 = vrot.slane %v313, 2
    %v315 = vadd.f32 %v313, %v314
    %v316 = vrot.slane %v315, 1
    %v317 = vadd.f32 %v315, %v316
    %v318 = vmul.f32 %v317, %v259
    %s319 = sld [smem:[#allocation6 + $0xd]]
    %v320 = vadd.f32 %v318, 1e-05
    %v321 = vrsqrt.pop %v320
    %v322 = vmul.f32 %v321, %v320
    %v323 = vmul.f32 %v322, %v321
    %v324 = vmul.f32 0.5, %v323
    %v325 = vsub.f32 1.5, %v324
    %v326 = vmul.f32 %v321, %v325
    %vm327 = vweird.f32 %v320
    %vm328 = vweird.f32 %v321
    %vm329 = vmor %vm327, %vm328
    %v330 = vsel %vm329, %v321, %v326
    %v331 = vstv %s319
    %v332 = vmul.f32 %v331, %v330
    %v333 = vmul.f32 %v306, %v332
    %s334 = sld [smem:[#allocation6 + $0xf]]
    %v335 = vstv %s334
    %v336 = vadd.f32 %v333, %v335
    %vm337 = vcmp.ge.f32.partialorder %v336, 0.0
    %v338 = vmul.f32 %v336, 0.1
    %v339 = vsel %vm337, %v336, %v338
    %341 = vrot.lane.b32.xlu0 %v294, 1
    %v342 = vpop.permute.xlu0 %341
    %v344 = vsel %vm105, 0.0, %v342
    %345 = vrot.lane.b32.xlu0 %v294, 127
    %v346 = vpop.permute.xlu0 %345
    %vm348 = vcmask 252928
    %v349 = vsel %vm348, %v346, 0.0
    %351 = vrot.lane.b32.xlu0 %v339, 1
    %v352 = vpop.permute.xlu0 %351
    %v354 = vsel %vm105, 0.0, %v352
    %355 = vrot.lane.b32.xlu0 %v339, 127
    %v356 = vpop.permute.xlu0 %355
    %v358 = vsel %vm348, %v356, 0.0
    %s359 = sld [smem:[#allocation6 + $0x10]]
    %v360 = vstv %s359
    %v361 = vmul.f32 %v360, %v344
    %s362 = sld [smem:[#allocation6 + $0x14]]
    %v363 = vstv %s362
    %v364 = vmul.f32 %v363, %v294
    %v365 = vadd.f32 %v361, %v364
    %s366 = sld [smem:[#allocation6 + $0x18]]
    %v367 = vstv %s366
    %v368 = vmul.f32 %v367, %v349
    %v369 = vadd.f32 %v365, %v368
    %s370 = sld [smem:[#allocation6 + $0x12]]
    %v371 = vstv %s370
    %v372 = vmul.f32 %v371, %v354
    %v373 = vadd.f32 %v369, %v372
    %s374 = sld [smem:[#allocation6 + $0x16]]
    %v375 = vstv %s374
    %v376 = vmul.f32 %v375, %v339
    %v377 = vadd.f32 %v373, %v376
    %s378 = sld [smem:[#allocation6 + $0x1a]]
    %v379 = vstv %s378
    %v380 = vmul.f32 %v379, %v358
    %v381 = vadd.f32 %v377, %v380
    %s382 = sld [smem:[#allocation6 + $0x11]]
    %v383 = vstv %s382
    %v384 = vmul.f32 %v383, %v344
    %s385 = sld [smem:[#allocation6 + $0x15]]
    %v386 = vstv %s385
    %v387 = vmul.f32 %v386, %v294
    %v388 = vadd.f32 %v384, %v387
    %s389 = sld [smem:[#allocation6 + $0x19]]
    %v390 = vstv %s389
    %v391 = vmul.f32 %v390, %v349
    %v392 = vadd.f32 %v388, %v391
    %s393 = sld [smem:[#allocation6 + $0x13]]
    %v394 = vstv %s393
    %v395 = vmul.f32 %v394, %v354
    %v396 = vadd.f32 %v392, %v395
    %s397 = sld [smem:[#allocation6 + $0x17]]
    %v398 = vstv %s397
    %v399 = vmul.f32 %v398, %v339
    %v400 = vadd.f32 %v396, %v399
    %s401 = sld [smem:[#allocation6 + $0x1b]]
    %v402 = vstv %s401
    %v403 = vmul.f32 %v402, %v358
    %v404 = vadd.f32 %v400, %v403
    %vm405 = vcmask 261120
    %v407 = vsel %vm405, %v381, 0
    %409 = vmatpush.msra.mxu0 0.0
    %410 = vmatpush.msra.mxu0 0.0
    %411 = vmatpush.msra.mxu0 0.0
    %412 = vmatpush.msra.mxu0 0.0
    %413 = vmatpush.msra.mxu0 0.0
    %414 = vmatpush.msra.mxu0 0.0
    %415 = vmatpush.msra.mxu0 0.0
    %416 = vmatpush.msra.mxu0 0.0
    %417 = vmatpush.msra.mxu0 0.0
    %418 = vmatpush.msra.mxu0 0.0
    %419 = vmatpush.msra.mxu0 0.0
    %420 = vmatpush.msra.mxu0 0.0
    %421 = vmatpush.msra.mxu0 %v64
    %422 = vmatpush.msra.mxu0 %v63
    %423 = vmatpush.msra.mxu0 %v62
    %424 = vmatpush.msra.mxu0 %v61
    %425 = vmatmul.f32.gmra.mxu0 %v407
    %v426 = vpop.f32.mrf.mxu0
    %v427 = vadd.f32 0.0, %v426
    %428 = vdwg.mxu0
    %v430 = vsel %vm405, %v404, 0
    %432 = vmatpush.msra.mxu0 0.0
    %433 = vmatpush.msra.mxu0 0.0
    %434 = vmatpush.msra.mxu0 0.0
    %435 = vmatpush.msra.mxu0 0.0
    %436 = vmatpush.msra.mxu0 0.0
    %437 = vmatpush.msra.mxu0 0.0
    %438 = vmatpush.msra.mxu0 0.0
    %439 = vmatpush.msra.mxu0 0.0
    %440 = vmatpush.msra.mxu0 0.0
    %441 = vmatpush.msra.mxu0 0.0
    %442 = vmatpush.msra.mxu0 0.0
    %443 = vmatpush.msra.mxu0 0.0
    %444 = vmatpush.msra.mxu0 %v64
    %445 = vmatpush.msra.mxu0 %v63
    %446 = vmatpush.msra.mxu0 %v62
    %447 = vmatpush.msra.mxu0 %v61
    %448 = vmatmul.f32.gmra.mxu0 %v430
    %v449 = vpop.f32.mrf.mxu0
    %v450 = vadd.f32 0.0, %v449
    %451 = vdwg.mxu0
    %vm452 = vcmask 123904
    %v453 = vsel %vm452, %v427, 0.0
    %454 = vadd.xlane.f32.xlu0 %v453
    %v455 = vpop.xlane.xlu0 %454
    %v456 = vsel %vm245, %v455, 0.0
    %v457 = vrot.slane %v456, 4
    %v458 = vadd.f32 %v456, %v457
    %v459 = vrot.slane %v458, 2
    %v460 = vadd.f32 %v458, %v459
    %v461 = vrot.slane %v460, 1
    %v462 = vadd.f32 %v460, %v461
    %v463 = vrcp.pop 32.0
    %v464 = vmul.f32 32.0, %v463
    %v465 = vsub.f32 1.0, %v464
    %v466 = vmul.f32 %v463, %v465
    %v467 = vadd.f32 %v463, %v466
    %vm468 = vweird.f32 %v463
    %v469 = vsel %vm468, %v463, %v467
    %v470 = vmul.f32 %v462, %v469
    %v471 = vsub.f32 %v427, %v470
    %v472 = vmul.f32 %v471, %v471
    %v473 = vsel %vm452, %v472, 0.0
    %474 = vadd.xlane.f32.xlu0 %v473
    %v475 = vpop.xlane.xlu0 %474
    %v476 = vsel %vm245, %v475, 0.0
    %v477 = vrot.slane %v476, 4
    %v478 = vadd.f32 %v476, %v477
    %v479 = vrot.slane %v478, 2
    %v480 = vadd.f32 %v478, %v479
    %v481 = vrot.slane %v480, 1
    %v482 = vadd.f32 %v480, %v481
    %v483 = vmul.f32 %v482, %v469
    %s484 = sld [smem:[#allocation6 + $0x1c]]
    %v485 = vadd.f32 %v483, 1e-05
    %v486 = vrsqrt.pop %v485
    %v487 = vmul.f32 %v486, %v485
    %v488 = vmul.f32 %v487, %v486
    %v489 = vmul.f32 0.5, %v488
    %v490 = vsub.f32 1.5, %v489
    %v491 = vmul.f32 %v486, %v490
    %vm492 = vweird.f32 %v485
    %vm493 = vweird.f32 %v486
    %vm494 = vmor %vm492, %vm493
    %v495 = vsel %vm494, %v486, %v491
    %v496 = vstv %s484
    %v497 = vmul.f32 %v496, %v495
    %v498 = vmul.f32 %v471, %v497
    %s499 = sld [smem:[#allocation6 + $0x1e]]
    %v500 = vstv %s499
    %v501 = vadd.f32 %v498, %v500
    %vm502 = vcmp.ge.f32.partialorder %v501, 0.0
    %v503 = vmul.f32 %v501, 0.1
    %v504 = vsel %vm502, %v501, %v503
    %v505 = vsel %vm452, %v450, 0.0
    %506 = vadd.xlane.f32.xlu0 %v505
    %v507 = vpop.xlane.xlu0 %506
    %v508 = vsel %vm245, %v507, 0.0
    %v509 = vrot.slane %v508, 4
    %v510 = vadd.f32 %v508, %v509
    %v511 = vrot.slane %v510, 2
    %v512 = vadd.f32 %v510, %v511
    %v513 = vrot.slane %v512, 1
    %v514 = vadd.f32 %v512, %v513
    %v515 = vmul.f32 %v514, %v469
    %v516 = vsub.f32 %v450, %v515
    %v517 = vmul.f32 %v516, %v516
    %v518 = vsel %vm452, %v517, 0.0
    %519 = vadd.xlane.f32.xlu0 %v518
    %v520 = vpop.xlane.xlu0 %519
    %v521 = vsel %vm245, %v520, 0.0
    %v522 = vrot.slane %v521, 4
    %v523 = vadd.f32 %v521, %v522
    %v524 = vrot.slane %v523, 2
    %v525 = vadd.f32 %v523, %v524
    %v526 = vrot.slane %v525, 1
    %v527 = vadd.f32 %v525, %v526
    %v528 = vmul.f32 %v527, %v469
    %s529 = sld [smem:[#allocation6 + $0x1d]]
    %v530 = vadd.f32 %v528, 1e-05
    %v531 = vrsqrt.pop %v530
    %v532 = vmul.f32 %v531, %v530
    %v533 = vmul.f32 %v532, %v531
    %v534 = vmul.f32 0.5, %v533
    %v535 = vsub.f32 1.5, %v534
    %v536 = vmul.f32 %v531, %v535
    %vm537 = vweird.f32 %v530
    %vm538 = vweird.f32 %v531
    %vm539 = vmor %vm537, %vm538
    %v540 = vsel %vm539, %v531, %v536
    %v541 = vstv %s529
    %v542 = vmul.f32 %v541, %v540
    %v543 = vmul.f32 %v516, %v542
    %s544 = sld [smem:[#allocation6 + $0x1f]]
    %v545 = vstv %s544
    %v546 = vadd.f32 %v543, %v545
    %vm547 = vcmp.ge.f32.partialorder %v546, 0.0
    %v548 = vmul.f32 %v546, 0.1
    %v549 = vsel %vm547, %v546, %v548
    %551 = vrot.lane.b32.xlu0 %v504, 1
    %v552 = vpop.permute.xlu0 %551
    %v554 = vsel %vm105, 0.0, %v552
    %555 = vrot.lane.b32.xlu0 %v504, 127
    %v556 = vpop.permute.xlu0 %555
    %vm558 = vcmask 121856
    %v559 = vsel %vm558, %v556, 0.0
    %561 = vrot.lane.b32.xlu0 %v549, 1
    %v562 = vpop.permute.xlu0 %561
    %v564 = vsel %vm105, 0.0, %v562
    %565 = vrot.lane.b32.xlu0 %v549, 127
    %v566 = vpop.permute.xlu0 %565
    %v568 = vsel %vm558, %v566, 0.0
    %s569 = sld [smem:[#allocation6 + $0x30]]
    %v570 = vstv %s569
    %v571 = vmul.f32 %v570, %v554
    %s572 = sld [smem:[#allocation6 + $0x34]]
    %v573 = vstv %s572
    %v574 = vmul.f32 %v573, %v504
    %v575 = vadd.f32 %v571, %v574
    %s576 = sld [smem:[#allocation6 + $0x38]]
    %v577 = vstv %s576
    %v578 = vmul.f32 %v577, %v559
    %v579 = vadd.f32 %v575, %v578
    %s580 = sld [smem:[#allocation6 + $0x32]]
    %v581 = vstv %s580
    %v582 = vmul.f32 %v581, %v564
    %v583 = vadd.f32 %v579, %v582
    %s584 = sld [smem:[#allocation6 + $0x36]]
    %v585 = vstv %s584
    %v586 = vmul.f32 %v585, %v549
    %v587 = vadd.f32 %v583, %v586
    %s588 = sld [smem:[#allocation6 + $0x3a]]
    %v589 = vstv %s588
    %v590 = vmul.f32 %v589, %v568
    %v591 = vadd.f32 %v587, %v590
    %s592 = sld [smem:[#allocation6 + $0x31]]
    %v593 = vstv %s592
    %v594 = vmul.f32 %v593, %v554
    %s595 = sld [smem:[#allocation6 + $0x35]]
    %v596 = vstv %s595
    %v597 = vmul.f32 %v596, %v504
    %v598 = vadd.f32 %v594, %v597
    %s599 = sld [smem:[#allocation6 + $0x39]]
    %v600 = vstv %s599
    %v601 = vmul.f32 %v600, %v559
    %v602 = vadd.f32 %v598, %v601
    %s603 = sld [smem:[#allocation6 + $0x33]]
    %v604 = vstv %s603
    %v605 = vmul.f32 %v604, %v564
    %v606 = vadd.f32 %v602, %v605
    %s607 = sld [smem:[#allocation6 + $0x37]]
    %v608 = vstv %s607
    %v609 = vmul.f32 %v608, %v549
    %v610 = vadd.f32 %v606, %v609
    %s611 = sld [smem:[#allocation6 + $0x3b]]
    %v612 = vstv %s611
    %v613 = vmul.f32 %v612, %v568
    %v614 = vadd.f32 %v610, %v613
    %v615 = vsel %vm452, %v591, 0.0
    %616 = vadd.xlane.f32.xlu0 %v615
    %v617 = vpop.xlane.xlu0 %616
    %v618 = vsel %vm245, %v617, 0.0
    %v619 = vrot.slane %v618, 4
    %v620 = vadd.f32 %v618, %v619
    %v621 = vrot.slane %v620, 2
    %v622 = vadd.f32 %v620, %v621
    %v623 = vrot.slane %v622, 1
    %v624 = vadd.f32 %v622, %v623
    %v625 = vmul.f32 %v624, %v469
    %v626 = vsub.f32 %v591, %v625
    %v627 = vmul.f32 %v626, %v626
    %v628 = vsel %vm452, %v627, 0.0
    %629 = vadd.xlane.f32.xlu0 %v628
    %v630 = vpop.xlane.xlu0 %629
    %v631 = vsel %vm245, %v630, 0.0
    %v632 = vrot.slane %v631, 4
    %v633 = vadd.f32 %v631, %v632
    %v634 = vrot.slane %v633, 2
    %v635 = vadd.f32 %v633, %v634
    %v636 = vrot.slane %v635, 1
    %v637 = vadd.f32 %v635, %v636
    %v638 = vmul.f32 %v637, %v469
    %s639 = sld [smem:[#allocation6 + $0x3c]]
    %v640 = vadd.f32 %v638, 1e-05
    %v641 = vrsqrt.pop %v640
    %v642 = vmul.f32 %v641, %v640
    %v643 = vmul.f32 %v642, %v641
    %v644 = vmul.f32 0.5, %v643
    %v645 = vsub.f32 1.5, %v644
    %v646 = vmul.f32 %v641, %v645
    %vm647 = vweird.f32 %v640
    %vm648 = vweird.f32 %v641
    %vm649 = vmor %vm647, %vm648
    %v650 = vsel %vm649, %v641, %v646
    %v651 = vstv %s639
    %v652 = vmul.f32 %v651, %v650
    %v653 = vmul.f32 %v626, %v652
    %s654 = sld [smem:[#allocation6 + $0x3e]]
    %v655 = vstv %s654
    %v656 = vadd.f32 %v653, %v655
    %vm657 = vcmp.ge.f32.partialorder %v656, 0.0
    %v658 = vmul.f32 %v656, 0.1
    %v659 = vsel %vm657, %v656, %v658
    %v660 = vsel %vm452, %v614, 0.0
    %661 = vadd.xlane.f32.xlu0 %v660
    %v662 = vpop.xlane.xlu0 %661
    %v663 = vsel %vm245, %v662, 0.0
    %v664 = vrot.slane %v663, 4
    %v665 = vadd.f32 %v663, %v664
    %v666 = vrot.slane %v665, 2
    %v667 = vadd.f32 %v665, %v666
    %v668 = vrot.slane %v667, 1
    %v669 = vadd.f32 %v667, %v668
    %v670 = vmul.f32 %v669, %v469
    %v671 = vsub.f32 %v614, %v670
    %v672 = vmul.f32 %v671, %v671
    %v673 = vsel %vm452, %v672, 0.0
    %674 = vadd.xlane.f32.xlu0 %v673
    %v675 = vpop.xlane.xlu0 %674
    %v676 = vsel %vm245, %v675, 0.0
    %v677 = vrot.slane %v676, 4
    %v678 = vadd.f32 %v676, %v677
    %v679 = vrot.slane %v678, 2
    %v680 = vadd.f32 %v678, %v679
    %v681 = vrot.slane %v680, 1
    %v682 = vadd.f32 %v680, %v681
    %v683 = vmul.f32 %v682, %v469
    %s684 = sld [smem:[#allocation6 + $0x3d]]
    %v685 = vadd.f32 %v683, 1e-05
    %v686 = vrsqrt.pop %v685
    %v687 = vmul.f32 %v686, %v685
    %v688 = vmul.f32 %v687, %v686
    %v689 = vmul.f32 0.5, %v688
    %v690 = vsub.f32 1.5, %v689
    %v691 = vmul.f32 %v686, %v690
    %vm692 = vweird.f32 %v685
    %vm693 = vweird.f32 %v686
    %vm694 = vmor %vm692, %vm693
    %v695 = vsel %vm694, %v686, %v691
    %v696 = vstv %s684
    %v697 = vmul.f32 %v696, %v695
    %v698 = vmul.f32 %v671, %v697
    %s699 = sld [smem:[#allocation6 + $0x3f]]
    %v700 = vstv %s699
    %v701 = vadd.f32 %v698, %v700
    %vm702 = vcmp.ge.f32.partialorder %v701, 0.0
    %v703 = vmul.f32 %v701, 0.1
    %v704 = vsel %vm702, %v701, %v703
    %706 = vrot.lane.b32.xlu0 %v659, 1
    %v707 = vpop.permute.xlu0 %706
    %v709 = vsel %vm105, 0.0, %v707
    %710 = vrot.lane.b32.xlu0 %v659, 127
    %v711 = vpop.permute.xlu0 %710
    %v713 = vsel %vm558, %v711, 0.0
    %715 = vrot.lane.b32.xlu0 %v704, 1
    %v716 = vpop.permute.xlu0 %715
    %v718 = vsel %vm105, 0.0, %v716
    %719 = vrot.lane.b32.xlu0 %v704, 127
    %v720 = vpop.permute.xlu0 %719
    %v722 = vsel %vm558, %v720, 0.0
    %s723 = sld [smem:[#allocation6 + $0x20]]
    %v724 = vstv %s723
    %v725 = vmul.f32 %v724, %v709
    %s726 = sld [smem:[#allocation6 + $0x24]]
    %v727 = vstv %s726
    %v728 = vmul.f32 %v727, %v659
    %v729 = vadd.f32 %v725, %v728
    %s730 = sld [smem:[#allocation6 + $0x28]]
    %v731 = vstv %s730
    %v732 = vmul.f32 %v731, %v713
    %v733 = vadd.f32 %v729, %v732
    %s734 = sld [smem:[#allocation6 + $0x22]]
    %v735 = vstv %s734
    %v736 = vmul.f32 %v735, %v718
    %v737 = vadd.f32 %v733, %v736
    %s738 = sld [smem:[#allocation6 + $0x26]]
    %v739 = vstv %s738
    %v740 = vmul.f32 %v739, %v704
    %v741 = vadd.f32 %v737, %v740
    %s742 = sld [smem:[#allocation6 + $0x2a]]
    %v743 = vstv %s742
    %v744 = vmul.f32 %v743, %v722
    %v745 = vadd.f32 %v741, %v744
    %s746 = sld [smem:[#allocation6 + $0x21]]
    %v747 = vstv %s746
    %v748 = vmul.f32 %v747, %v709
    %s749 = sld [smem:[#allocation6 + $0x25]]
    %v750 = vstv %s749
    %v751 = vmul.f32 %v750, %v659
    %v752 = vadd.f32 %v748, %v751
    %s753 = sld [smem:[#allocation6 + $0x29]]
    %v754 = vstv %s753
    %v755 = vmul.f32 %v754, %v713
    %v756 = vadd.f32 %v752, %v755
    %s757 = sld [smem:[#allocation6 + $0x23]]
    %v758 = vstv %s757
    %v759 = vmul.f32 %v758, %v718
    %v760 = vadd.f32 %v756, %v759
    %s761 = sld [smem:[#allocation6 + $0x27]]
    %v762 = vstv %s761
    %v763 = vmul.f32 %v762, %v704
    %v764 = vadd.f32 %v760, %v763
    %s765 = sld [smem:[#allocation6 + $0x2b]]
    %v766 = vstv %s765
    %v767 = vmul.f32 %v766, %v722
    %v768 = vadd.f32 %v764, %v767
    %vm769 = vcmask 130048
    %v771 = vsel %vm769, %v745, 0
    %773 = vmatpush.msra.mxu0 0.0
    %774 = vmatpush.msra.mxu0 0.0
    %775 = vmatpush.msra.mxu0 0.0
    %776 = vmatpush.msra.mxu0 0.0
    %777 = vmatpush.msra.mxu0 0.0
    %778 = vmatpush.msra.mxu0 0.0
    %779 = vmatpush.msra.mxu0 0.0
    %780 = vmatpush.msra.mxu0 0.0
    %781 = vmatpush.msra.mxu0 0.0
    %782 = vmatpush.msra.mxu0 0.0
    %783 = vmatpush.msra.mxu0 0.0
    %784 = vmatpush.msra.mxu0 0.0
    %785 = vmatpush.msra.mxu0 0.0
    %786 = vmatpush.msra.mxu0 0.0
    %787 = vmatpush.msra.mxu0 %v62
    %788 = vmatpush.msra.mxu0 %v61
    %789 = vmatmul.f32.gmra.mxu0 %v771
    %v790 = vpop.f32.mrf.mxu0
    %v791 = vadd.f32 0.0, %v790
    %792 = vdwg.mxu0
    %v794 = vsel %vm769, %v768, 0
    %796 = vmatpush.msra.mxu0 0.0
    %797 = vmatpush.msra.mxu0 0.0
    %798 = vmatpush.msra.mxu0 0.0
    %799 = vmatpush.msra.mxu0 0.0
    %800 = vmatpush.msra.mxu0 0.0
    %801 = vmatpush.msra.mxu0 0.0
    %802 = vmatpush.msra.mxu0 0.0
    %803 = vmatpush.msra.mxu0 0.0
    %804 = vmatpush.msra.mxu0 0.0
    %805 = vmatpush.msra.mxu0 0.0
    %806 = vmatpush.msra.mxu0 0.0
    %807 = vmatpush.msra.mxu0 0.0
    %808 = vmatpush.msra.mxu0 0.0
    %809 = vmatpush.msra.mxu0 0.0
    %810 = vmatpush.msra.mxu0 %v62
    %811 = vmatpush.msra.mxu0 %v61
    %812 = vmatmul.f32.gmra.mxu0 %v794
    %v813 = vpop.f32.mrf.mxu0
    %v814 = vadd.f32 0.0, %v813
    %815 = vdwg.mxu0
    %vm816 = vcmask 58368
    %v817 = vsel %vm816, %v791, 0.0
    %818 = vadd.xlane.f32.xlu0 %v817
    %v819 = vpop.xlane.xlu0 %818
    %v820 = vsel %vm245, %v819, 0.0
    %v821 = vrot.slane %v820, 4
    %v822 = vadd.f32 %v820, %v821
    %v823 = vrot.slane %v822, 2
    %v824 = vadd.f32 %v822, %v823
    %v825 = vrot.slane %v824, 1
    %v826 = vadd.f32 %v824, %v825
    %v827 = vrcp.pop 16.0
    %v828 = vmul.f32 16.0, %v827
    %v829 = vsub.f32 1.0, %v828
    %v830 = vmul.f32 %v827, %v829
    %v831 = vadd.f32 %v827, %v830
    %vm832 = vweird.f32 %v827
    %v833 = vsel %vm832, %v827, %v831
    %v834 = vmul.f32 %v826, %v833
    %v835 = vsub.f32 %v791, %v834
    %v836 = vmul.f32 %v835, %v835
    %v837 = vsel %vm816, %v836, 0.0
    %838 = vadd.xlane.f32.xlu0 %v837
    %v839 = vpop.xlane.xlu0 %838
    %v840 = vsel %vm245, %v839, 0.0
    %v841 = vrot.slane %v840, 4
    %v842 = vadd.f32 %v840, %v841
    %v843 = vrot.slane %v842, 2
    %v844 = vadd.f32 %v842, %v843
    %v845 = vrot.slane %v844, 1
    %v846 = vadd.f32 %v844, %v845
    %v847 = vmul.f32 %v846, %v833
    %s848 = sld [smem:[#allocation6 + $0x2c]]
    %v849 = vadd.f32 %v847, 1e-05
    %v850 = vrsqrt.pop %v849
    %v851 = vmul.f32 %v850, %v849
    %v852 = vmul.f32 %v851, %v850
    %v853 = vmul.f32 0.5, %v852
    %v854 = vsub.f32 1.5, %v853
    %v855 = vmul.f32 %v850, %v854
    %vm856 = vweird.f32 %v849
    %vm857 = vweird.f32 %v850
    %vm858 = vmor %vm856, %vm857
    %v859 = vsel %vm858, %v850, %v855
    %v860 = vstv %s848
    %v861 = vmul.f32 %v860, %v859
    %v862 = vmul.f32 %v835, %v861
    %s863 = sld [smem:[#allocation6 + $0x2e]]
    %v864 = vstv %s863
    %v865 = vadd.f32 %v862, %v864
    %vm866 = vcmp.ge.f32.partialorder %v865, 0.0
    %v867 = vmul.f32 %v865, 0.1
    %v868 = vsel %vm866, %v865, %v867
    %v869 = vsel %vm816, %v814, 0.0
    %870 = vadd.xlane.f32.xlu0 %v869
    %v871 = vpop.xlane.xlu0 %870
    %v872 = vsel %vm245, %v871, 0.0
    %v873 = vrot.slane %v872, 4
    %v874 = vadd.f32 %v872, %v873
    %v875 = vrot.slane %v874, 2
    %v876 = vadd.f32 %v874, %v875
    %v877 = vrot.slane %v876, 1
    %v878 = vadd.f32 %v876, %v877
    %v879 = vmul.f32 %v878, %v833
    %v880 = vsub.f32 %v814, %v879
    %v881 = vmul.f32 %v880, %v880
    %v882 = vsel %vm816, %v881, 0.0
    %883 = vadd.xlane.f32.xlu0 %v882
    %v884 = vpop.xlane.xlu0 %883
    %v885 = vsel %vm245, %v884, 0.0
    %v886 = vrot.slane %v885, 4
    %v887 = vadd.f32 %v885, %v886
    %v888 = vrot.slane %v887, 2
    %v889 = vadd.f32 %v887, %v888
    %v890 = vrot.slane %v889, 1
    %v891 = vadd.f32 %v889, %v890
    %v892 = vmul.f32 %v891, %v833
    %s893 = sld [smem:[#allocation6 + $0x2d]]
    %v894 = vadd.f32 %v892, 1e-05
    %v895 = vrsqrt.pop %v894
    %v896 = vmul.f32 %v895, %v894
    %v897 = vmul.f32 %v896, %v895
    %v898 = vmul.f32 0.5, %v897
    %v899 = vsub.f32 1.5, %v898
    %v900 = vmul.f32 %v895, %v899
    %vm901 = vweird.f32 %v894
    %vm902 = vweird.f32 %v895
    %vm903 = vmor %vm901, %vm902
    %v904 = vsel %vm903, %v895, %v900
    %v905 = vstv %s893
    %v906 = vmul.f32 %v905, %v904
    %v907 = vmul.f32 %v880, %v906
    %s908 = sld [smem:[#allocation6 + $0x2f]]
    %v909 = vstv %s908
    %v910 = vadd.f32 %v907, %v909
    %vm911 = vcmp.ge.f32.partialorder %v910, 0.0
    %v912 = vmul.f32 %v910, 0.1
    %v913 = vsel %vm911, %v910, %v912
    %915 = vrot.lane.b32.xlu0 %v868, 1
    %v916 = vpop.permute.xlu0 %915
    %v918 = vsel %vm105, 0.0, %v916
    %919 = vrot.lane.b32.xlu0 %v868, 127
    %v920 = vpop.permute.xlu0 %919
    %vm922 = vcmask 56320
    %v923 = vsel %vm922, %v920, 0.0
    %925 = vrot.lane.b32.xlu0 %v913, 1
    %v926 = vpop.permute.xlu0 %925
    %v928 = vsel %vm105, 0.0, %v926
    %929 = vrot.lane.b32.xlu0 %v913, 127
    %v930 = vpop.permute.xlu0 %929
    %v932 = vsel %vm922, %v930, 0.0
    %s933 = sld [smem:[#allocation6 + $0x40]]
    %v934 = vstv %s933
    %v935 = vmul.f32 %v934, %v918
    %s936 = sld [smem:[#allocation6 + $0x44]]
    %v937 = vstv %s936
    %v938 = vmul.f32 %v937, %v868
    %v939 = vadd.f32 %v935, %v938
    %s940 = sld [smem:[#allocation6 + $0x48]]
    %v941 = vstv %s940
    %v942 = vmul.f32 %v941, %v923
    %v943 = vadd.f32 %v939, %v942
    %s944 = sld [smem:[#allocation6 + $0x42]]
    %v945 = vstv %s944
    %v946 = vmul.f32 %v945, %v928
    %v947 = vadd.f32 %v943, %v946
    %s948 = sld [smem:[#allocation6 + $0x46]]
    %v949 = vstv %s948
    %v950 = vmul.f32 %v949, %v913
    %v951 = vadd.f32 %v947, %v950
    %s952 = sld [smem:[#allocation6 + $0x4a]]
    %v953 = vstv %s952
    %v954 = vmul.f32 %v953, %v932
    %v955 = vadd.f32 %v951, %v954
    %s956 = sld [smem:[#allocation6 + $0x41]]
    %v957 = vstv %s956
    %v958 = vmul.f32 %v957, %v918
    %s959 = sld [smem:[#allocation6 + $0x45]]
    %v960 = vstv %s959
    %v961 = vmul.f32 %v960, %v868
    %v962 = vadd.f32 %v958, %v961
    %s963 = sld [smem:[#allocation6 + $0x49]]
    %v964 = vstv %s963
    %v965 = vmul.f32 %v964, %v923
    %v966 = vadd.f32 %v962, %v965
    %s967 = sld [smem:[#allocation6 + $0x43]]
    %v968 = vstv %s967
    %v969 = vmul.f32 %v968, %v928
    %v970 = vadd.f32 %v966, %v969
    %s971 = sld [smem:[#allocation6 + $0x47]]
    %v972 = vstv %s971
    %v973 = vmul.f32 %v972, %v913
    %v974 = vadd.f32 %v970, %v973
    %s975 = sld [smem:[#allocation6 + $0x4b]]
    %v976 = vstv %s975
    %v977 = vmul.f32 %v976, %v932
    %v978 = vadd.f32 %v974, %v977
    %v979 = vsel %vm816, %v955, 0.0
    %980 = vadd.xlane.f32.xlu0 %v979
    %v981 = vpop.xlane.xlu0 %980
    %v982 = vsel %vm245, %v981, 0.0
    %v983 = vrot.slane %v982, 4
    %v984 = vadd.f32 %v982, %v983
    %v985 = vrot.slane %v984, 2
    %v986 = vadd.f32 %v984, %v985
    %v987 = vrot.slane %v986, 1
    %v988 = vadd.f32 %v986, %v987
    %v989 = vmul.f32 %v988, %v833
    %v990 = vsub.f32 %v955, %v989
    %v991 = vmul.f32 %v990, %v990
    %v992 = vsel %vm816, %v991, 0.0
    %993 = vadd.xlane.f32.xlu0 %v992
    %v994 = vpop.xlane.xlu0 %993
    %v995 = vsel %vm245, %v994, 0.0
    %v996 = vrot.slane %v995, 4
    %v997 = vadd.f32 %v995, %v996
    %v998 = vrot.slane %v997, 2
    %v999 = vadd.f32 %v997, %v998
    %v1000 = vrot.slane %v999, 1
    %v1001 = vadd.f32 %v999, %v1000
    %v1002 = vmul.f32 %v1001, %v833
    %s1003 = sld [smem:[#allocation6 + $0x4c]]
    %v1004 = vadd.f32 %v1002, 1e-05
    %v1005 = vrsqrt.pop %v1004
    %v1006 = vmul.f32 %v1005, %v1004
    %v1007 = vmul.f32 %v1006, %v1005
    %v1008 = vmul.f32 0.5, %v1007
    %v1009 = vsub.f32 1.5, %v1008
    %v1010 = vmul.f32 %v1005, %v1009
    %vm1011 = vweird.f32 %v1004
    %vm1012 = vweird.f32 %v1005
    %vm1013 = vmor %vm1011, %vm1012
    %v1014 = vsel %vm1013, %v1005, %v1010
    %v1015 = vstv %s1003
    %v1016 = vmul.f32 %v1015, %v1014
    %v1017 = vmul.f32 %v990, %v1016
    %s1018 = sld [smem:[#allocation6 + $0x4e]]
    %v1019 = vstv %s1018
    %v1020 = vadd.f32 %v1017, %v1019
    %vm1021 = vcmp.ge.f32.partialorder %v1020, 0.0
    %v1022 = vmul.f32 %v1020, 0.1
    %v1023 = vsel %vm1021, %v1020, %v1022
    %v1024 = vsel %vm816, %v978, 0.0
    %1025 = vadd.xlane.f32.xlu0 %v1024
    %v1026 = vpop.xlane.xlu0 %1025
    %v1027 = vsel %vm245, %v1026, 0.0
    %v1028 = vrot.slane %v1027, 4
    %v1029 = vadd.f32 %v1027, %v1028
    %v1030 = vrot.slane %v1029, 2
    %v1031 = vadd.f32 %v1029, %v1030
    %v1032 = vrot.slane %v1031, 1
    %v1033 = vadd.f32 %v1031, %v1032
    %v1034 = vmul.f32 %v1033, %v833
    %v1035 = vsub.f32 %v978, %v1034
    %v1036 = vmul.f32 %v1035, %v1035
    %v1037 = vsel %vm816, %v1036, 0.0
    %1038 = vadd.xlane.f32.xlu0 %v1037
    %v1039 = vpop.xlane.xlu0 %1038
    %v1040 = vsel %vm245, %v1039, 0.0
    %v1041 = vrot.slane %v1040, 4
    %v1042 = vadd.f32 %v1040, %v1041
    %v1043 = vrot.slane %v1042, 2
    %v1044 = vadd.f32 %v1042, %v1043
    %v1045 = vrot.slane %v1044, 1
    %v1046 = vadd.f32 %v1044, %v1045
    %v1047 = vmul.f32 %v1046, %v833
    %s1048 = sld [smem:[#allocation6 + $0x4d]]
    %v1049 = vadd.f32 %v1047, 1e-05
    %v1050 = vrsqrt.pop %v1049
    %v1051 = vmul.f32 %v1050, %v1049
    %v1052 = vmul.f32 %v1051, %v1050
    %v1053 = vmul.f32 0.5, %v1052
    %v1054 = vsub.f32 1.5, %v1053
    %v1055 = vmul.f32 %v1050, %v1054
    %vm1056 = vweird.f32 %v1049
    %vm1057 = vweird.f32 %v1050
    %vm1058 = vmor %vm1056, %vm1057
    %v1059 = vsel %vm1058, %v1050, %v1055
    %v1060 = vstv %s1048
    %v1061 = vmul.f32 %v1060, %v1059
    %v1062 = vmul.f32 %v1035, %v1061
    %s1063 = sld [smem:[#allocation6 + $0x4f]]
    %v1064 = vstv %s1063
    %v1065 = vadd.f32 %v1062, %v1064
    %vm1066 = vcmp.ge.f32.partialorder %v1065, 0.0
    %v1067 = vmul.f32 %v1065, 0.1
    %v1068 = vsel %vm1066, %v1065, %v1067
    %1070 = vrot.lane.b32.xlu0 %v1023, 1
    %v1071 = vpop.permute.xlu0 %1070
    %v1073 = vsel %vm105, 0.0, %v1071
    %1075 = vrot.lane.b32.xlu0 %v1068, 1
    %v1076 = vpop.permute.xlu0 %1075
    %v1078 = vsel %vm105, 0.0, %v1076
    %1079 = vrot.lane.b32.xlu0 %v1023, 127
    %v1080 = vpop.permute.xlu0 %1079
    %v1082 = vsel %vm922, %v1080, 0.0
    %1083 = vrot.lane.b32.xlu0 %v1068, 127
    %v1084 = vpop.permute.xlu0 %1083
    %v1086 = vsel %vm922, %v1084, 0.0
    %s1087 = sld [smem:[#allocation6 + $0x54]]
    %v1088 = vstv %s1087
    %v1089 = vmul.f32 %v1088, %v1023
    %s1090 = sld [smem:[#allocation6 + $0x5c]]
    %v1091 = vstv %s1090
    %v1092 = vmul.f32 %v1091, %v1073
    %v1093 = vadd.f32 %v1089, %v1092
    %s1094 = sld [smem:[#allocation6 + $0x50]]
    %v1095 = vstv %s1094
    %v1096 = vmul.f32 %v1095, %v1082
    %s1097 = sld [smem:[#allocation6 + $0x58]]
    %v1098 = vstv %s1097
    %v1099 = vmul.f32 %v1098, %v1023
    %v1100 = vadd.f32 %v1096, %v1099
    %s1101 = sld [smem:[#allocation6 + $0x56]]
    %v1102 = vstv %s1101
    %v1103 = vmul.f32 %v1102, %v1068
    %s1104 = sld [smem:[#allocation6 + $0x5e]]
    %v1105 = vstv %s1104
    %v1106 = vmul.f32 %v1105, %v1078
    %v1107 = vadd.f32 %v1103, %v1106
    %s1108 = sld [smem:[#allocation6 + $0x52]]
    %v1109 = vstv %s1108
    %v1110 = vmul.f32 %v1109, %v1086
    %s1111 = sld [smem:[#allocation6 + $0x5a]]
    %v1112 = vstv %s1111
    %v1113 = vmul.f32 %v1112, %v1068
    %v1114 = vadd.f32 %v1110, %v1113
    %v1115 = vadd.f32 %v1093, %v1107
    %v1116 = vadd.f32 %v1100, %v1114
    %vm1117 = vcmask 64512
    %v1119 = vsel %vm1117, %v1116, 0
    %1121 = vmatpush.msra.mxu0 0.0
    %1122 = vmatpush.msra.mxu0 0.0
    %1123 = vmatpush.msra.mxu0 0.0
    %1124 = vmatpush.msra.mxu0 0.0
    %1125 = vmatpush.msra.mxu0 0.0
    %1126 = vmatpush.msra.mxu0 0.0
    %1127 = vmatpush.msra.mxu0 0.0
    %1128 = vmatpush.msra.mxu0 0.0
    %1129 = vmatpush.msra.mxu0 0.0
    %1130 = vmatpush.msra.mxu0 0.0
    %1131 = vmatpush.msra.mxu0 0.0
    %1132 = vmatpush.msra.mxu0 0.0
    %1133 = vmatpush.msra.mxu0 0.0
    %1134 = vmatpush.msra.mxu0 0.0
    %1135 = vmatpush.msra.mxu0 0.0
    %1136 = vmatpush.msra.mxu0 %v74
    %1137 = vmatmul.f32.gmra.mxu0 %v1119
    %v1138 = vpop.f32.mrf.mxu0
    %v1139 = vadd.f32 0.0, %v1138
    %1140 = vdwg.mxu0
    %v1142 = vsel %vm1117, %v1115, 0
    %1144 = vmatpush.msra.mxu0 0.0
    %1145 = vmatpush.msra.mxu0 0.0
    %1146 = vmatpush.msra.mxu0 0.0
    %1147 = vmatpush.msra.mxu0 0.0
    %1148 = vmatpush.msra.mxu0 0.0
    %1149 = vmatpush.msra.mxu0 0.0
    %1150 = vmatpush.msra.mxu0 0.0
    %1151 = vmatpush.msra.mxu0 0.0
    %1152 = vmatpush.msra.mxu0 0.0
    %1153 = vmatpush.msra.mxu0 0.0
    %1154 = vmatpush.msra.mxu0 0.0
    %1155 = vmatpush.msra.mxu0 0.0
    %1156 = vmatpush.msra.mxu0 0.0
    %1157 = vmatpush.msra.mxu0 0.0
    %1158 = vmatpush.msra.mxu0 0.0
    %1159 = vmatpush.msra.mxu0 %v71
    %1160 = vmatmul.f32.gmra.mxu0 %v1142
    %v1161 = vpop.f32.mrf.mxu0
    %v1162 = vadd.f32 %v1139, %v1161
    %1163 = vdwg.mxu0
    %s1164 = sld [smem:[#allocation6 + $0x60]]
    %v1165 = vstv %s1164
    %v1166 = vadd.f32 %v1162, %v1165
    %vm1167 = vcmp.ge.f32.partialorder %v1166, 0.0
    %v1168 = vmul.f32 %v1166, 0.1
    %v1169 = vsel %vm1167, %v1166, %v1168
    %s1170 = sld [smem:[#allocation6 + $0x55]]
    %v1171 = vstv %s1170
    %v1172 = vmul.f32 %v1171, %v1023
    %s1173 = sld [smem:[#allocation6 + $0x5d]]
    %v1174 = vstv %s1173
    %v1175 = vmul.f32 %v1174, %v1073
    %v1176 = vadd.f32 %v1172, %v1175
    %s1177 = sld [smem:[#allocation6 + $0x51]]
    %v1178 = vstv %s1177
    %v1179 = vmul.f32 %v1178, %v1082
    %s1180 = sld [smem:[#allocation6 + $0x59]]
    %v1181 = vstv %s1180
    %v1182 = vmul.f32 %v1181, %v1023
    %v1183 = vadd.f32 %v1179, %v1182
    %s1184 = sld [smem:[#allocation6 + $0x57]]
    %v1185 = vstv %s1184
    %v1186 = vmul.f32 %v1185, %v1068
    %s1187 = sld [smem:[#allocation6 + $0x5f]]
    %v1188 = vstv %s1187
    %v1189 = vmul.f32 %v1188, %v1078
    %v1190 = vadd.f32 %v1186, %v1189
    %s1191 = sld [smem:[#allocation6 + $0x53]]
    %v1192 = vstv %s1191
    %v1193 = vmul.f32 %v1192, %v1086
    %s1194 = sld [smem:[#allocation6 + $0x5b]]
    %v1195 = vstv %s1194
    %v1196 = vmul.f32 %v1195, %v1068
    %v1197 = vadd.f32 %v1193, %v1196
    %v1198 = vadd.f32 %v1176, %v1190
    %v1199 = vadd.f32 %v1183, %v1197
    %v1201 = vsel %vm1117, %v1199, 0
    %1203 = vmatpush.msra.mxu0 0.0
    %1204 = vmatpush.msra.mxu0 0.0
    %1205 = vmatpush.msra.mxu0 0.0
    %1206 = vmatpush.msra.mxu0 0.0
    %1207 = vmatpush.msra.mxu0 0.0
    %1208 = vmatpush.msra.mxu0 0.0
    %1209 = vmatpush.msra.mxu0 0.0
    %1210 = vmatpush.msra.mxu0 0.0
    %1211 = vmatpush.msra.mxu0 0.0
    %1212 = vmatpush.msra.mxu0 0.0
    %1213 = vmatpush.msra.mxu0 0.0
    %1214 = vmatpush.msra.mxu0 0.0
    %1215 = vmatpush.msra.mxu0 0.0
    %1216 = vmatpush.msra.mxu0 0.0
    %1217 = vmatpush.msra.mxu0 0.0
    %1218 = vmatpush.msra.mxu0 %v74
    %1219 = vmatmul.f32.gmra.mxu0 %v1201
    %v1220 = vpop.f32.mrf.mxu0
    %v1221 = vadd.f32 0.0, %v1220
    %1222 = vdwg.mxu0
    %v1224 = vsel %vm1117, %v1198, 0
    %1226 = vmatpush.msra.mxu0 0.0
    %1227 = vmatpush.msra.mxu0 0.0
    %1228 = vmatpush.msra.mxu0 0.0
    %1229 = vmatpush.msra.mxu0 0.0
    %1230 = vmatpush.msra.mxu0 0.0
    %1231 = vmatpush.msra.mxu0 0.0
    %1232 = vmatpush.msra.mxu0 0.0
    %1233 = vmatpush.msra.mxu0 0.0
    %1234 = vmatpush.msra.mxu0 0.0
    %1235 = vmatpush.msra.mxu0 0.0
    %1236 = vmatpush.msra.mxu0 0.0
    %1237 = vmatpush.msra.mxu0 0.0
    %1238 = vmatpush.msra.mxu0 0.0
    %1239 = vmatpush.msra.mxu0 0.0
    %1240 = vmatpush.msra.mxu0 0.0
    %1241 = vmatpush.msra.mxu0 %v71
    %1242 = vmatmul.f32.gmra.mxu0 %v1224
    %v1243 = vpop.f32.mrf.mxu0
    %v1244 = vadd.f32 %v1221, %v1243
    %1245 = vdwg.mxu0
    %s1246 = sld [smem:[#allocation6 + $0x61]]
    %v1247 = vstv %s1246
    %v1248 = vadd.f32 %v1244, %v1247
    %vm1249 = vcmp.ge.f32.partialorder %v1248, 0.0
    %v1250 = vmul.f32 %v1248, 0.1
    %v1251 = vsel %vm1249, %v1248, %v1250
    %1253 = vrot.lane.b32.xlu0 %v1169, 1
    %v1254 = vpop.permute.xlu0 %1253
    %v1256 = vsel %vm105, 0.0, %v1254
    %1258 = vrot.lane.b32.xlu0 %v1251, 1
    %v1259 = vpop.permute.xlu0 %1258
    %v1261 = vsel %vm105, 0.0, %v1259
    %1262 = vrot.lane.b32.xlu0 %v1169, 127
    %v1263 = vpop.permute.xlu0 %1262
    %v1265 = vsel %vm558, %v1263, 0.0
    %1266 = vrot.lane.b32.xlu0 %v1251, 127
    %v1267 = vpop.permute.xlu0 %1266
    %v1269 = vsel %vm558, %v1267, 0.0
    %s1270 = sld [smem:[#allocation6 + $0x6a]]
    %v1271 = vstv %s1270
    %v1272 = vmul.f32 %v1271, %v1169
    %s1273 = sld [smem:[#allocation6 + $0x7a]]
    %v1274 = vstv %s1273
    %v1275 = vmul.f32 %v1274, %v1256
    %v1276 = vadd.f32 %v1272, %v1275
    %s1277 = sld [smem:[#allocation6 + $0x62]]
    %v1278 = vstv %s1277
    %v1279 = vmul.f32 %v1278, %v1265
    %s1280 = sld [smem:[#allocation6 + $0x72]]
    %v1281 = vstv %s1280
    %v1282 = vmul.f32 %v1281, %v1169
    %v1283 = vadd.f32 %v1279, %v1282
    %s1284 = sld [smem:[#allocation6 + $0x6c]]
    %v1285 = vstv %s1284
    %v1286 = vmul.f32 %v1285, %v1251
    %s1287 = sld [smem:[#allocation6 + $0x7c]]
    %v1288 = vstv %s1287
    %v1289 = vmul.f32 %v1288, %v1261
    %v1290 = vadd.f32 %v1286, %v1289
    %s1291 = sld [smem:[#allocation6 + $0x64]]
    %v1292 = vstv %s1291
    %v1293 = vmul.f32 %v1292, %v1269
    %s1294 = sld [smem:[#allocation6 + $0x74]]
    %v1295 = vstv %s1294
    %v1296 = vmul.f32 %v1295, %v1251
    %v1297 = vadd.f32 %v1293, %v1296
    %v1298 = vadd.f32 %v1276, %v1290
    %v1299 = vadd.f32 %v1283, %v1297
    %s1300 = sld [smem:[#allocation6 + $0x6e]]
    %v1301 = vstv %s1300
    %v1302 = vmul.f32 %v1301, %v659
    %s1303 = sld [smem:[#allocation6 + $0x7e]]
    %v1304 = vstv %s1303
    %v1305 = vmul.f32 %v1304, %v709
    %v1306 = vadd.f32 %v1302, %v1305
    %s1307 = sld [smem:[#allocation6 + $0x66]]
    %v1308 = vstv %s1307
    %v1309 = vmul.f32 %v1308, %v713
    %s1310 = sld [smem:[#allocation6 + $0x76]]
    %v1311 = vstv %s1310
    %v1312 = vmul.f32 %v1311, %v659
    %v1313 = vadd.f32 %v1309, %v1312
    %v1314 = vadd.f32 %v1298, %v1306
    %v1315 = vadd.f32 %v1299, %v1313
    %s1316 = sld [smem:[#allocation6 + $0x70]]
    %v1317 = vstv %s1316
    %v1318 = vmul.f32 %v1317, %v704
    %s1319 = sld [smem:[#allocation6 + $0x80]]
    %v1320 = vstv %s1319
    %v1321 = vmul.f32 %v1320, %v718
    %v1322 = vadd.f32 %v1318, %v1321
    %s1323 = sld [smem:[#allocation6 + $0x68]]
    %v1324 = vstv %s1323
    %v1325 = vmul.f32 %v1324, %v722
    %s1326 = sld [smem:[#allocation6 + $0x78]]
    %v1327 = vstv %s1326
    %v1328 = vmul.f32 %v1327, %v704
    %v1329 = vadd.f32 %v1325, %v1328
    %v1330 = vadd.f32 %v1314, %v1322
    %v1331 = vadd.f32 %v1315, %v1329
    %v1333 = vsel %vm769, %v1331, 0
    %1335 = vmatpush.msra.mxu0 0.0
    %1336 = vmatpush.msra.mxu0 0.0
    %1337 = vmatpush.msra.mxu0 0.0
    %1338 = vmatpush.msra.mxu0 0.0
    %1339 = vmatpush.msra.mxu0 0.0
    %1340 = vmatpush.msra.mxu0 0.0
    %1341 = vmatpush.msra.mxu0 0.0
    %1342 = vmatpush.msra.mxu0 0.0
    %1343 = vmatpush.msra.mxu0 0.0
    %1344 = vmatpush.msra.mxu0 0.0
    %1345 = vmatpush.msra.mxu0 0.0
    %1346 = vmatpush.msra.mxu0 0.0
    %1347 = vmatpush.msra.mxu0 0.0
    %1348 = vmatpush.msra.mxu0 0.0
    %1349 = vmatpush.msra.mxu0 %v80
    %1350 = vmatpush.msra.mxu0 %v74
    %1351 = vmatmul.f32.gmra.mxu0 %v1333
    %v1352 = vpop.f32.mrf.mxu0
    %v1353 = vadd.f32 0.0, %v1352
    %1354 = vdwg.mxu0
    %v1356 = vsel %vm769, %v1330, 0
    %1358 = vmatpush.msra.mxu0 0.0
    %1359 = vmatpush.msra.mxu0 0.0
    %1360 = vmatpush.msra.mxu0 0.0
    %1361 = vmatpush.msra.mxu0 0.0
    %1362 = vmatpush.msra.mxu0 0.0
    %1363 = vmatpush.msra.mxu0 0.0
    %1364 = vmatpush.msra.mxu0 0.0
    %1365 = vmatpush.msra.mxu0 0.0
    %1366 = vmatpush.msra.mxu0 0.0
    %1367 = vmatpush.msra.mxu0 0.0
    %1368 = vmatpush.msra.mxu0 0.0
    %1369 = vmatpush.msra.mxu0 0.0
    %1370 = vmatpush.msra.mxu0 0.0
    %1371 = vmatpush.msra.mxu0 0.0
    %1372 = vmatpush.msra.mxu0 %v77
    %1373 = vmatpush.msra.mxu0 %v71
    %1374 = vmatmul.f32.gmra.mxu0 %v1356
    %v1375 = vpop.f32.mrf.mxu0
    %v1376 = vadd.f32 %v1353, %v1375
    %1377 = vdwg.mxu0
    %s1378 = sld [smem:[#allocation6 + $0x82]]
    %v1379 = vstv %s1378
    %v1380 = vadd.f32 %v1376, %v1379
    %vm1381 = vcmp.ge.f32.partialorder %v1380, 0.0
    %v1382 = vmul.f32 %v1380, 0.1
    %v1383 = vsel %vm1381, %v1380, %v1382
    %s1384 = sld [smem:[#allocation6 + $0x6b]]
    %v1385 = vstv %s1384
    %v1386 = vmul.f32 %v1385, %v1169
    %s1387 = sld [smem:[#allocation6 + $0x7b]]
    %v1388 = vstv %s1387
    %v1389 = vmul.f32 %v1388, %v1256
    %v1390 = vadd.f32 %v1386, %v1389
    %s1391 = sld [smem:[#allocation6 + $0x63]]
    %v1392 = vstv %s1391
    %v1393 = vmul.f32 %v1392, %v1265
    %s1394 = sld [smem:[#allocation6 + $0x73]]
    %v1395 = vstv %s1394
    %v1396 = vmul.f32 %v1395, %v1169
    %v1397 = vadd.f32 %v1393, %v1396
    %s1398 = sld [smem:[#allocation6 + $0x6d]]
    %v1399 = vstv %s1398
    %v1400 = vmul.f32 %v1399, %v1251
    %s1401 = sld [smem:[#allocation6 + $0x7d]]
    %v1402 = vstv %s1401
    %v1403 = vmul.f32 %v1402, %v1261
    %v1404 = vadd.f32 %v1400, %v1403
    %s1405 = sld [smem:[#allocation6 + $0x65]]
    %v1406 = vstv %s1405
    %v1407 = vmul.f32 %v1406, %v1269
    %s1408 = sld [smem:[#allocation6 + $0x75]]
    %v1409 = vstv %s1408
    %v1410 = vmul.f32 %v1409, %v1251
    %v1411 = vadd.f32 %v1407, %v1410
    %v1412 = vadd.f32 %v1390, %v1404
    %v1413 = vadd.f32 %v1397, %v1411
    %s1414 = sld [smem:[#allocation6 + $0x6f]]
    %v1415 = vstv %s1414
    %v1416 = vmul.f32 %v1415, %v659
    %s1417 = sld [smem:[#allocation6 + $0x7f]]
    %v1418 = vstv %s1417
    %v1419 = vmul.f32 %v1418, %v709
    %v1420 = vadd.f32 %v1416, %v1419
    %s1421 = sld [smem:[#allocation6 + $0x67]]
    %v1422 = vstv %s1421
    %v1423 = vmul.f32 %v1422, %v713
    %s1424 = sld [smem:[#allocation6 + $0x77]]
    %v1425 = vstv %s1424
    %v1426 = vmul.f32 %v1425, %v659
    %v1427 = vadd.f32 %v1423, %v1426
    %v1428 = vadd.f32 %v1412, %v1420
    %v1429 = vadd.f32 %v1413, %v1427
    %s1430 = sld [smem:[#allocation6 + $0x71]]
    %v1431 = vstv %s1430
    %v1432 = vmul.f32 %v1431, %v704
    %s1433 = sld [smem:[#allocation6 + $0x81]]
    %v1434 = vstv %s1433
    %v1435 = vmul.f32 %v1434, %v718
    %v1436 = vadd.f32 %v1432, %v1435
    %s1437 = sld [smem:[#allocation6 + $0x69]]
    %v1438 = vstv %s1437
    %v1439 = vmul.f32 %v1438, %v722
    %s1440 = sld [smem:[#allocation6 + $0x79]]
    %v1441 = vstv %s1440
    %v1442 = vmul.f32 %v1441, %v704
    %v1443 = vadd.f32 %v1439, %v1442
    %v1444 = vadd.f32 %v1428, %v1436
    %v1445 = vadd.f32 %v1429, %v1443
    %v1447 = vsel %vm769, %v1445, 0
    %1449 = vmatpush.msra.mxu0 0.0
    %1450 = vmatpush.msra.mxu0 0.0
    %1451 = vmatpush.msra.mxu0 0.0
    %1452 = vmatpush.msra.mxu0 0.0
    %1453 = vmatpush.msra.mxu0 0.0
    %1454 = vmatpush.msra.mxu0 0.0
    %1455 = vmatpush.msra.mxu0 0.0
    %1456 = vmatpush.msra.mxu0 0.0
    %1457 = vmatpush.msra.mxu0 0.0
    %1458 = vmatpush.msra.mxu0 0.0
    %1459 = vmatpush.msra.mxu0 0.0
    %1460 = vmatpush.msra.mxu0 0.0
    %1461 = vmatpush.msra.mxu0 0.0
    %1462 = vmatpush.msra.mxu0 0.0
    %1463 = vmatpush.msra.mxu0 %v80
    %1464 = vmatpush.msra.mxu0 %v74
    %1465 = vmatmul.f32.gmra.mxu0 %v1447
    %v1466 = vpop.f32.mrf.mxu0
    %v1467 = vadd.f32 0.0, %v1466
    %1468 = vdwg.mxu0
    %v1470 = vsel %vm769, %v1444, 0
    %1472 = vmatpush.msra.mxu0 0.0
    %1473 = vmatpush.msra.mxu0 0.0
    %1474 = vmatpush.msra.mxu0 0.0
    %1475 = vmatpush.msra.mxu0 0.0
    %1476 = vmatpush.msra.mxu0 0.0
    %1477 = vmatpush.msra.mxu0 0.0
    %1478 = vmatpush.msra.mxu0 0.0
    %1479 = vmatpush.msra.mxu0 0.0
    %1480 = vmatpush.msra.mxu0 0.0
    %1481 = vmatpush.msra.mxu0 0.0
    %1482 = vmatpush.msra.mxu0 0.0
    %1483 = vmatpush.msra.mxu0 0.0
    %1484 = vmatpush.msra.mxu0 0.0
    %1485 = vmatpush.msra.mxu0 0.0
    %1486 = vmatpush.msra.mxu0 %v77
    %1487 = vmatpush.msra.mxu0 %v71
    %1488 = vmatmul.f32.gmra.mxu0 %v1470
    %v1489 = vpop.f32.mrf.mxu0
    %v1490 = vadd.f32 %v1467, %v1489
    %1491 = vdwg.mxu0
    %s1492 = sld [smem:[#allocation6 + $0x83]]
    %v1493 = vstv %s1492
    %v1494 = vadd.f32 %v1490, %v1493
    %vm1495 = vcmp.ge.f32.partialorder %v1494, 0.0
    %v1496 = vmul.f32 %v1494, 0.1
    %v1497 = vsel %vm1495, %v1494, %v1496
    %1499 = vrot.lane.b32.xlu0 %v1383, 1
    %v1500 = vpop.permute.xlu0 %1499
    %v1502 = vsel %vm105, 0.0, %v1500
    %1504 = vrot.lane.b32.xlu0 %v1497, 1
    %v1505 = vpop.permute.xlu0 %1504
    %v1507 = vsel %vm105, 0.0, %v1505
    %1508 = vrot.lane.b32.xlu0 %v1383, 127
    %v1509 = vpop.permute.xlu0 %1508
    %v1511 = vsel %vm348, %v1509, 0.0
    %1512 = vrot.lane.b32.xlu0 %v1497, 127
    %v1513 = vpop.permute.xlu0 %1512
    %v1515 = vsel %vm348, %v1513, 0.0
    %s1516 = sld [smem:[#allocation6 + $0x8c]]
    %v1517 = vstv %s1516
    %v1518 = vmul.f32 %v1517, %v1383
    %s1519 = sld [smem:[#allocation6 + $0x9c]]
    %v1520 = vstv %s1519
    %v1521 = vmul.f32 %v1520, %v1502
    %v1522 = vadd.f32 %v1518, %v1521
    %s1523 = sld [smem:[#allocation6 + $0x84]]
    %v1524 = vstv %s1523
    %v1525 = vmul.f32 %v1524, %v1511
    %s1526 = sld [smem:[#allocation6 + $0x94]]
    %v1527 = vstv %s1526
    %v1528 = vmul.f32 %v1527, %v1383
    %v1529 = vadd.f32 %v1525, %v1528
    %s1530 = sld [smem:[#allocation6 + $0x8e]]
    %v1531 = vstv %s1530
    %v1532 = vmul.f32 %v1531, %v1497
    %s1533 = sld [smem:[#allocation6 + $0x9e]]
    %v1534 = vstv %s1533
    %v1535 = vmul.f32 %v1534, %v1507
    %v1536 = vadd.f32 %v1532, %v1535
    %s1537 = sld [smem:[#allocation6 + $0x86]]
    %v1538 = vstv %s1537
    %v1539 = vmul.f32 %v1538, %v1515
    %s1540 = sld [smem:[#allocation6 + $0x96]]
    %v1541 = vstv %s1540
    %v1542 = vmul.f32 %v1541, %v1497
    %v1543 = vadd.f32 %v1539, %v1542
    %v1544 = vadd.f32 %v1522, %v1536
    %v1545 = vadd.f32 %v1529, %v1543
    %s1546 = sld [smem:[#allocation6 + $0x90]]
    %v1547 = vstv %s1546
    %v1548 = vmul.f32 %v1547, %v294
    %s1549 = sld [smem:[#allocation6 + $0xa0]]
    %v1550 = vstv %s1549
    %v1551 = vmul.f32 %v1550, %v344
    %v1552 = vadd.f32 %v1548, %v1551
    %s1553 = sld [smem:[#allocation6 + $0x88]]
    %v1554 = vstv %s1553
    %v1555 = vmul.f32 %v1554, %v349
    %s1556 = sld [smem:[#allocation6 + $0x98]]
    %v1557 = vstv %s1556
    %v1558 = vmul.f32 %v1557, %v294
    %v1559 = vadd.f32 %v1555, %v1558
    %v1560 = vadd.f32 %v1544, %v1552
    %v1561 = vadd.f32 %v1545, %v1559
    %s1562 = sld [smem:[#allocation6 + $0x92]]
    %v1563 = vstv %s1562
    %v1564 = vmul.f32 %v1563, %v339
    %s1565 = sld [smem:[#allocation6 + $0xa2]]
    %v1566 = vstv %s1565
    %v1567 = vmul.f32 %v1566, %v354
    %v1568 = vadd.f32 %v1564, %v1567
    %s1569 = sld [smem:[#allocation6 + $0x8a]]
    %v1570 = vstv %s1569
    %v1571 = vmul.f32 %v1570, %v358
    %s1572 = sld [smem:[#allocation6 + $0x9a]]
    %v1573 = vstv %s1572
    %v1574 = vmul.f32 %v1573, %v339
    %v1575 = vadd.f32 %v1571, %v1574
    %v1576 = vadd.f32 %v1560, %v1568
    %v1577 = vadd.f32 %v1561, %v1575
    %v1579 = vsel %vm405, %v1577, 0
    %1581 = vmatpush.msra.mxu0 0.0
    %1582 = vmatpush.msra.mxu0 0.0
    %1583 = vmatpush.msra.mxu0 0.0
    %1584 = vmatpush.msra.mxu0 0.0
    %1585 = vmatpush.msra.mxu0 0.0
    %1586 = vmatpush.msra.mxu0 0.0
    %1587 = vmatpush.msra.mxu0 0.0
    %1588 = vmatpush.msra.mxu0 0.0
    %1589 = vmatpush.msra.mxu0 0.0
    %1590 = vmatpush.msra.mxu0 0.0
    %1591 = vmatpush.msra.mxu0 0.0
    %1592 = vmatpush.msra.mxu0 0.0
    %1593 = vmatpush.msra.mxu0 %v92
    %1594 = vmatpush.msra.mxu0 %v91
    %1595 = vmatpush.msra.mxu0 %v80
    %1596 = vmatpush.msra.mxu0 %v74
    %1597 = vmatmul.f32.gmra.mxu0 %v1579
    %v1598 = vpop.f32.mrf.mxu0
    %v1599 = vadd.f32 0.0, %v1598
    %1600 = vdwg.mxu0
    %v1602 = vsel %vm405, %v1576, 0
    %1604 = vmatpush.msra.mxu0 0.0
    %1605 = vmatpush.msra.mxu0 0.0
    %1606 = vmatpush.msra.mxu0 0.0
    %1607 = vmatpush.msra.mxu0 0.0
    %1608 = vmatpush.msra.mxu0 0.0
    %1609 = vmatpush.msra.mxu0 0.0
    %1610 = vmatpush.msra.mxu0 0.0
    %1611 = vmatpush.msra.mxu0 0.0
    %1612 = vmatpush.msra.mxu0 0.0
    %1613 = vmatpush.msra.mxu0 0.0
    %1614 = vmatpush.msra.mxu0 0.0
    %1615 = vmatpush.msra.mxu0 0.0
    %1616 = vmatpush.msra.mxu0 %v86
    %1617 = vmatpush.msra.mxu0 %v85
    %1618 = vmatpush.msra.mxu0 %v77
    %1619 = vmatpush.msra.mxu0 %v71
    %1620 = vmatmul.f32.gmra.mxu0 %v1602
    %v1621 = vpop.f32.mrf.mxu0
    %v1622 = vadd.f32 %v1599, %v1621
    %1623 = vdwg.mxu0
    %s1624 = sld [smem:[#allocation6 + $0xa4]]
    %v1625 = vstv %s1624
    %v1626 = vadd.f32 %v1622, %v1625
    %vm1627 = vcmp.ge.f32.partialorder %v1626, 0.0
    %v1628 = vmul.f32 %v1626, 0.1
    %v1629 = vsel %vm1627, %v1626, %v1628
    %s1630 = sld [smem:[#allocation6 + $0x8d]]
    %v1631 = vstv %s1630
    %v1632 = vmul.f32 %v1631, %v1383
    %s1633 = sld [smem:[#allocation6 + $0x9d]]
    %v1634 = vstv %s1633
    %v1635 = vmul.f32 %v1634, %v1502
    %v1636 = vadd.f32 %v1632, %v1635
    %s1637 = sld [smem:[#allocation6 + $0x85]]
    %v1638 = vstv %s1637
    %v1639 = vmul.f32 %v1638, %v1511
    %s1640 = sld [smem:[#allocation6 + $0x95]]
    %v1641 = vstv %s1640
    %v1642 = vmul.f32 %v1641, %v1383
    %v1643 = vadd.f32 %v1639, %v1642
    %s1644 = sld [smem:[#allocation6 + $0x8f]]
    %v1645 = vstv %s1644
    %v1646 = vmul.f32 %v1645, %v1497
    %s1647 = sld [smem:[#allocation6 + $0x9f]]
    %v1648 = vstv %s1647
    %v1649 = vmul.f32 %v1648, %v1507
    %v1650 = vadd.f32 %v1646, %v1649
    %s1651 = sld [smem:[#allocation6 + $0x87]]
    %v1652 = vstv %s1651
    %v1653 = vmul.f32 %v1652, %v1515
    %s1654 = sld [smem:[#allocation6 + $0x97]]
    %v1655 = vstv %s1654
    %v1656 = vmul.f32 %v1655, %v1497
    %v1657 = vadd.f32 %v1653, %v1656
    %v1658 = vadd.f32 %v1636, %v1650
    %v1659 = vadd.f32 %v1643, %v1657
    %s1660 = sld [smem:[#allocation6 + $0x91]]
    %v1661 = vstv %s1660
    %v1662 = vmul.f32 %v1661, %v294
    %s1663 = sld [smem:[#allocation6 + $0xa1]]
    %v1664 = vstv %s1663
    %v1665 = vmul.f32 %v1664, %v344
    %v1666 = vadd.f32 %v1662, %v1665
    %s1667 = sld [smem:[#allocation6 + $0x89]]
    %v1668 = vstv %s1667
    %v1669 = vmul.f32 %v1668, %v349
    %s1670 = sld [smem:[#allocation6 + $0x99]]
    %v1671 = vstv %s1670
    %v1672 = vmul.f32 %v1671, %v294
    %v1673 = vadd.f32 %v1669, %v1672
    %v1674 = vadd.f32 %v1658, %v1666
    %v1675 = vadd.f32 %v1659, %v1673
    %s1676 = sld [smem:[#allocation6 + $0x93]]
    %v1677 = vstv %s1676
    %v1678 = vmul.f32 %v1677, %v339
    %s1679 = sld [smem:[#allocation6 + $0xa3]]
    %v1680 = vstv %s1679
    %v1681 = vmul.f32 %v1680, %v354
    %v1682 = vadd.f32 %v1678, %v1681
    %s1683 = sld [smem:[#allocation6 + $0x8b]]
    %v1684 = vstv %s1683
    %v1685 = vmul.f32 %v1684, %v358
    %s1686 = sld [smem:[#allocation6 + $0x9b]]
    %v1687 = vstv %s1686
    %v1688 = vmul.f32 %v1687, %v339
    %v1689 = vadd.f32 %v1685, %v1688
    %v1690 = vadd.f32 %v1674, %v1682
    %v1691 = vadd.f32 %v1675, %v1689
    %v1693 = vsel %vm405, %v1691, 0
    %1695 = vmatpush.msra.mxu0 0.0
    %1696 = vmatpush.msra.mxu0 0.0
    %1697 = vmatpush.msra.mxu0 0.0
    %1698 = vmatpush.msra.mxu0 0.0
    %1699 = vmatpush.msra.mxu0 0.0
    %1700 = vmatpush.msra.mxu0 0.0
    %1701 = vmatpush.msra.mxu0 0.0
    %1702 = vmatpush.msra.mxu0 0.0
    %1703 = vmatpush.msra.mxu0 0.0
    %1704 = vmatpush.msra.mxu0 0.0
    %1705 = vmatpush.msra.mxu0 0.0
    %1706 = vmatpush.msra.mxu0 0.0
    %1707 = vmatpush.msra.mxu0 %v92
    %1708 = vmatpush.msra.mxu0 %v91
    %1709 = vmatpush.msra.mxu0 %v80
    %1710 = vmatpush.msra.mxu0 %v74
    %1711 = vmatmul.f32.gmra.mxu0 %v1693
    %v1712 = vpop.f32.mrf.mxu0
    %v1713 = vadd.f32 0.0, %v1712
    %1714 = vdwg.mxu0
    %v1716 = vsel %vm405, %v1690, 0
    %1718 = vmatpush.msra.mxu0 0.0
    %1719 = vmatpush.msra.mxu0 0.0
    %1720 = vmatpush.msra.mxu0 0.0
    %1721 = vmatpush.msra.mxu0 0.0
    %1722 = vmatpush.msra.mxu0 0.0
    %1723 = vmatpush.msra.mxu0 0.0
    %1724 = vmatpush.msra.mxu0 0.0
    %1725 = vmatpush.msra.mxu0 0.0
    %1726 = vmatpush.msra.mxu0 0.0
    %1727 = vmatpush.msra.mxu0 0.0
    %1728 = vmatpush.msra.mxu0 0.0
    %1729 = vmatpush.msra.mxu0 0.0
    %1730 = vmatpush.msra.mxu0 %v86
    %1731 = vmatpush.msra.mxu0 %v85
    %1732 = vmatpush.msra.mxu0 %v77
    %1733 = vmatpush.msra.mxu0 %v71
    %1734 = vmatmul.f32.gmra.mxu0 %v1716
    %v1735 = vpop.f32.mrf.mxu0
    %v1736 = vadd.f32 %v1713, %v1735
    %1737 = vdwg.mxu0
    %s1738 = sld [smem:[#allocation6 + $0xa5]]
    %v1739 = vstv %s1738
    %v1740 = vadd.f32 %v1736, %v1739
    %vm1741 = vcmp.ge.f32.partialorder %v1740, 0.0
    %v1742 = vmul.f32 %v1740, 0.1
    %v1743 = vsel %vm1741, %v1740, %v1742
    %1745 = vrot.lane.b32.xlu0 %v1629, 1
    %v1746 = vpop.permute.xlu0 %1745
    %v1748 = vsel %vm105, 0.0, %v1746
    %1749 = vrot.lane.b32.xlu0 %v1629, 127
    %v1750 = vpop.permute.xlu0 %1749
    %v1752 = vsel %vm110, %v1750, 0.0
    %1754 = vrot.lane.b32.xlu0 %v1743, 1
    %v1755 = vpop.permute.xlu0 %1754
    %v1757 = vsel %vm105, 0.0, %v1755
    %1758 = vrot.lane.b32.xlu0 %v1743, 127
    %v1759 = vpop.permute.xlu0 %1758
    %v1761 = vsel %vm110, %v1759, 0.0
    %s1762 = sld [smem:[#allocation6 + $0xa6]]
    %v1763 = vstv %s1762
    %v1764 = vmul.f32 %v1763, %v1748
    %s1765 = sld [smem:[#allocation6 + $0xae]]
    %v1766 = vstv %s1765
    %v1767 = vmul.f32 %v1766, %v1629
    %v1768 = vadd.f32 %v1764, %v1767
    %s1769 = sld [smem:[#allocation6 + $0xb6]]
    %v1770 = vstv %s1769
    %v1771 = vmul.f32 %v1770, %v1752
    %v1772 = vadd.f32 %v1768, %v1771
    %s1773 = sld [smem:[#allocation6 + $0xa8]]
    %v1774 = vstv %s1773
    %v1775 = vmul.f32 %v1774, %v1757
    %v1776 = vadd.f32 %v1772, %v1775
    %s1777 = sld [smem:[#allocation6 + $0xb0]]
    %v1778 = vstv %s1777
    %v1779 = vmul.f32 %v1778, %v1743
    %v1780 = vadd.f32 %v1776, %v1779
    %s1781 = sld [smem:[#allocation6 + $0xb8]]
    %v1782 = vstv %s1781
    %v1783 = vmul.f32 %v1782, %v1761
    %v1784 = vadd.f32 %v1780, %v1783
    %s1785 = sld [smem:[#allocation6 + $0xaa]]
    %v1786 = vstv %s1785
    %v1787 = vmul.f32 %v1786, %v106
    %v1788 = vadd.f32 %v1784, %v1787
    %s1789 = sld [smem:[#allocation6 + $0xb2]]
    %v1790 = vstv %s1789
    %v1791 = vmul.f32 %v1790, %v93
    %v1792 = vmul.f32 %v1790, %v94
    %v1795 = vrot.slane %v1792, 7
    %v1796 = vsel %vm100, %v1795, %v1791
    %v1798 = vadd.f32 %v1788, %v1796
    %s1799 = sld [smem:[#allocation6 + $0xba]]
    %v1800 = vstv %s1799
    %v1801 = vmul.f32 %v1800, %v111
    %v1802 = vadd.f32 %v1798, %v1801
    %s1803 = sld [smem:[#allocation6 + $0xac]]
    %v1804 = vstv %s1803
    %v1805 = vmul.f32 %v1804, %v119
    %v1806 = vadd.f32 %v1802, %v1805
    %s1807 = sld [smem:[#allocation6 + $0xb4]]
    %v1808 = vstv %s1807
    %v1809 = vmul.f32 %v1808, %v95
    %v1810 = vmul.f32 %v1808, %v96
    %v1813 = vrot.slane %v1810, 7
    %v1814 = vsel %vm100, %v1813, %v1809
    %v1816 = vadd.f32 %v1806, %v1814
    %s1817 = sld [smem:[#allocation6 + $0xbc]]
    %v1818 = vstv %s1817
    %v1819 = vmul.f32 %v1818, %v123
    %v1820 = vadd.f32 %v1816, %v1819
    %s1821 = sld [smem:[#allocation6 + $0xa7]]
    %v1822 = vstv %s1821
    %v1823 = vmul.f32 %v1822, %v1748
    %s1824 = sld [smem:[#allocation6 + $0xaf]]
    %v1825 = vstv %s1824
    %v1826 = vmul.f32 %v1825, %v1629
    %v1827 = vadd.f32 %v1823, %v1826
    %s1828 = sld [smem:[#allocation6 + $0xb7]]
    %v1829 = vstv %s1828
    %v1830 = vmul.f32 %v1829, %v1752
    %v1831 = vadd.f32 %v1827, %v1830
    %s1832 = sld [smem:[#allocation6 + $0xa9]]
    %v1833 = vstv %s1832
    %v1834 = vmul.f32 %v1833, %v1757
    %v1835 = vadd.f32 %v1831, %v1834
    %s1836 = sld [smem:[#allocation6 + $0xb1]]
    %v1837 = vstv %s1836
    %v1838 = vmul.f32 %v1837, %v1743
    %v1839 = vadd.f32 %v1835, %v1838
    %s1840 = sld [smem:[#allocation6 + $0xb9]]
    %v1841 = vstv %s1840
    %v1842 = vmul.f32 %v1841, %v1761
    %v1843 = vadd.f32 %v1839, %v1842
    %s1844 = sld [smem:[#allocation6 + $0xab]]
    %v1845 = vstv %s1844
    %v1846 = vmul.f32 %v1845, %v106
    %v1847 = vadd.f32 %v1843, %v1846
    %s1848 = sld [smem:[#allocation6 + $0xb3]]
    %v1849 = vstv %s1848
    %v1850 = vmul.f32 %v1849, %v93
    %v1851 = vmul.f32 %v1849, %v94
    %v1854 = vrot.slane %v1851, 7
    %v1855 = vsel %vm100, %v1854, %v1850
    %v1857 = vadd.f32 %v1847, %v1855
    %s1858 = sld [smem:[#allocation6 + $0xbb]]
    %v1859 = vstv %s1858
    %v1860 = vmul.f32 %v1859, %v111
    %v1861 = vadd.f32 %v1857, %v1860
    %s1862 = sld [smem:[#allocation6 + $0xad]]
    %v1863 = vstv %s1862
    %v1864 = vmul.f32 %v1863, %v119
    %v1865 = vadd.f32 %v1861, %v1864
    %s1866 = sld [smem:[#allocation6 + $0xb5]]
    %v1867 = vstv %s1866
    %v1868 = vmul.f32 %v1867, %v95
    %v1869 = vmul.f32 %v1867, %v96
    %v1872 = vrot.slane %v1869, 7
    %v1873 = vsel %vm100, %v1872, %v1868
    %v1875 = vadd.f32 %v1865, %v1873
    %s1876 = sld [smem:[#allocation6 + $0xbd]]
    %v1877 = vstv %s1876
    %v1878 = vmul.f32 %v1877, %v123
    %v1879 = vadd.f32 %v1875, %v1878
    %s1880 = sld [smem:[#allocation6 + $0xbe]]
    %v1881 = vstv %s1880
    %v1882 = vadd.f32 %v1820, %v1881
    %v1884 = vrot.slane %v1882, 1
    %vm1886 = vcmask 516096
    %1887 = vst.msk [vmem:[#allocation7] sm:$0x1] %vm1886, %v1882
    %1888 = vst.msk [vmem:[#allocation7 + $0x2] sm:$0x1] %vm1886, %v1884
    %s1889 = sld [smem:[#allocation6 + $0xbf]]
    %v1890 = vstv %s1889
    %v1891 = vadd.f32 %v1879, %v1890
    %v1893 = vrot.slane %v1891, 1
    %1895 = vst.msk [vmem:[#allocation7 + $0x1] sm:$0x1] %vm1886, %v1891
    %1896 = vst.msk [vmem:[#allocation7 + $0x3] sm:$0x1] %vm1886, %v1893
    // Predicated region
    $region18: #{unet1d_forward.1} parent=1 // pred_check
      _
    $region19: #{unet1d_forward.1} parent=1 // pred_check_branch
      %1898 = sbr.rel (0) target = $region21
    $region20: #{unet1d_forward.1} parent=1 // pred_region
      %1900 = vsyncadd [#allocation4], 0
      %s1901 = sshll.u32 [#allocation7], 4
      %s1902 = int_to_ptr.vmem [resolvable:$true] %s1901
      %s1903 = sshll.u32 %s2, 4
      %s1904 = int_to_ptr.hbm [resolvable:$true] %s1903
      %1909 = dma.vmem_to_hbm [thread:$0]  %s1902, 64, %s1904, [#allocation4], 32, 32, 2
    $region21: #{unet1d_forward.1} parent=1 // pred_fallthru
      _
    // Predicated region
    $region22: #{unet1d_forward.1} parent=1 // pred_check
      _
    $region23: #{unet1d_forward.1} parent=1 // pred_check_branch
      %1911 = sbr.rel (0) target = $region25
    $region24: #{unet1d_forward.1} parent=1 // pred_region
      %1913 = dma.done [#allocation4], 64
    $region25: #{unet1d_forward.1} parent=1 // pred_fallthru
      _
    %1914 = vsyncpa [#allocation3], 1
    %1915 = vsyncpa [#allocation4], 1
    %1916 = vsyncpa [#allocation5], 1

</llo_original>
